<compile_context>
chip_gen: v5e
topology: v5e:2x2
jax: 0.10.0
libtpu: 0.0.40
codegen_flags: <defaults>
</compile_context>

<pallas_src>
import numpy as np
import jax
import jax.numpy as jnp
from jax import lax
from jax.experimental import pallas as pl
from jax.experimental.pallas import tpu as pltpu

# ----------------------------- configuration -------------------------------
NETWORK_CHANNELS = 64          # network_channels in the PyTorch script
N_OSC = 32                     # OscillatorBank(self.channels, 32, band_size)
T_IN = 32                      # control-frame length (NoiseModel input_size=32)
BAND_SIZE = 128                # small band for the demo (any pow-2 band works)
N_NOISE_FRAMES = 64            # NoiseModel n_noise_frames
NOISE_STEP = BAND_SIZE // N_NOISE_FRAMES
NOISE_WINDOW = NOISE_STEP * 2
NOISE_COEFFS = NOISE_WINDOW // 2 + 1
LOWEST_FREQ = 0.05 if BAND_SIZE == 512 else 0.01
LEAK = 0.2

# TODO(synk): OscillatorBank / NoiseModel are not defined in the provided
# source; their forward semantics are reconstructed (abs/sigmoid activations,
# constrain, linear upsample, phase cumsum + sin bank, conv-upsampled noise
# filter magnitudes).  mask_after is only hit for band_size==512.


# ------------------------------ Pallas kernel -------------------------------
def _leaky(v):
    return jnp.where(v > 0, v, LEAK * v)


def band_upsample_kernel(xt_ref, twf_ref, tb_ref, projw_ref, projb_ref,
                         mtb_ref, lmtb_ref, nuwf_ref, nub_ref,
                         harm_ref, ynoise_ref):
    C = NETWORK_CHANNELS
    v = xt_ref[0]                                   # (C, R), R = B_BLK*T_IN, time in lanes
    R = v.shape[1]

    # lane index (= b*T_IN + t) masks so time shifts never leak across the
    # batch elements packed along the lane axis.
    cols = lax.broadcasted_iota(jnp.int32, (1, R), 1)
    ok_prev = (cols % T_IN) != 0
    ok_next = (cols % T_IN) != (T_IN - 1)

    def shift_prev(u):                              # out[:, t] = u[:, t-1], zero at t == 0
        return jnp.where(ok_prev, pltpu.roll(u, 1, axis=1), 0.0)

    def shift_next(u):                              # out[:, t] = u[:, t+1], zero at t == T_IN-1
        return jnp.where(ok_next, pltpu.roll(u, R - 1, axis=1), 0.0)

    def conv_k3(u, wf, bias):
        # three taps folded into one K=3C matmul on the MXU
        stacked = jnp.concatenate([shift_prev(u), u, shift_next(u)], axis=0)   # (3C, R)
        return jnp.dot(wf, stacked, preferred_element_type=jnp.float32) + bias

    # ---- self.t : Conv1d(k3) -> LReLU -> Conv1d -> LReLU -> Conv1d -> LReLU -> Conv1d
    h = _leaky(conv_k3(v, twf_ref[0], tb_ref[0]))
    h = _leaky(conv_k3(h, twf_ref[1], tb_ref[1]))
    h = _leaky(conv_k3(h, twf_ref[2], tb_ref[2]))
    h = conv_k3(h, twf_ref[3], tb_ref[3])           # (C, R)

    # ---- fused 1x1 projections: [osc-amp | osc-freq | noise-initial] -------
    p = jnp.dot(projw_ref[...], h, preferred_element_type=jnp.float32) + projb_ref[...]
    amp = jnp.abs(p[:N_OSC])                        # amp_activation = abs        (N_OSC, R)
    freq = jax.nn.sigmoid(p[N_OSC:2 * N_OSC])       # activation = sigmoid
    freq = LOWEST_FREQ + freq * (0.5 - LOWEST_FREQ)  # constrain=True
    n = p[2 * N_OSC:]                               # NoiseModel initial conv     (C, R)

    # ---- OscillatorBank: block-diag linear upsample, cumsum folded into LM -
    amp_up = jnp.dot(amp, mtb_ref[...], preferred_element_type=jnp.float32)     # (N_OSC, B_BLK*BAND)
    phase = jnp.dot(freq, lmtb_ref[...], preferred_element_type=jnp.float32) * np.pi
    osc = jnp.sin(phase) * amp_up
    # TODO(synk): assumes OscillatorBank reduces oscillators with sum(dim=1, keepdim=True)
    harm_ref[0] = jnp.sum(osc, axis=0, keepdims=True)                           # (1, B_BLK*BAND)

    # ---- NoiseModel: ConvTranspose1d(C, C, 4, 2, 1) as one fused matmul ----
    r4 = jnp.dot(nuwf_ref[...], n, preferred_element_type=jnp.float32)          # (4C, R)
    a_ = r4[:C]
    b_ = r4[C:2 * C]
    c_ = r4[2 * C:3 * C]
    d_ = r4[3 * C:]
    y_even = _leaky(b_ + shift_prev(d_) + nub_ref[...])     # output frames 0,2,4,...
    y_odd = _leaky(c_ + shift_next(a_) + nub_ref[...])      # output frames 1,3,5,...
    ynoise_ref[0, 0] = y_even                                # (C, R) lane-dense slabs
    ynoise_ref[0, 1] = y_odd


# --------------------------------- glue -------------------------------------
def build_interp_matrix(n_in, n_out):
    # Matches F.interpolate(mode='linear', align_corners=False).
    o = np.arange(n_out)
    src = np.clip((o + 0.5) * (n_in / n_out) - 0.5, 0.0, None)
    i0 = np.clip(np.floor(src).astype(np.int64), 0, n_in - 1)
    i1 = np.minimum(i0 + 1, n_in - 1)
    frac = (src - i0).astype(np.float32)
    M = np.zeros((n_out, n_in), np.float32)
    M[o, i0] += (1.0 - frac)
    M[o, i1] += frac
    return M


def noise_bank2(mags, key):
    # mags: (B, NOISE_COEFFS, N_NOISE_FRAMES) real filter magnitudes.
    # TODO(synk): torch's white-noise RNG cannot be reproduced; uses JAX uniform(-1, 1).
    B, coeffs, frames = mags.shape
    window = (coeffs - 1) * 2
    hop = window // 2
    total = hop * frames
    noise = jax.random.uniform(key, (B, total + hop), minval=-1.0, maxval=1.0)
    idx = jnp.arange(frames)[:, None] * hop + jnp.arange(window)[None, :]
    noise_frames = noise[:, idx]                                   # (B, frames, window)
    spec = jnp.fft.rfft(noise_frames, axis=-1, norm="ortho")       # (B, frames, coeffs)
    filt = spec * jnp.transpose(mags, (0, 2, 1))
    frames_t = jnp.fft.irfft(filt, n=window, axis=-1, norm="ortho")
    fh = frames_t[:, :, :hop].reshape(B, total)
    sh = frames_t[:, :, hop:].reshape(B, total)
    sh = jnp.pad(sh, ((0, 0), (hop, 0)))[:, :total]
    return (fh + sh)[:, None, :]                                    # (B, 1, BAND_SIZE)


@jax.jit
def band_upsample_forward(x, kp, noise_key):
    B, t_in, C = x.shape
    b_blk = kp["mtb"].shape[0] // t_in
    band = kp["mtb"].shape[1] // b_blk
    assert B % b_blk == 0
    nb = B // b_blk
    r = b_blk * t_in

    # the module's x.permute(0, 2, 1), plus packing B_BLK batches along lanes
    xt = jnp.transpose(x, (0, 2, 1)).reshape(nb, b_blk, C, t_in)
    xt = jnp.transpose(xt, (0, 2, 1, 3)).reshape(nb, C, r)

    harm_o, yno = pl.pallas_call(
        band_upsample_kernel,
        grid=(nb,),
        in_specs=[
            pl.BlockSpec((1, C, r), lambda g: (g, 0, 0)),
            pl.BlockSpec(kp["twf"].shape, lambda g: (0, 0, 0)),
            pl.BlockSpec(kp["tb"].shape, lambda g: (0, 0, 0)),
            pl.BlockSpec(kp["projw"].shape, lambda g: (0, 0)),
            pl.BlockSpec(kp["projb"].shape, lambda g: (0, 0)),
            pl.BlockSpec(kp["mtb"].shape, lambda g: (0, 0)),
            pl.BlockSpec(kp["lmtb"].shape, lambda g: (0, 0)),
            pl.BlockSpec(kp["nuwf"].shape, lambda g: (0, 0)),
            pl.BlockSpec(kp["nub"].shape, lambda g: (0, 0)),
        ],
        out_specs=[
            pl.BlockSpec((1, 1, b_blk * band), lambda g: (g, 0, 0)),
            pl.BlockSpec((1, 2, C, r), lambda g: (g, 0, 0, 0)),
        ],
        out_shape=[
            jax.ShapeDtypeStruct((nb, 1, b_blk * band), jnp.float32),
            jax.ShapeDtypeStruct((nb, 2, C, r), jnp.float32),
        ],
        compiler_params=pltpu.CompilerParams(dimension_semantics=("parallel",)),
    )(xt, kp["twf"], kp["tb"], kp["projw"], kp["projb"],
      kp["mtb"], kp["lmtb"], kp["nuwf"], kp["nub"])

    harm = harm_o.reshape(B, band)[:, None, :]                         # (B, 1, BAND)

    # interleave even/odd ConvTranspose frames; the tiny 64->NOISE_COEFFS final
    # projection runs in XLA glue so the kernel output stays lane-dense.
    yn = yno.reshape(nb, 2, C, b_blk, t_in)
    yn = jnp.transpose(yn, (0, 3, 4, 1, 2)).reshape(B, 2 * t_in, C)    # (B, frames, C)
    nc = jnp.einsum("bfc,ck->bfk", yn, kp["nfw"]) + kp["nfb"]           # (B, frames, coeffs)
    nc = jnp.transpose(nc, (0, 2, 1))                                   # (B, coeffs, frames)
    noise = noise_bank2(nc, noise_key)                                  # (B, 1, BAND)
    return harm, noise


# --------------------------- parameter construction -------------------------
def init_params(key):
    """Parameters in the PyTorch module's native layouts."""
    C = NETWORK_CHANNELS
    ks = jax.random.split(key, 14)

    def conv_w(k, cout, cin, ksz):
        return (1.0 / np.sqrt(cin * ksz)) * jax.random.normal(k, (cout, cin, ksz), jnp.float32)

    tws = [conv_w(ks[i], C, C, 3) for i in range(4)]                              # Conv1d (Cout,Cin,3)
    tbs = [0.01 * jax.random.normal(jax.random.fold_in(ks[i], 1), (C,), jnp.float32)
           for i in range(4)]
    aw = conv_w(ks[4], N_OSC, C, 1)
    ab = 0.01 * jax.random.normal(ks[5], (N_OSC,), jnp.float32)
    fw = conv_w(ks[6], N_OSC, C, 1)
    fb = 0.01 * jax.random.normal(ks[7], (N_OSC,), jnp.float32)
    niw = conv_w(ks[8], C, C, 1)
    nib = 0.01 * jax.random.normal(ks[9], (C,), jnp.float32)
    nuw = (1.0 / np.sqrt(C * 4)) * jax.random.normal(ks[10], (C, C, 4), jnp.float32)  # ConvT (Cin,Cout,4)
    nub = 0.01 * jax.random.normal(ks[11], (C,), jnp.float32)
    nfw = conv_w(ks[12], NOISE_COEFFS, C, 1)
    nfb = 0.01 * jax.random.normal(ks[13], (NOISE_COEFFS,), jnp.float32)
    return (tws, tbs, aw, ab, fw, fb, niw, nib, nuw, nub, nfw, nfb)


def prepare_kernel_params(params, b_blk):
    """Re-layout weights for the channel-major kernel (hoisted out of forward)."""
    (tws, tbs, aw, ab, fw, fb, niw, nib, nuw, nub, nfw, nfb) = params
    C = NETWORK_CHANNELS
    # k=3 conv taps folded to (Cout, 3*Cin) for a single K=192 matmul per layer
    twf = jnp.stack([jnp.transpose(w, (0, 2, 1)).reshape(C, 3 * C) for w in tws])   # (4, C, 3C)
    tb = jnp.stack([b.reshape(C, 1) for b in tbs])                                  # (4, C, 1)
    # fused 1x1 projection [amp | freq | noise-initial] -> 128 output rows
    projw = jnp.concatenate([aw[:, :, 0], fw[:, :, 0], niw[:, :, 0]], axis=0)        # (128, C)
    projb = jnp.concatenate([ab, fb, nib], axis=0)[:, None]                          # (128, 1)
    # ConvTranspose1d(C, C, 4, 2, 1): 4 taps fused along output rows
    nuwf = jnp.concatenate([nuw[:, :, k].T for k in range(4)], axis=0)               # (4C, C)
    nubt = nub[:, None]
    # linear upsample matrix with the phase cumsum folded in (LM = tril @ M),
    # block-diagonal over the batch block so all packed batches upsample at once
    M = jnp.asarray(build_interp_matrix(T_IN, BAND_SIZE))                            # (BAND, T_IN)
    LM = jnp.tril(jnp.ones((BAND_SIZE, BAND_SIZE), jnp.float32)) @ M
    eye = jnp.eye(b_blk, dtype=jnp.float32)
    return dict(
        twf=twf, tb=tb, projw=projw, projb=projb,
        mtb=jnp.kron(eye, M.T), lmtb=jnp.kron(eye, LM.T),
        nuwf=nuwf, nub=nubt,
        nfw=nfw[:, :, 0].T, nfb=nfb,
    )


def pick_batch_block(batch):
    # several batch elements per grid step (amortizes serial-grid overhead on
    # single-TC v5e/v6e); must divide the batch.
    for cand in (8, 4, 2, 1):
        if cand <= batch and batch % cand == 0:
            return cand
    return 1


# ----------------------------------- main ------------------------------------
if __name__ == "__main__":
    key = jax.random.PRNGKey(0)
    pkey, xkey, nkey = jax.random.split(key, 3)
    params = init_params(pkey)

    B = 2
    b_blk = pick_batch_block(B)
    kp = prepare_kernel_params(params, b_blk)

    # module input: (batch, time, channels) — it permutes to NCW internally
    x = jax.random.normal(xkey, (B, T_IN, NETWORK_CHANNELS), jnp.float32)

    harm, noise = band_upsample_forward(x, kp, nkey)
    jax.block_until_ready((harm, noise))

    assert harm.shape == (B, 1, BAND_SIZE) and harm.dtype == jnp.float32
    assert noise.shape == (B, 1, BAND_SIZE) and noise.dtype == jnp.float32
    assert bool(jnp.all(jnp.isfinite(harm))) and bool(jnp.all(jnp.isfinite(noise)))
    print("KERNEL_OK")
</pallas_src>

<mosaic_0001>
module attributes {stable_mosaic.version = 11 : i64} {
  func.func @band_upsample_kernel(%arg0: i32, %arg1: memref<1x64x64xf32, #tpu.memory_space<vmem>>, %arg2: memref<4x64x192xf32, #tpu.memory_space<vmem>>, %arg3: memref<4x64x1xf32, #tpu.memory_space<vmem>>, %arg4: memref<128x64xf32, #tpu.memory_space<vmem>>, %arg5: memref<128x1xf32, #tpu.memory_space<vmem>>, %arg6: memref<64x256xf32, #tpu.memory_space<vmem>>, %arg7: memref<64x256xf32, #tpu.memory_space<vmem>>, %arg8: memref<256x64xf32, #tpu.memory_space<vmem>>, %arg9: memref<64x1xf32, #tpu.memory_space<vmem>>, %arg10: memref<1x1x256xf32, #tpu.memory_space<vmem>>, %arg11: memref<1x2x64x64xf32, #tpu.memory_space<vmem>>) attributes {dimension_semantics = [#tpu.dimension_semantics<parallel>], iteration_bounds = array<i64: 1>, scalar_prefetch = 0 : i64, scratch_operands = 0 : i64, tpu.core_type = #tpu.core_type<tc>, window_params = [{transform_indices = @transform_0, window_bounds = array<i64: 1, 64, 64>}, {pipeline_mode = #tpu.pipeline_mode<synchronous>, transform_indices = @transform_1, window_bounds = array<i64: 4, 64, 192>}, {pipeline_mode = #tpu.pipeline_mode<synchronous>, transform_indices = @transform_2, window_bounds = array<i64: 4, 64, 1>}, {pipeline_mode = #tpu.pipeline_mode<synchronous>, transform_indices = @transform_3, window_bounds = array<i64: 128, 64>}, {pipeline_mode = #tpu.pipeline_mode<synchronous>, transform_indices = @transform_4, window_bounds = array<i64: 128, 1>}, {pipeline_mode = #tpu.pipeline_mode<synchronous>, transform_indices = @transform_5, window_bounds = array<i64: 64, 256>}, {pipeline_mode = #tpu.pipeline_mode<synchronous>, transform_indices = @transform_6, window_bounds = array<i64: 64, 256>}, {pipeline_mode = #tpu.pipeline_mode<synchronous>, transform_indices = @transform_7, window_bounds = array<i64: 256, 64>}, {pipeline_mode = #tpu.pipeline_mode<synchronous>, transform_indices = @transform_8, window_bounds = array<i64: 64, 1>}, {transform_indices = @transform_9, window_bounds = array<i64: 1, 1, 256>}, {transform_indices = @transform_10, window_bounds = array<i64: 1, 2, 64, 64>}]} {
    %c0 = arith.constant 0 : index
    %c0_0 = arith.constant 0 : index
    %c0_1 = arith.constant 0 : index
    %0 = vector.load %arg1[%c0, %c0_0, %c0_1] : memref<1x64x64xf32, #tpu.memory_space<vmem>>, vector<1x64x64xf32>
    %1 = vector.shape_cast %0 : vector<1x64x64xf32> to vector<64x64xf32>
    %2 = tpu.iota {dimensions = array<i32: 1>} : vector<1x64xi32>
    %c32_i32 = arith.constant 32 : i32
    %c0_i32 = arith.constant 0 : i32
    %3 = arith.cmpi eq, %c32_i32, %c0_i32 : i32
    %c1_i32 = arith.constant 1 : i32
    %4 = arith.select %3, %c1_i32, %c32_i32 : i32
    %5 = vector.broadcast %4 : i32 to vector<1x64xi32>
    %6 = arith.remsi %2, %5 : vector<1x64xi32>
    %c0_i32_2 = arith.constant 0 : i32
    %7 = vector.broadcast %c0_i32_2 : i32 to vector<1x64xi32>
    %8 = arith.cmpi ne, %6, %7 : vector<1x64xi32>
    %c0_i32_3 = arith.constant 0 : i32
    %9 = vector.broadcast %c0_i32_3 : i32 to vector<1x64xi32>
    %10 = arith.cmpi slt, %6, %9 : vector<1x64xi32>
    %c0_i32_4 = arith.constant 0 : i32
    %11 = arith.cmpi slt, %4, %c0_i32_4 : i32
    %12 = vector.broadcast %11 : i1 to vector<1x64xi1>
    %13 = vector.broadcast %12 : vector<1x64xi1> to vector<1x64xi1>
    %14 = arith.xori %10, %13 : vector<1x64xi1>
    %15 = arith.andi %14, %8 : vector<1x64xi1>
    %16 = vector.broadcast %4 : i32 to vector<1x64xi32>
    %17 = arith.addi %6, %16 : vector<1x64xi32>
    %18 = arith.select %15, %17, %6 : vector<1x64xi1>, vector<1x64xi32>
    %c0_i32_5 = arith.constant 0 : i32
    %19 = vector.broadcast %c0_i32_5 : i32 to vector<1x64xi32>
    %20 = arith.cmpi ne, %18, %19 : vector<1x64xi32>
    %c32_i32_6 = arith.constant 32 : i32
    %c0_i32_7 = arith.constant 0 : i32
    %21 = arith.cmpi eq, %c32_i32_6, %c0_i32_7 : i32
    %c1_i32_8 = arith.constant 1 : i32
    %22 = arith.select %21, %c1_i32_8, %c32_i32_6 : i32
    %23 = vector.broadcast %22 : i32 to vector<1x64xi32>
    %24 = arith.remsi %2, %23 : vector<1x64xi32>
    %c0_i32_9 = arith.constant 0 : i32
    %25 = vector.broadcast %c0_i32_9 : i32 to vector<1x64xi32>
    %26 = arith.cmpi ne, %24, %25 : vector<1x64xi32>
    %c0_i32_10 = arith.constant 0 : i32
    %27 = vector.broadcast %c0_i32_10 : i32 to vector<1x64xi32>
    %28 = arith.cmpi slt, %24, %27 : vector<1x64xi32>
    %c0_i32_11 = arith.constant 0 : i32
    %29 = arith.cmpi slt, %22, %c0_i32_11 : i32
    %30 = vector.broadcast %29 : i1 to vector<1x64xi1>
    %31 = vector.broadcast %30 : vector<1x64xi1> to vector<1x64xi1>
    %32 = arith.xori %28, %31 : vector<1x64xi1>
    %33 = arith.andi %32, %26 : vector<1x64xi1>
    %34 = vector.broadcast %22 : i32 to vector<1x64xi32>
    %35 = arith.addi %24, %34 : vector<1x64xi32>
    %36 = arith.select %33, %35, %24 : vector<1x64xi1>, vector<1x64xi32>
    %c31_i32 = arith.constant 31 : i32
    %37 = vector.broadcast %c31_i32 : i32 to vector<1x64xi32>
    %38 = arith.cmpi ne, %36, %37 : vector<1x64xi32>
    %c0_12 = arith.constant 0 : index
    %c0_13 = arith.constant 0 : index
    %c0_14 = arith.constant 0 : index
    %39 = vector.load %arg2[%c0_12, %c0_13, %c0_14] : memref<4x64x192xf32, #tpu.memory_space<vmem>>, vector<1x64x192xf32>
    %40 = vector.shape_cast %39 : vector<1x64x192xf32> to vector<64x192xf32>
    %c0_15 = arith.constant 0 : index
    %c0_16 = arith.constant 0 : index
    %c0_17 = arith.constant 0 : index
    %41 = vector.load %arg3[%c0_15, %c0_16, %c0_17] : memref<4x64x1xf32, #tpu.memory_space<vmem>>, vector<1x64x1xf32>
    %42 = vector.shape_cast %41 : vector<1x64x1xf32> to vector<64x1xf32>
    %c1_i32_18 = arith.constant 1 : i32
    %43 = tpu.dynamic_rotate %1 by %c1_i32_18 dim 1 : vector<64x64xf32>, i32 -> vector<64x64xf32>
    %cst = arith.constant 0.000000e+00 : f32
    %44 = vector.shape_cast %20 : vector<1x64xi1> to vector<1x64xi1>
    %45 = vector.broadcast %44 : vector<1x64xi1> to vector<64x64xi1>
    %46 = vector.broadcast %cst : f32 to vector<64x64xf32>
    %47 = arith.select %45, %43, %46 : vector<64x64xi1>, vector<64x64xf32>
    %c63_i32 = arith.constant 63 : i32
    %48 = tpu.dynamic_rotate %1 by %c63_i32 dim 1 : vector<64x64xf32>, i32 -> vector<64x64xf32>
    %cst_19 = arith.constant 0.000000e+00 : f32
    %49 = vector.shape_cast %38 : vector<1x64xi1> to vector<1x64xi1>
    %50 = vector.broadcast %49 : vector<1x64xi1> to vector<64x64xi1>
    %51 = vector.broadcast %cst_19 : f32 to vector<64x64xf32>
    %52 = arith.select %50, %48, %51 : vector<64x64xi1>, vector<64x64xf32>
    %53 = tpu.concatenate %47, %1, %52 in 0 : vector<64x64xf32>, vector<64x64xf32>, vector<64x64xf32> -> vector<192x64xf32>
    %cst_20 = arith.constant dense<0.000000e+00> : vector<64x64xf32>
    %54 = tpu.matmul %40, %53, %cst_20 {dimension_numbers = #tpu.dot_dimension_numbers<[1], [0], [0], [1], [0, 0, 1, 1], [], []>} : vector<64x192xf32>, vector<192x64xf32>, vector<64x64xf32> -> vector<64x64xf32>
    %55 = vector.broadcast %42 : vector<64x1xf32> to vector<64x64xf32>
    %56 = arith.addf %54, %55 : vector<64x64xf32>
    %cst_21 = arith.constant 0.000000e+00 : f32
    %57 = vector.broadcast %cst_21 : f32 to vector<64x64xf32>
    %58 = arith.cmpf ogt, %56, %57 : vector<64x64xf32>
    %cst_22 = arith.constant 2.000000e-01 : f32
    %59 = vector.broadcast %cst_22 : f32 to vector<64x64xf32>
    %60 = arith.mulf %59, %56 : vector<64x64xf32>
    %61 = arith.select %58, %56, %60 : vector<64x64xi1>, vector<64x64xf32>
    %c1 = arith.constant 1 : index
    %c0_23 = arith.constant 0 : index
    %c0_24 = arith.constant 0 : index
    %62 = vector.load %arg2[%c1, %c0_23, %c0_24] : memref<4x64x192xf32, #tpu.memory_space<vmem>>, vector<1x64x192xf32>
    %63 = vector.shape_cast %62 : vector<1x64x192xf32> to vector<64x192xf32>
    %c1_25 = arith.constant 1 : index
    %c0_26 = arith.constant 0 : index
    %c0_27 = arith.constant 0 : index
    %64 = vector.load %arg3[%c1_25, %c0_26, %c0_27] : memref<4x64x1xf32, #tpu.memory_space<vmem>>, vector<1x64x1xf32>
    %65 = vector.shape_cast %64 : vector<1x64x1xf32> to vector<64x1xf32>
    %c1_i32_28 = arith.constant 1 : i32
    %66 = tpu.dynamic_rotate %61 by %c1_i32_28 dim 1 : vector<64x64xf32>, i32 -> vector<64x64xf32>
    %cst_29 = arith.constant 0.000000e+00 : f32
    %67 = vector.shape_cast %20 : vector<1x64xi1> to vector<1x64xi1>
    %68 = vector.broadcast %67 : vector<1x64xi1> to vector<64x64xi1>
    %69 = vector.broadcast %cst_29 : f32 to vector<64x64xf32>
    %70 = arith.select %68, %66, %69 : vector<64x64xi1>, vector<64x64xf32>
    %c63_i32_30 = arith.constant 63 : i32
    %71 = tpu.dynamic_rotate %61 by %c63_i32_30 dim 1 : vector<64x64xf32>, i32 -> vector<64x64xf32>
    %cst_31 = arith.constant 0.000000e+00 : f32
    %72 = vector.shape_cast %38 : vector<1x64xi1> to vector<1x64xi1>
    %73 = vector.broadcast %72 : vector<1x64xi1> to vector<64x64xi1>
    %74 = vector.broadcast %cst_31 : f32 to vector<64x64xf32>
    %75 = arith.select %73, %71, %74 : vector<64x64xi1>, vector<64x64xf32>
    %76 = tpu.concatenate %70, %61, %75 in 0 : vector<64x64xf32>, vector<64x64xf32>, vector<64x64xf32> -> vector<192x64xf32>
    %cst_32 = arith.constant dense<0.000000e+00> : vector<64x64xf32>
    %77 = tpu.matmul %63, %76, %cst_32 {dimension_numbers = #tpu.dot_dimension_numbers<[1], [0], [0], [1], [0, 0, 1, 1], [], []>} : vector<64x192xf32>, vector<192x64xf32>, vector<64x64xf32> -> vector<64x64xf32>
    %78 = vector.broadcast %65 : vector<64x1xf32> to vector<64x64xf32>
    %79 = arith.addf %77, %78 : vector<64x64xf32>
    %cst_33 = arith.constant 0.000000e+00 : f32
    %80 = vector.broadcast %cst_33 : f32 to vector<64x64xf32>
    %81 = arith.cmpf ogt, %79, %80 : vector<64x64xf32>
    %cst_34 = arith.constant 2.000000e-01 : f32
    %82 = vector.broadcast %cst_34 : f32 to vector<64x64xf32>
    %83 = arith.mulf %82, %79 : vector<64x64xf32>
    %84 = arith.select %81, %79, %83 : vector<64x64xi1>, vector<64x64xf32>
    %c2 = arith.constant 2 : index
    %c0_35 = arith.constant 0 : index
    %c0_36 = arith.constant 0 : index
    %85 = vector.load %arg2[%c2, %c0_35, %c0_36] : memref<4x64x192xf32, #tpu.memory_space<vmem>>, vector<1x64x192xf32>
    %86 = vector.shape_cast %85 : vector<1x64x192xf32> to vector<64x192xf32>
    %c2_37 = arith.constant 2 : index
    %c0_38 = arith.constant 0 : index
    %c0_39 = arith.constant 0 : index
    %87 = vector.load %arg3[%c2_37, %c0_38, %c0_39] : memref<4x64x1xf32, #tpu.memory_space<vmem>>, vector<1x64x1xf32>
    %88 = vector.shape_cast %87 : vector<1x64x1xf32> to vector<64x1xf32>
    %c1_i32_40 = arith.constant 1 : i32
    %89 = tpu.dynamic_rotate %84 by %c1_i32_40 dim 1 : vector<64x64xf32>, i32 -> vector<64x64xf32>
    %cst_41 = arith.constant 0.000000e+00 : f32
    %90 = vector.shape_cast %20 : vector<1x64xi1> to vector<1x64xi1>
    %91 = vector.broadcast %90 : vector<1x64xi1> to vector<64x64xi1>
    %92 = vector.broadcast %cst_41 : f32 to vector<64x64xf32>
    %93 = arith.select %91, %89, %92 : vector<64x64xi1>, vector<64x64xf32>
    %c63_i32_42 = arith.constant 63 : i32
    %94 = tpu.dynamic_rotate %84 by %c63_i32_42 dim 1 : vector<64x64xf32>, i32 -> vector<64x64xf32>
    %cst_43 = arith.constant 0.000000e+00 : f32
    %95 = vector.shape_cast %38 : vector<1x64xi1> to vector<1x64xi1>
    %96 = vector.broadcast %95 : vector<1x64xi1> to vector<64x64xi1>
    %97 = vector.broadcast %cst_43 : f32 to vector<64x64xf32>
    %98 = arith.select %96, %94, %97 : vector<64x64xi1>, vector<64x64xf32>
    %99 = tpu.concatenate %93, %84, %98 in 0 : vector<64x64xf32>, vector<64x64xf32>, vector<64x64xf32> -> vector<192x64xf32>
    %cst_44 = arith.constant dense<0.000000e+00> : vector<64x64xf32>
    %100 = tpu.matmul %86, %99, %cst_44 {dimension_numbers = #tpu.dot_dimension_numbers<[1], [0], [0], [1], [0, 0, 1, 1], [], []>} : vector<64x192xf32>, vector<192x64xf32>, vector<64x64xf32> -> vector<64x64xf32>
    %101 = vector.broadcast %88 : vector<64x1xf32> to vector<64x64xf32>
    %102 = arith.addf %100, %101 : vector<64x64xf32>
    %cst_45 = arith.constant 0.000000e+00 : f32
    %103 = vector.broadcast %cst_45 : f32 to vector<64x64xf32>
    %104 = arith.cmpf ogt, %102, %103 : vector<64x64xf32>
    %cst_46 = arith.constant 2.000000e-01 : f32
    %105 = vector.broadcast %cst_46 : f32 to vector<64x64xf32>
    %106 = arith.mulf %105, %102 : vector<64x64xf32>
    %107 = arith.select %104, %102, %106 : vector<64x64xi1>, vector<64x64xf32>
    %c3 = arith.constant 3 : index
    %c0_47 = arith.constant 0 : index
    %c0_48 = arith.constant 0 : index
    %108 = vector.load %arg2[%c3, %c0_47, %c0_48] : memref<4x64x192xf32, #tpu.memory_space<vmem>>, vector<1x64x192xf32>
    %109 = vector.shape_cast %108 : vector<1x64x192xf32> to vector<64x192xf32>
    %c3_49 = arith.constant 3 : index
    %c0_50 = arith.constant 0 : index
    %c0_51 = arith.constant 0 : index
    %110 = vector.load %arg3[%c3_49, %c0_50, %c0_51] : memref<4x64x1xf32, #tpu.memory_space<vmem>>, vector<1x64x1xf32>
    %111 = vector.shape_cast %110 : vector<1x64x1xf32> to vector<64x1xf32>
    %c1_i32_52 = arith.constant 1 : i32
    %112 = tpu.dynamic_rotate %107 by %c1_i32_52 dim 1 : vector<64x64xf32>, i32 -> vector<64x64xf32>
    %cst_53 = arith.constant 0.000000e+00 : f32
    %113 = vector.shape_cast %20 : vector<1x64xi1> to vector<1x64xi1>
    %114 = vector.broadcast %113 : vector<1x64xi1> to vector<64x64xi1>
    %115 = vector.broadcast %cst_53 : f32 to vector<64x64xf32>
    %116 = arith.select %114, %112, %115 : vector<64x64xi1>, vector<64x64xf32>
    %c63_i32_54 = arith.constant 63 : i32
    %117 = tpu.dynamic_rotate %107 by %c63_i32_54 dim 1 : vector<64x64xf32>, i32 -> vector<64x64xf32>
    %cst_55 = arith.constant 0.000000e+00 : f32
    %118 = vector.shape_cast %38 : vector<1x64xi1> to vector<1x64xi1>
    %119 = vector.broadcast %118 : vector<1x64xi1> to vector<64x64xi1>
    %120 = vector.broadcast %cst_55 : f32 to vector<64x64xf32>
    %121 = arith.select %119, %117, %120 : vector<64x64xi1>, vector<64x64xf32>
    %122 = tpu.concatenate %116, %107, %121 in 0 : vector<64x64xf32>, vector<64x64xf32>, vector<64x64xf32> -> vector<192x64xf32>
    %cst_56 = arith.constant dense<0.000000e+00> : vector<64x64xf32>
    %123 = tpu.matmul %109, %122, %cst_56 {dimension_numbers = #tpu.dot_dimension_numbers<[1], [0], [0], [1], [0, 0, 1, 1], [], []>} : vector<64x192xf32>, vector<192x64xf32>, vector<64x64xf32> -> vector<64x64xf32>
    %124 = vector.broadcast %111 : vector<64x1xf32> to vector<64x64xf32>
    %125 = arith.addf %123, %124 : vector<64x64xf32>
    %c0_57 = arith.constant 0 : index
    %c0_58 = arith.constant 0 : index
    %126 = vector.load %arg4[%c0_57, %c0_58] : memref<128x64xf32, #tpu.memory_space<vmem>>, vector<128x64xf32>
    %cst_59 = arith.constant dense<0.000000e+00> : vector<128x64xf32>
    %127 = tpu.matmul %126, %125, %cst_59 {dimension_numbers = #tpu.dot_dimension_numbers<[1], [0], [0], [1], [0, 0, 1, 1], [], []>} : vector<128x64xf32>, vector<64x64xf32>, vector<128x64xf32> -> vector<128x64xf32>
    %c0_60 = arith.constant 0 : index
    %c0_61 = arith.constant 0 : index
    %128 = vector.load %arg5[%c0_60, %c0_61] : memref<128x1xf32, #tpu.memory_space<vmem>>, vector<128x1xf32>
    %129 = vector.broadcast %128 : vector<128x1xf32> to vector<128x64xf32>
    %130 = arith.addf %127, %129 : vector<128x64xf32>
    %131 = vector.extract_strided_slice %130 {offsets = [0, 0], sizes = [32, 64], strides = [1, 1]} : vector<128x64xf32> to vector<32x64xf32>
    %132 = math.absf %131 : vector<32x64xf32>
    %133 = vector.extract_strided_slice %130 {offsets = [32, 0], sizes = [32, 64], strides = [1, 1]} : vector<128x64xf32> to vector<32x64xf32>
    %134 = arith.negf %133 : vector<32x64xf32>
    %135 = math.exp %134 : vector<32x64xf32>
    %cst_62 = arith.constant 1.000000e+00 : f32
    %136 = vector.broadcast %cst_62 : f32 to vector<32x64xf32>
    %137 = arith.addf %136, %135 : vector<32x64xf32>
    %138 = arith.divf %136, %137 : vector<32x64xf32>
    %cst_63 = arith.constant 4.900000e-01 : f32
    %139 = vector.broadcast %cst_63 : f32 to vector<32x64xf32>
    %140 = arith.mulf %138, %139 : vector<32x64xf32>
    %cst_64 = arith.constant 0.00999999977 : f32
    %141 = vector.broadcast %cst_64 : f32 to vector<32x64xf32>
    %142 = arith.addf %141, %140 : vector<32x64xf32>
    %143 = vector.extract_strided_slice %130 {offsets = [64, 0], sizes = [64, 64], strides = [1, 1]} : vector<128x64xf32> to vector<64x64xf32>
    %c0_65 = arith.constant 0 : index
    %c0_66 = arith.constant 0 : index
    %144 = vector.load %arg6[%c0_65, %c0_66] : memref<64x256xf32, #tpu.memory_space<vmem>>, vector<64x256xf32>
    %cst_67 = arith.constant dense<0.000000e+00> : vector<32x256xf32>
    %145 = tpu.matmul %132, %144, %cst_67 {dimension_numbers = #tpu.dot_dimension_numbers<[1], [0], [0], [1], [0, 0, 1, 1], [], []>} : vector<32x64xf32>, vector<64x256xf32>, vector<32x256xf32> -> vector<32x256xf32>
    %c0_68 = arith.constant 0 : index
    %c0_69 = arith.constant 0 : index
    %146 = vector.load %arg7[%c0_68, %c0_69] : memref<64x256xf32, #tpu.memory_space<vmem>>, vector<64x256xf32>
    %cst_70 = arith.constant dense<0.000000e+00> : vector<32x256xf32>
    %147 = tpu.matmul %142, %146, %cst_70 {dimension_numbers = #tpu.dot_dimension_numbers<[1], [0], [0], [1], [0, 0, 1, 1], [], []>} : vector<32x64xf32>, vector<64x256xf32>, vector<32x256xf32> -> vector<32x256xf32>
    %cst_71 = arith.constant 3.14159274 : f32
    %148 = vector.broadcast %cst_71 : f32 to vector<32x256xf32>
    %149 = arith.mulf %147, %148 : vector<32x256xf32>
    %150 = math.sin %149 : vector<32x256xf32>
    %151 = arith.mulf %150, %145 : vector<32x256xf32>
    %cst_72 = arith.constant dense<0.000000e+00> : vector<256xf32>
    %152 = vector.multi_reduction <add>, %151, %cst_72 [0] : vector<32x256xf32> to vector<256xf32>
    %153 = vector.shape_cast %152 : vector<256xf32> to vector<1x256xf32>
    %c0_73 = arith.constant 0 : index
    %c0_74 = arith.constant 0 : index
    %c0_75 = arith.constant 0 : index
    %154 = vector.load %arg10[%c0_73, %c0_74, %c0_75] : memref<1x1x256xf32, #tpu.memory_space<vmem>>, vector<1x1x256xf32>
    %155 = vector.shape_cast %154 : vector<1x1x256xf32> to vector<1x256xf32>
    %156 = vector.shape_cast %153 : vector<1x256xf32> to vector<1x1x256xf32>
    tpu.vector_store %arg10[%c0_73, %c0_74, %c0_75], %156 {strides = array<i32>} : memref<1x1x256xf32, #tpu.memory_space<vmem>>, vector<1x1x256xf32>,
    %c0_76 = arith.constant 0 : index
    %c0_77 = arith.constant 0 : index
    %157 = vector.load %arg8[%c0_76, %c0_77] : memref<256x64xf32, #tpu.memory_space<vmem>>, vector<256x64xf32>
    %cst_78 = arith.constant dense<0.000000e+00> : vector<256x64xf32>
    %158 = tpu.matmul %157, %143, %cst_78 {dimension_numbers = #tpu.dot_dimension_numbers<[1], [0], [0], [1], [0, 0, 1, 1], [], []>} : vector<256x64xf32>, vector<64x64xf32>, vector<256x64xf32> -> vector<256x64xf32>
    %159 = vector.extract_strided_slice %158 {offsets = [0, 0], sizes = [64, 64], strides = [1, 1]} : vector<256x64xf32> to vector<64x64xf32>
    %160 = vector.extract_strided_slice %158 {offsets = [64, 0], sizes = [64, 64], strides = [1, 1]} : vector<256x64xf32> to vector<64x64xf32>
    %161 = vector.extract_strided_slice %158 {offsets = [128, 0], sizes = [64, 64], strides = [1, 1]} : vector<256x64xf32> to vector<64x64xf32>
    %162 = vector.extract_strided_slice %158 {offsets = [192, 0], sizes = [64, 64], strides = [1, 1]} : vector<256x64xf32> to vector<64x64xf32>
    %c1_i32_79 = arith.constant 1 : i32
    %163 = tpu.dynamic_rotate %162 by %c1_i32_79 dim 1 : vector<64x64xf32>, i32 -> vector<64x64xf32>
    %cst_80 = arith.constant 0.000000e+00 : f32
    %164 = vector.shape_cast %20 : vector<1x64xi1> to vector<1x64xi1>
    %165 = vector.broadcast %164 : vector<1x64xi1> to vector<64x64xi1>
    %166 = vector.broadcast %cst_80 : f32 to vector<64x64xf32>
    %167 = arith.select %165, %163, %166 : vector<64x64xi1>, vector<64x64xf32>
    %168 = arith.addf %160, %167 : vector<64x64xf32>
    %c0_81 = arith.constant 0 : index
    %c0_82 = arith.constant 0 : index
    %169 = vector.load %arg9[%c0_81, %c0_82] : memref<64x1xf32, #tpu.memory_space<vmem>>, vector<64x1xf32>
    %170 = vector.broadcast %169 : vector<64x1xf32> to vector<64x64xf32>
    %171 = arith.addf %168, %170 : vector<64x64xf32>
    %cst_83 = arith.constant 0.000000e+00 : f32
    %172 = vector.broadcast %cst_83 : f32 to vector<64x64xf32>
    %173 = arith.cmpf ogt, %171, %172 : vector<64x64xf32>
    %cst_84 = arith.constant 2.000000e-01 : f32
    %174 = vector.broadcast %cst_84 : f32 to vector<64x64xf32>
    %175 = arith.mulf %174, %171 : vector<64x64xf32>
    %176 = arith.select %173, %171, %175 : vector<64x64xi1>, vector<64x64xf32>
    %c63_i32_85 = arith.constant 63 : i32
    %177 = tpu.dynamic_rotate %159 by %c63_i32_85 dim 1 : vector<64x64xf32>, i32 -> vector<64x64xf32>
    %cst_86 = arith.constant 0.000000e+00 : f32
    %178 = vector.shape_cast %38 : vector<1x64xi1> to vector<1x64xi1>
    %179 = vector.broadcast %178 : vector<1x64xi1> to vector<64x64xi1>
    %180 = vector.broadcast %cst_86 : f32 to vector<64x64xf32>
    %181 = arith.select %179, %177, %180 : vector<64x64xi1>, vector<64x64xf32>
    %182 = arith.addf %161, %181 : vector<64x64xf32>
    %c0_87 = arith.constant 0 : index
    %c0_88 = arith.constant 0 : index
    %183 = vector.load %arg9[%c0_87, %c0_88] : memref<64x1xf32, #tpu.memory_space<vmem>>, vector<64x1xf32>
    %184 = vector.broadcast %183 : vector<64x1xf32> to vector<64x64xf32>
    %185 = arith.addf %182, %184 : vector<64x64xf32>
    %cst_89 = arith.constant 0.000000e+00 : f32
    %186 = vector.broadcast %cst_89 : f32 to vector<64x64xf32>
    %187 = arith.cmpf ogt, %185, %186 : vector<64x64xf32>
    %cst_90 = arith.constant 2.000000e-01 : f32
    %188 = vector.broadcast %cst_90 : f32 to vector<64x64xf32>
    %189 = arith.mulf %188, %185 : vector<64x64xf32>
    %190 = arith.select %187, %185, %189 : vector<64x64xi1>, vector<64x64xf32>
    %c0_91 = arith.constant 0 : index
    %c0_92 = arith.constant 0 : index
    %c0_93 = arith.constant 0 : index
    %c0_94 = arith.constant 0 : index
    %191 = vector.load %arg11[%c0_91, %c0_92, %c0_93, %c0_94] : memref<1x2x64x64xf32, #tpu.memory_space<vmem>>, vector<1x1x64x64xf32>
    %192 = vector.shape_cast %191 : vector<1x1x64x64xf32> to vector<64x64xf32>
    %193 = vector.shape_cast %176 : vector<64x64xf32> to vector<1x1x64x64xf32>
    tpu.vector_store %arg11[%c0_91, %c0_92, %c0_93, %c0_94], %193 {strides = array<i32>} : memref<1x2x64x64xf32, #tpu.memory_space<vmem>>, vector<1x1x64x64xf32>,
    %c0_95 = arith.constant 0 : index
    %c1_96 = arith.constant 1 : index
    %c0_97 = arith.constant 0 : index
    %c0_98 = arith.constant 0 : index
    %194 = vector.load %arg11[%c0_95, %c1_96, %c0_97, %c0_98] : memref<1x2x64x64xf32, #tpu.memory_space<vmem>>, vector<1x1x64x64xf32>
    %195 = vector.shape_cast %194 : vector<1x1x64x64xf32> to vector<64x64xf32>
    %196 = vector.shape_cast %190 : vector<64x64xf32> to vector<1x1x64x64xf32>
    tpu.vector_store %arg11[%c0_95, %c1_96, %c0_97, %c0_98], %196 {strides = array<i32>} : memref<1x2x64x64xf32, #tpu.memory_space<vmem>>, vector<1x1x64x64xf32>,
    return
  }
  func.func @transform_0(%arg0: i32) -> (i32, i32, i32) {
    %c0_i32 = arith.constant 0 : i32
    %c0_i32_0 = arith.constant 0 : i32
    %c0_i32_1 = arith.constant 0 : i32
    return %arg0, %c0_i32, %c0_i32_0 : i32, i32, i32
  }
  func.func @transform_1(%arg0: i32) -> (i32, i32, i32) {
    %c0_i32 = arith.constant 0 : i32
    %c0_i32_0 = arith.constant 0 : i32
    %c0_i32_1 = arith.constant 0 : i32
    %c0_i32_2 = arith.constant 0 : i32
    return %c0_i32, %c0_i32_0, %c0_i32_1 : i32, i32, i32
  }
  func.func @transform_2(%arg0: i32) -> (i32, i32, i32) {
    %c0_i32 = arith.constant 0 : i32
    %c0_i32_0 = arith.constant 0 : i32
    %c0_i32_1 = arith.constant 0 : i32
    %c0_i32_2 = arith.constant 0 : i32
    return %c0_i32, %c0_i32_0, %c0_i32_1 : i32, i32, i32
  }
  func.func @transform_3(%arg0: i32) -> (i32, i32) {
    %c0_i32 = arith.constant 0 : i32
    %c0_i32_0 = arith.constant 0 : i32
    %c0_i32_1 = arith.constant 0 : i32
    return %c0_i32, %c0_i32_0 : i32, i32
  }
  func.func @transform_4(%arg0: i32) -> (i32, i32) {
    %c0_i32 = arith.constant 0 : i32
    %c0_i32_0 = arith.constant 0 : i32
    %c0_i32_1 = arith.constant 0 : i32
    return %c0_i32, %c0_i32_0 : i32, i32
  }
  func.func @transform_5(%arg0: i32) -> (i32, i32) {
    %c0_i32 = arith.constant 0 : i32
    %c0_i32_0 = arith.constant 0 : i32
    %c0_i32_1 = arith.constant 0 : i32
    return %c0_i32, %c0_i32_0 : i32, i32
  }
  func.func @transform_6(%arg0: i32) -> (i32, i32) {
    %c0_i32 = arith.constant 0 : i32
    %c0_i32_0 = arith.constant 0 : i32
    %c0_i32_1 = arith.constant 0 : i32
    return %c0_i32, %c0_i32_0 : i32, i32
  }
  func.func @transform_7(%arg0: i32) -> (i32, i32) {
    %c0_i32 = arith.constant 0 : i32
    %c0_i32_0 = arith.constant 0 : i32
    %c0_i32_1 = arith.constant 0 : i32
    return %c0_i32, %c0_i32_0 : i32, i32
  }
  func.func @transform_8(%arg0: i32) -> (i32, i32) {
    %c0_i32 = arith.constant 0 : i32
    %c0_i32_0 = arith.constant 0 : i32
    %c0_i32_1 = arith.constant 0 : i32
    return %c0_i32, %c0_i32_0 : i32, i32
  }
  func.func @transform_9(%arg0: i32) -> (i32, i32, i32) {
    %c0_i32 = arith.constant 0 : i32
    %c0_i32_0 = arith.constant 0 : i32
    %c0_i32_1 = arith.constant 0 : i32
    return %arg0, %c0_i32, %c0_i32_0 : i32, i32, i32
  }
  func.func @transform_10(%arg0: i32) -> (i32, i32, i32, i32) {
    %c0_i32 = arith.constant 0 : i32
    %c0_i32_0 = arith.constant 0 : i32
    %c0_i32_1 = arith.constant 0 : i32
    %c0_i32_2 = arith.constant 0 : i32
    return %arg0, %c0_i32, %c0_i32_0, %c0_i32_1 : i32, i32, i32, i32
  }
}

</mosaic_0001>

<llo_original>
// kernel: band_upsample_forward.1
$region0: #{band_upsample_forward.1}
  #allocation0 [shape = 'u32[]', space=smem, size = 0x4, offset = 0x4, fixed_abs, tag = 'smem constant byte address 0x4 - core index']
  #allocation1 [shape = 'u32[72,128]{1,0:T(1,128)}', space=vmem, size = 0x9000, scoped, tag = 'internal scratch']
  %s0 = inlined_call_operand.vmem [shape: f32[1,64,64], index: 0, kind: input, shape index: {}]
  %s1 = inlined_call_operand.vmem [shape: f32[4,64,192], index: 1, kind: input, shape index: {}]
  %s2 = inlined_call_operand.vmem [shape: f32[4,64,1], index: 2, kind: input, shape index: {}]
  %s3 = inlined_call_operand.vmem [shape: f32[128,64], index: 3, kind: input, shape index: {}]
  %s4 = inlined_call_operand.vmem [shape: f32[128,1], index: 4, kind: input, shape index: {}]
  %s5 = inlined_call_operand.vmem [shape: f32[64,256], index: 5, kind: input, shape index: {}]
  %s6 = inlined_call_operand.vmem [shape: f32[64,256], index: 6, kind: input, shape index: {}]
  %s7 = inlined_call_operand.vmem [shape: f32[256,64], index: 7, kind: input, shape index: {}]
  %s8 = inlined_call_operand.vmem [shape: f32[64,1], index: 8, kind: input, shape index: {}]
  %s9 = inlined_call_operand.hbm [shape: f32[1,1,256], index: 9, kind: output, shape index: {0}]
  %s10 = inlined_call_operand.vmem [shape: f32[1,2,64,64], index: 10, kind: output, shape index: {1}]
  %11 = xla_tuple %s9, %s10
  %s12 = sld [smem:[#allocation0]]
  $region54: #{band_upsample_forward.1} parent=0
    _
  %s14 = ssub.s32 1, %s12
  %s15 = scalar_select 0, %s14, %s12
  $region1: #{band_upsample_forward.1} parent=0
    #allocation2 [shape = 'u8[1024]{0}', space=vmem, size = 0x400, scoped, tag = 'output window, operand 0, single buffered']
    #allocation3 [shape = 's32[1]{0}', space=sflag, size = 0x4, scoped, tag = 'scoped memory for band_upsample_forward.1']
    %16 = vsyncpa [#allocation3], 0
    // Predicated region
    $region2: #{band_upsample_forward.1} parent=1 // pred_check
      _
    $region3: #{band_upsample_forward.1} parent=1 // pred_check_branch
      %18 = sbr.rel (0) target = $region5
    $region4: #{band_upsample_forward.1} parent=1 // pred_region
      _
    $region5: #{band_upsample_forward.1} parent=1 // pred_fallthru
      _
    // Predicated region
    $region6: #{band_upsample_forward.1} parent=1 // pred_check
      _
    $region7: #{band_upsample_forward.1} parent=1 // pred_check_branch
      %20 = sbr.rel (0) target = $region9
    $region8: #{band_upsample_forward.1} parent=1 // pred_region
      _
    $region9: #{band_upsample_forward.1} parent=1 // pred_fallthru
      _
    // Predicated region
    $region10: #{band_upsample_forward.1} parent=1 // pred_check
      _
    $region11: #{band_upsample_forward.1} parent=1 // pred_check_branch
      %22 = sbr.rel (0) target = $region13
    $region12: #{band_upsample_forward.1} parent=1 // pred_region
      _
    $region13: #{band_upsample_forward.1} parent=1 // pred_fallthru
      _
    // Predicated region
    $region14: #{band_upsample_forward.1} parent=1 // pred_check
      _
    $region15: #{band_upsample_forward.1} parent=1 // pred_check_branch
      %24 = sbr.rel (0) target = $region17
    $region16: #{band_upsample_forward.1} parent=1 // pred_region
      _
    $region17: #{band_upsample_forward.1} parent=1 // pred_fallthru
      _
    // Predicated region
    $region18: #{band_upsample_forward.1} parent=1 // pred_check
      _
    $region19: #{band_upsample_forward.1} parent=1 // pred_check_branch
      %26 = sbr.rel (0) target = $region21
    $region20: #{band_upsample_forward.1} parent=1 // pred_region
      _
    $region21: #{band_upsample_forward.1} parent=1 // pred_fallthru
      _
    // Predicated region
    $region22: #{band_upsample_forward.1} parent=1 // pred_check
      _
    $region23: #{band_upsample_forward.1} parent=1 // pred_check_branch
      %28 = sbr.rel (0) target = $region25
    $region24: #{band_upsample_forward.1} parent=1 // pred_region
      _
    $region25: #{band_upsample_forward.1} parent=1 // pred_fallthru
      _
    // Predicated region
    $region26: #{band_upsample_forward.1} parent=1 // pred_check
      _
    $region27: #{band_upsample_forward.1} parent=1 // pred_check_branch
      %30 = sbr.rel (0) target = $region29
    $region28: #{band_upsample_forward.1} parent=1 // pred_region
      _
    $region29: #{band_upsample_forward.1} parent=1 // pred_fallthru
      _
    // Predicated region
    $region30: #{band_upsample_forward.1} parent=1 // pred_check
      _
    $region31: #{band_upsample_forward.1} parent=1 // pred_check_branch
      %32 = sbr.rel (0) target = $region33
    $region32: #{band_upsample_forward.1} parent=1 // pred_region
      _
    $region33: #{band_upsample_forward.1} parent=1 // pred_fallthru
      _
    // Predicated region
    $region34: #{band_upsample_forward.1} parent=1 // pred_check
      _
    $region35: #{band_upsample_forward.1} parent=1 // pred_check_branch
      %34 = sbr.rel (0) target = $region37
    $region36: #{band_upsample_forward.1} parent=1 // pred_region
      _
    $region37: #{band_upsample_forward.1} parent=1 // pred_fallthru
      _
    %v35 = vld [vmem:[%s0] sm:$0xff]
    %v36 = vld [vmem:[%s0 + $0x8] sm:$0xff]
    %v37 = vld [vmem:[%s0 + $0x10] sm:$0xff]
    %v38 = vld [vmem:[%s0 + $0x18] sm:$0xff]
    %v39 = vld [vmem:[%s0 + $0x20] sm:$0xff]
    %v40 = vld [vmem:[%s0 + $0x28] sm:$0xff]
    %v41 = vld [vmem:[%s0 + $0x30] sm:$0xff]
    %v42 = vld [vmem:[%s0 + $0x38] sm:$0xff]
    %v43 = vlaneseq
    %v44 = vand.u32 %v43, 127
    %vm45 = vcmp.lt.s32.totalorder %v44, 0
    %v46 = vsub.s32 0, %v44
    %v47 = vsel %vm45, %v46, %v44
    %v48 = vshrl.u32 %v47, 5
    %v49 = vand.u32 %v47, 31
    %v50 = vsub.s32 0, %v49
    %v51 = vsel %vm45, %v50, %v49
    %vm52 = vcmp.ne.s32.totalorder %v51, 0
    %vm53 = vcmp.lt.s32.totalorder %v51, 0
    %vm54 = vmand %vm53, %vm52
    %v55 = vadd.s32 %v51, 32
    %v56 = vsel %vm54, %v55, %v51
    %vm57 = vcmp.ne.s32.totalorder %v56, 0
    %vm58 = vcmp.ne.s32.totalorder %v56, 31
    %v59 = vld [vmem:[%s1] sm:$0xff]
    %v60 = vld [vmem:[%s1 + $0x8] sm:$0xff]
    %v61 = vld [vmem:[%s1 + $0x10] sm:$0xff]
    %v62 = vld [vmem:[%s1 + $0x18] sm:$0xff]
    %v63 = vld [vmem:[%s1 + $0x20] sm:$0xff]
    %v64 = vld [vmem:[%s1 + $0x28] sm:$0xff]
    %v65 = vld [vmem:[%s1 + $0x30] sm:$0xff]
    %v66 = vld [vmem:[%s1 + $0x38] sm:$0xff]
    %v67 = vld [vmem:[%s1 + $0x40] sm:$0xff]
    %v68 = vld [vmem:[%s1 + $0x48] sm:$0xff]
    %v69 = vld [vmem:[%s1 + $0x50] sm:$0xff]
    %v70 = vld [vmem:[%s1 + $0x58] sm:$0xff]
    %v71 = vld [vmem:[%s1 + $0x60] sm:$0xff]
    %v72 = vld [vmem:[%s1 + $0x68] sm:$0xff]
    %v73 = vld [vmem:[%s1 + $0x70] sm:$0xff]
    %v74 = vld [vmem:[%s1 + $0x78] sm:$0xff]
    %v75 = vld [vmem:[%s2] sm:$0xff]
    %v76 = vld [vmem:[%s2 + $0x8] sm:$0xff]
    %v77 = vld [vmem:[%s2 + $0x10] sm:$0xff]
    %v78 = vld [vmem:[%s2 + $0x18] sm:$0xff]
    %v79 = vld [vmem:[%s2 + $0x20] sm:$0xff]
    %v80 = vld [vmem:[%s2 + $0x28] sm:$0xff]
    %v81 = vld [vmem:[%s2 + $0x30] sm:$0xff]
    %v82 = vld [vmem:[%s2 + $0x38] sm:$0xff]
    %vm83 = vcmask 1048064
    %84 = vrot.lane.b32.xlu0 %v35, 64
    %v85 = vpop.permute.xlu0 %84
    %v86 = vsel %vm83, %v85, %v35
    %87 = vrot.lane.b32.xlu0 %v36, 64
    %v88 = vpop.permute.xlu0 %87
    %v89 = vsel %vm83, %v88, %v36
    %90 = vrot.lane.b32.xlu0 %v37, 64
    %v91 = vpop.permute.xlu0 %90
    %v92 = vsel %vm83, %v91, %v37
    %93 = vrot.lane.b32.xlu0 %v38, 64
    %v94 = vpop.permute.xlu0 %93
    %v95 = vsel %vm83, %v94, %v38
    %96 = vrot.lane.b32.xlu0 %v39, 64
    %v97 = vpop.permute.xlu0 %96
    %v98 = vsel %vm83, %v97, %v39
    %99 = vrot.lane.b32.xlu0 %v40, 64
    %v100 = vpop.permute.xlu0 %99
    %v101 = vsel %vm83, %v100, %v40
    %102 = vrot.lane.b32.xlu0 %v41, 64
    %v103 = vpop.permute.xlu0 %102
    %v104 = vsel %vm83, %v103, %v41
    %105 = vrot.lane.b32.xlu0 %v42, 64
    %v106 = vpop.permute.xlu0 %105
    %v107 = vsel %vm83, %v106, %v42
    %108 = vrot.lane.b32.xlu0 %v86, 64
    %v109 = vpop.permute.xlu0 %108
    %110 = vrot.lane.b32.xlu0 %v89, 64
    %v111 = vpop.permute.xlu0 %110
    %112 = vrot.lane.b32.xlu0 %v92, 64
    %v113 = vpop.permute.xlu0 %112
    %114 = vrot.lane.b32.xlu0 %v95, 64
    %v115 = vpop.permute.xlu0 %114
    %116 = vrot.lane.b32.xlu0 %v98, 64
    %v117 = vpop.permute.xlu0 %116
    %118 = vrot.lane.b32.xlu0 %v101, 64
    %v119 = vpop.permute.xlu0 %118
    %120 = vrot.lane.b32.xlu0 %v104, 64
    %v121 = vpop.permute.xlu0 %120
    %122 = vrot.lane.b32.xlu0 %v107, 64
    %v123 = vpop.permute.xlu0 %122
    %v124 = vsel %vm83, %v109, %v35
    %v125 = vsel %vm83, %v111, %v36
    %v126 = vsel %vm83, %v113, %v37
    %v127 = vsel %vm83, %v115, %v38
    %v128 = vsel %vm83, %v117, %v39
    %v129 = vsel %vm83, %v119, %v40
    %v130 = vsel %vm83, %v121, %v41
    %v131 = vsel %vm83, %v123, %v42
    %v132 = vsel %vm57, 1, 0
    %vm133 = vcmp.eq.s32.totalorder %v132, 1
    %142 = vrot.lane.b32.xlu0 %v124, 65
    %v143 = vpop.permute.xlu0 %142
    %144 = vrot.lane.b32.xlu0 %v125, 65
    %v145 = vpop.permute.xlu0 %144
    %146 = vrot.lane.b32.xlu0 %v126, 65
    %v147 = vpop.permute.xlu0 %146
    %148 = vrot.lane.b32.xlu0 %v127, 65
    %v149 = vpop.permute.xlu0 %148
    %150 = vrot.lane.b32.xlu0 %v128, 65
    %v151 = vpop.permute.xlu0 %150
    %152 = vrot.lane.b32.xlu0 %v129, 65
    %v153 = vpop.permute.xlu0 %152
    %154 = vrot.lane.b32.xlu0 %v130, 65
    %v155 = vpop.permute.xlu0 %154
    %156 = vrot.lane.b32.xlu0 %v131, 65
    %v157 = vpop.permute.xlu0 %156
    %v166 = vsel %vm133, %v143, 0.0
    %v167 = vsel %vm133, %v145, 0.0
    %v168 = vsel %vm133, %v147, 0.0
    %v169 = vsel %vm133, %v149, 0.0
    %v170 = vsel %vm133, %v151, 0.0
    %v171 = vsel %vm133, %v153, 0.0
    %v172 = vsel %vm133, %v155, 0.0
    %v173 = vsel %vm133, %v157, 0.0
    %v174 = vsel %vm58, 1, 0
    %vm175 = vcmp.eq.s32.totalorder %v174, 1
    %176 = vrot.lane.b32.xlu0 %v124, 127
    %v177 = vpop.permute.xlu0 %176
    %178 = vrot.lane.b32.xlu0 %v125, 127
    %v179 = vpop.permute.xlu0 %178
    %180 = vrot.lane.b32.xlu0 %v126, 127
    %v181 = vpop.permute.xlu0 %180
    %182 = vrot.lane.b32.xlu0 %v127, 127
    %v183 = vpop.permute.xlu0 %182
    %184 = vrot.lane.b32.xlu0 %v128, 127
    %v185 = vpop.permute.xlu0 %184
    %186 = vrot.lane.b32.xlu0 %v129, 127
    %v187 = vpop.permute.xlu0 %186
    %188 = vrot.lane.b32.xlu0 %v130, 127
    %v189 = vpop.permute.xlu0 %188
    %190 = vrot.lane.b32.xlu0 %v131, 127
    %v191 = vpop.permute.xlu0 %190
    %v200 = vsel %vm175, %v177, 0.0
    %v201 = vsel %vm175, %v179, 0.0
    %v202 = vsel %vm175, %v181, 0.0
    %v203 = vsel %vm175, %v183, 0.0
    %v204 = vsel %vm175, %v185, 0.0
    %v205 = vsel %vm175, %v187, 0.0
    %v206 = vsel %vm175, %v189, 0.0
    %v207 = vsel %vm175, %v191, 0.0
    %209 = vset.pattern.permute.xlu0 0
    %210 = vperm.xlu0 %209, %v75
    %v211 = vpop.permute.xlu0 %210
    %214 = vset.pattern.permute.xlu0 0
    %215 = vperm.xlu0 %214, %v76
    %v216 = vpop.permute.xlu0 %215
    %219 = vset.pattern.permute.xlu0 0
    %220 = vperm.xlu0 %219, %v77
    %v221 = vpop.permute.xlu0 %220
    %224 = vset.pattern.permute.xlu0 0
    %225 = vperm.xlu0 %224, %v78
    %v226 = vpop.permute.xlu0 %225
    %229 = vset.pattern.permute.xlu0 0
    %230 = vperm.xlu0 %229, %v79
    %v231 = vpop.permute.xlu0 %230
    %234 = vset.pattern.permute.xlu0 0
    %235 = vperm.xlu0 %234, %v80
    %v236 = vpop.permute.xlu0 %235
    %239 = vset.pattern.permute.xlu0 0
    %240 = vperm.xlu0 %239, %v81
    %v241 = vpop.permute.xlu0 %240
    %244 = vset.pattern.permute.xlu0 0
    %245 = vperm.xlu0 %244, %v82
    %v246 = vpop.permute.xlu0 %245
    %vm248 = vcmask 523264
    %v250 = vsel %vm248, %v60, 0
    %v253 = vsel %vm248, %v62, 0
    %v256 = vsel %vm248, %v64, 0
    %v259 = vsel %vm248, %v66, 0
    %v262 = vsel %vm248, %v68, 0
    %v265 = vsel %vm248, %v70, 0
    %v268 = vsel %vm248, %v72, 0
    %v271 = vsel %vm248, %v74, 0
    %273 = vmatpush.msra.mxu0 %v42
    %274 = vmatpush.msra.mxu0 %v41
    %275 = vmatpush.msra.mxu0 %v40
    %276 = vmatpush.msra.mxu0 %v39
    %277 = vmatpush.msra.mxu0 %v38
    %278 = vmatpush.msra.mxu0 %v37
    %279 = vmatpush.msra.mxu0 %v36
    %280 = vmatpush.msra.mxu0 %v35
    %281 = vmatpush.msra.mxu0 %v173
    %282 = vmatpush.msra.mxu0 %v172
    %283 = vmatpush.msra.mxu0 %v171
    %284 = vmatpush.msra.mxu0 %v170
    %285 = vmatpush.msra.mxu0 %v169
    %286 = vmatpush.msra.mxu0 %v168
    %287 = vmatpush.msra.mxu0 %v167
    %288 = vmatpush.msra.mxu0 %v166
    %289 = vmatmul.f32.gmra.mxu0 %v59
    %v290 = vpop.f32.mrf.mxu0
    %v291 = vadd.f32 %v211, %v290
    %292 = vmatmul.f32.gmra.mxu0 %v61
    %v293 = vpop.f32.mrf.mxu0
    %v294 = vadd.f32 %v216, %v293
    %295 = vmatmul.f32.gmra.mxu0 %v63
    %v296 = vpop.f32.mrf.mxu0
    %v297 = vadd.f32 %v221, %v296
    %298 = vmatmul.f32.gmra.mxu0 %v65
    %v299 = vpop.f32.mrf.mxu0
    %v300 = vadd.f32 %v226, %v299
    %301 = vmatmul.f32.gmra.mxu0 %v67
    %v302 = vpop.f32.mrf.mxu0
    %v303 = vadd.f32 %v231, %v302
    %304 = vmatmul.f32.gmra.mxu0 %v69
    %v305 = vpop.f32.mrf.mxu0
    %v306 = vadd.f32 %v236, %v305
    %307 = vmatmul.f32.gmra.mxu0 %v71
    %v308 = vpop.f32.mrf.mxu0
    %v309 = vadd.f32 %v241, %v308
    %310 = vmatmul.f32.gmra.mxu0 %v73
    %v311 = vpop.f32.mrf.mxu0
    %v312 = vadd.f32 %v246, %v311
    %313 = vdwg.mxu0
    %314 = vmatpush.msra.mxu0 0.0
    %315 = vmatpush.msra.mxu0 0.0
    %316 = vmatpush.msra.mxu0 0.0
    %317 = vmatpush.msra.mxu0 0.0
    %318 = vmatpush.msra.mxu0 0.0
    %319 = vmatpush.msra.mxu0 0.0
    %320 = vmatpush.msra.mxu0 0.0
    %321 = vmatpush.msra.mxu0 0.0
    %322 = vmatpush.msra.mxu0 %v207
    %323 = vmatpush.msra.mxu0 %v206
    %324 = vmatpush.msra.mxu0 %v205
    %325 = vmatpush.msra.mxu0 %v204
    %326 = vmatpush.msra.mxu0 %v203
    %327 = vmatpush.msra.mxu0 %v202
    %328 = vmatpush.msra.mxu0 %v201
    %329 = vmatpush.msra.mxu0 %v200
    %330 = vmatmul.f32.gmra.mxu0 %v250
    %v331 = vpop.f32.mrf.mxu0
    %v332 = vadd.f32 %v291, %v331
    %333 = vmatmul.f32.gmra.mxu0 %v253
    %v334 = vpop.f32.mrf.mxu0
    %v335 = vadd.f32 %v294, %v334
    %336 = vmatmul.f32.gmra.mxu0 %v256
    %v337 = vpop.f32.mrf.mxu0
    %v338 = vadd.f32 %v297, %v337
    %339 = vmatmul.f32.gmra.mxu0 %v259
    %v340 = vpop.f32.mrf.mxu0
    %v341 = vadd.f32 %v300, %v340
    %342 = vmatmul.f32.gmra.mxu0 %v262
    %v343 = vpop.f32.mrf.mxu0
    %v344 = vadd.f32 %v303, %v343
    %345 = vmatmul.f32.gmra.mxu0 %v265
    %v346 = vpop.f32.mrf.mxu0
    %v347 = vadd.f32 %v306, %v346
    %348 = vmatmul.f32.gmra.mxu0 %v268
    %v349 = vpop.f32.mrf.mxu0
    %v350 = vadd.f32 %v309, %v349
    %351 = vmatmul.f32.gmra.mxu0 %v271
    %v352 = vpop.f32.mrf.mxu0
    %v353 = vadd.f32 %v312, %v352
    %354 = vdwg.mxu0
    %vm355 = vcmp.gt.f32.partialorder %v332, 0.0
    %vm356 = vcmp.gt.f32.partialorder %v335, 0.0
    %vm357 = vcmp.gt.f32.partialorder %v338, 0.0
    %vm358 = vcmp.gt.f32.partialorder %v341, 0.0
    %vm359 = vcmp.gt.f32.partialorder %v344, 0.0
    %vm360 = vcmp.gt.f32.partialorder %v347, 0.0
    %vm361 = vcmp.gt.f32.partialorder %v350, 0.0
    %vm362 = vcmp.gt.f32.partialorder %v353, 0.0
    %v363 = vmul.f32 %v332, 0.2
    %v364 = vmul.f32 %v335, 0.2
    %v365 = vmul.f32 %v338, 0.2
    %v366 = vmul.f32 %v341, 0.2
    %v367 = vmul.f32 %v344, 0.2
    %v368 = vmul.f32 %v347, 0.2
    %v369 = vmul.f32 %v350, 0.2
    %v370 = vmul.f32 %v353, 0.2
    %v371 = vsel %vm355, %v332, %v363
    %v372 = vsel %vm356, %v335, %v364
    %v373 = vsel %vm357, %v338, %v365
    %v374 = vsel %vm358, %v341, %v366
    %v375 = vsel %vm359, %v344, %v367
    %v376 = vsel %vm360, %v347, %v368
    %v377 = vsel %vm361, %v350, %v369
    %v378 = vsel %vm362, %v353, %v370
    %s379 = scalar_lea.vmem %s1, 128
    %v380 = vld [vmem:[%s379] sm:$0xff]
    %v381 = vld [vmem:[%s379 + $0x8] sm:$0xff]
    %v382 = vld [vmem:[%s379 + $0x10] sm:$0xff]
    %v383 = vld [vmem:[%s379 + $0x18] sm:$0xff]
    %v384 = vld [vmem:[%s379 + $0x20] sm:$0xff]
    %v385 = vld [vmem:[%s379 + $0x28] sm:$0xff]
    %v386 = vld [vmem:[%s379 + $0x30] sm:$0xff]
    %v387 = vld [vmem:[%s379 + $0x38] sm:$0xff]
    %v388 = vld [vmem:[%s379 + $0x40] sm:$0xff]
    %v389 = vld [vmem:[%s379 + $0x48] sm:$0xff]
    %v390 = vld [vmem:[%s379 + $0x50] sm:$0xff]
    %v391 = vld [vmem:[%s379 + $0x58] sm:$0xff]
    %v392 = vld [vmem:[%s379 + $0x60] sm:$0xff]
    %v393 = vld [vmem:[%s379 + $0x68] sm:$0xff]
    %v394 = vld [vmem:[%s379 + $0x70] sm:$0xff]
    %v395 = vld [vmem:[%s379 + $0x78] sm:$0xff]
    %s396 = scalar_lea.vmem %s2, 64
    %v397 = vld [vmem:[%s396] sm:$0xff]
    %v398 = vld [vmem:[%s396 + $0x8] sm:$0xff]
    %v399 = vld [vmem:[%s396 + $0x10] sm:$0xff]
    %v400 = vld [vmem:[%s396 + $0x18] sm:$0xff]
    %v401 = vld [vmem:[%s396 + $0x20] sm:$0xff]
    %v402 = vld [vmem:[%s396 + $0x28] sm:$0xff]
    %v403 = vld [vmem:[%s396 + $0x30] sm:$0xff]
    %v404 = vld [vmem:[%s396 + $0x38] sm:$0xff]
    %405 = vrot.lane.b32.xlu0 %v371, 64
    %v406 = vpop.permute.xlu0 %405
    %v407 = vsel %vm83, %v406, %v371
    %408 = vrot.lane.b32.xlu0 %v372, 64
    %v409 = vpop.permute.xlu0 %408
    %v410 = vsel %vm83, %v409, %v372
    %411 = vrot.lane.b32.xlu0 %v373, 64
    %v412 = vpop.permute.xlu0 %411
    %v413 = vsel %vm83, %v412, %v373
    %414 = vrot.lane.b32.xlu0 %v374, 64
    %v415 = vpop.permute.xlu0 %414
    %v416 = vsel %vm83, %v415, %v374
    %417 = vrot.lane.b32.xlu0 %v375, 64
    %v418 = vpop.permute.xlu0 %417
    %v419 = vsel %vm83, %v418, %v375
    %420 = vrot.lane.b32.xlu0 %v376, 64
    %v421 = vpop.permute.xlu0 %420
    %v422 = vsel %vm83, %v421, %v376
    %423 = vrot.lane.b32.xlu0 %v377, 64
    %v424 = vpop.permute.xlu0 %423
    %v425 = vsel %vm83, %v424, %v377
    %426 = vrot.lane.b32.xlu0 %v378, 64
    %v427 = vpop.permute.xlu0 %426
    %v428 = vsel %vm83, %v427, %v378
    %429 = vrot.lane.b32.xlu0 %v407, 64
    %v430 = vpop.permute.xlu0 %429
    %431 = vrot.lane.b32.xlu0 %v410, 64
    %v432 = vpop.permute.xlu0 %431
    %433 = vrot.lane.b32.xlu0 %v413, 64
    %v434 = vpop.permute.xlu0 %433
    %435 = vrot.lane.b32.xlu0 %v416, 64
    %v436 = vpop.permute.xlu0 %435
    %437 = vrot.lane.b32.xlu0 %v419, 64
    %v438 = vpop.permute.xlu0 %437
    %439 = vrot.lane.b32.xlu0 %v422, 64
    %v440 = vpop.permute.xlu0 %439
    %441 = vrot.lane.b32.xlu0 %v425, 64
    %v442 = vpop.permute.xlu0 %441
    %443 = vrot.lane.b32.xlu0 %v428, 64
    %v444 = vpop.permute.xlu0 %443
    %v445 = vsel %vm83, %v430, %v371
    %v446 = vsel %vm83, %v432, %v372
    %v447 = vsel %vm83, %v434, %v373
    %v448 = vsel %vm83, %v436, %v374
    %v449 = vsel %vm83, %v438, %v375
    %v450 = vsel %vm83, %v440, %v376
    %v451 = vsel %vm83, %v442, %v377
    %v452 = vsel %vm83, %v444, %v378
    %461 = vrot.lane.b32.xlu0 %v445, 65
    %v462 = vpop.permute.xlu0 %461
    %463 = vrot.lane.b32.xlu0 %v446, 65
    %v464 = vpop.permute.xlu0 %463
    %465 = vrot.lane.b32.xlu0 %v447, 65
    %v466 = vpop.permute.xlu0 %465
    %467 = vrot.lane.b32.xlu0 %v448, 65
    %v468 = vpop.permute.xlu0 %467
    %469 = vrot.lane.b32.xlu0 %v449, 65
    %v470 = vpop.permute.xlu0 %469
    %471 = vrot.lane.b32.xlu0 %v450, 65
    %v472 = vpop.permute.xlu0 %471
    %473 = vrot.lane.b32.xlu0 %v451, 65
    %v474 = vpop.permute.xlu0 %473
    %475 = vrot.lane.b32.xlu0 %v452, 65
    %v476 = vpop.permute.xlu0 %475
    %v485 = vsel %vm133, %v462, 0.0
    %v486 = vsel %vm133, %v464, 0.0
    %v487 = vsel %vm133, %v466, 0.0
    %v488 = vsel %vm133, %v468, 0.0
    %v489 = vsel %vm133, %v470, 0.0
    %v490 = vsel %vm133, %v472, 0.0
    %v491 = vsel %vm133, %v474, 0.0
    %v492 = vsel %vm133, %v476, 0.0
    %493 = vrot.lane.b32.xlu0 %v445, 127
    %v494 = vpop.permute.xlu0 %493
    %495 = vrot.lane.b32.xlu0 %v446, 127
    %v496 = vpop.permute.xlu0 %495
    %497 = vrot.lane.b32.xlu0 %v447, 127
    %v498 = vpop.permute.xlu0 %497
    %499 = vrot.lane.b32.xlu0 %v448, 127
    %v500 = vpop.permute.xlu0 %499
    %501 = vrot.lane.b32.xlu0 %v449, 127
    %v502 = vpop.permute.xlu0 %501
    %503 = vrot.lane.b32.xlu0 %v450, 127
    %v504 = vpop.permute.xlu0 %503
    %505 = vrot.lane.b32.xlu0 %v451, 127
    %v506 = vpop.permute.xlu0 %505
    %507 = vrot.lane.b32.xlu0 %v452, 127
    %v508 = vpop.permute.xlu0 %507
    %v517 = vsel %vm175, %v494, 0.0
    %v518 = vsel %vm175, %v496, 0.0
    %v519 = vsel %vm175, %v498, 0.0
    %v520 = vsel %vm175, %v500, 0.0
    %v521 = vsel %vm175, %v502, 0.0
    %v522 = vsel %vm175, %v504, 0.0
    %v523 = vsel %vm175, %v506, 0.0
    %v524 = vsel %vm175, %v508, 0.0
    %526 = vset.pattern.permute.xlu0 0
    %527 = vperm.xlu0 %526, %v397
    %v528 = vpop.permute.xlu0 %527
    %531 = vset.pattern.permute.xlu0 0
    %532 = vperm.xlu0 %531, %v398
    %v533 = vpop.permute.xlu0 %532
    %536 = vset.pattern.permute.xlu0 0
    %537 = vperm.xlu0 %536, %v399
    %v538 = vpop.permute.xlu0 %537
    %541 = vset.pattern.permute.xlu0 0
    %542 = vperm.xlu0 %541, %v400
    %v543 = vpop.permute.xlu0 %542
    %546 = vset.pattern.permute.xlu0 0
    %547 = vperm.xlu0 %546, %v401
    %v548 = vpop.permute.xlu0 %547
    %551 = vset.pattern.permute.xlu0 0
    %552 = vperm.xlu0 %551, %v402
    %v553 = vpop.permute.xlu0 %552
    %556 = vset.pattern.permute.xlu0 0
    %557 = vperm.xlu0 %556, %v403
    %v558 = vpop.permute.xlu0 %557
    %561 = vset.pattern.permute.xlu0 0
    %562 = vperm.xlu0 %561, %v404
    %v563 = vpop.permute.xlu0 %562
    %v566 = vsel %vm248, %v381, 0
    %v569 = vsel %vm248, %v383, 0
    %v572 = vsel %vm248, %v385, 0
    %v575 = vsel %vm248, %v387, 0
    %v578 = vsel %vm248, %v389, 0
    %v581 = vsel %vm248, %v391, 0
    %v584 = vsel %vm248, %v393, 0
    %v587 = vsel %vm248, %v395, 0
    %589 = vmatpush.msra.mxu0 %v378
    %590 = vmatpush.msra.mxu0 %v377
    %591 = vmatpush.msra.mxu0 %v376
    %592 = vmatpush.msra.mxu0 %v375
    %593 = vmatpush.msra.mxu0 %v374
    %594 = vmatpush.msra.mxu0 %v373
    %595 = vmatpush.msra.mxu0 %v372
    %596 = vmatpush.msra.mxu0 %v371
    %597 = vmatpush.msra.mxu0 %v492
    %598 = vmatpush.msra.mxu0 %v491
    %599 = vmatpush.msra.mxu0 %v490
    %600 = vmatpush.msra.mxu0 %v489
    %601 = vmatpush.msra.mxu0 %v488
    %602 = vmatpush.msra.mxu0 %v487
    %603 = vmatpush.msra.mxu0 %v486
    %604 = vmatpush.msra.mxu0 %v485
    %605 = vmatmul.f32.gmra.mxu0 %v380
    %v606 = vpop.f32.mrf.mxu0
    %v607 = vadd.f32 %v528, %v606
    %608 = vmatmul.f32.gmra.mxu0 %v382
    %v609 = vpop.f32.mrf.mxu0
    %v610 = vadd.f32 %v533, %v609
    %611 = vmatmul.f32.gmra.mxu0 %v384
    %v612 = vpop.f32.mrf.mxu0
    %v613 = vadd.f32 %v538, %v612
    %614 = vmatmul.f32.gmra.mxu0 %v386
    %v615 = vpop.f32.mrf.mxu0
    %v616 = vadd.f32 %v543, %v615
    %617 = vmatmul.f32.gmra.mxu0 %v388
    %v618 = vpop.f32.mrf.mxu0
    %v619 = vadd.f32 %v548, %v618
    %620 = vmatmul.f32.gmra.mxu0 %v390
    %v621 = vpop.f32.mrf.mxu0
    %v622 = vadd.f32 %v553, %v621
    %623 = vmatmul.f32.gmra.mxu0 %v392
    %v624 = vpop.f32.mrf.mxu0
    %v625 = vadd.f32 %v558, %v624
    %626 = vmatmul.f32.gmra.mxu0 %v394
    %v627 = vpop.f32.mrf.mxu0
    %v628 = vadd.f32 %v563, %v627
    %629 = vdwg.mxu0
    %630 = vmatpush.msra.mxu0 0.0
    %631 = vmatpush.msra.mxu0 0.0
    %632 = vmatpush.msra.mxu0 0.0
    %633 = vmatpush.msra.mxu0 0.0
    %634 = vmatpush.msra.mxu0 0.0
    %635 = vmatpush.msra.mxu0 0.0
    %636 = vmatpush.msra.mxu0 0.0
    %637 = vmatpush.msra.mxu0 0.0
    %638 = vmatpush.msra.mxu0 %v524
    %639 = vmatpush.msra.mxu0 %v523
    %640 = vmatpush.msra.mxu0 %v522
    %641 = vmatpush.msra.mxu0 %v521
    %642 = vmatpush.msra.mxu0 %v520
    %643 = vmatpush.msra.mxu0 %v519
    %644 = vmatpush.msra.mxu0 %v518
    %645 = vmatpush.msra.mxu0 %v517
    %646 = vmatmul.f32.gmra.mxu0 %v566
    %v647 = vpop.f32.mrf.mxu0
    %v648 = vadd.f32 %v607, %v647
    %649 = vmatmul.f32.gmra.mxu0 %v569
    %v650 = vpop.f32.mrf.mxu0
    %v651 = vadd.f32 %v610, %v650
    %652 = vmatmul.f32.gmra.mxu0 %v572
    %v653 = vpop.f32.mrf.mxu0
    %v654 = vadd.f32 %v613, %v653
    %655 = vmatmul.f32.gmra.mxu0 %v575
    %v656 = vpop.f32.mrf.mxu0
    %v657 = vadd.f32 %v616, %v656
    %658 = vmatmul.f32.gmra.mxu0 %v578
    %v659 = vpop.f32.mrf.mxu0
    %v660 = vadd.f32 %v619, %v659
    %661 = vmatmul.f32.gmra.mxu0 %v581
    %v662 = vpop.f32.mrf.mxu0
    %v663 = vadd.f32 %v622, %v662
    %664 = vmatmul.f32.gmra.mxu0 %v584
    %v665 = vpop.f32.mrf.mxu0
    %v666 = vadd.f32 %v625, %v665
    %667 = vmatmul.f32.gmra.mxu0 %v587
    %v668 = vpop.f32.mrf.mxu0
    %v669 = vadd.f32 %v628, %v668
    %670 = vdwg.mxu0
    %vm671 = vcmp.gt.f32.partialorder %v648, 0.0
    %vm672 = vcmp.gt.f32.partialorder %v651, 0.0
    %vm673 = vcmp.gt.f32.partialorder %v654, 0.0
    %vm674 = vcmp.gt.f32.partialorder %v657, 0.0
    %vm675 = vcmp.gt.f32.partialorder %v660, 0.0
    %vm676 = vcmp.gt.f32.partialorder %v663, 0.0
    %vm677 = vcmp.gt.f32.partialorder %v666, 0.0
    %vm678 = vcmp.gt.f32.partialorder %v669, 0.0
    %v679 = vmul.f32 %v648, 0.2
    %v680 = vmul.f32 %v651, 0.2
    %v681 = vmul.f32 %v654, 0.2
    %v682 = vmul.f32 %v657, 0.2
    %v683 = vmul.f32 %v660, 0.2
    %v684 = vmul.f32 %v663, 0.2
    %v685 = vmul.f32 %v666, 0.2
    %v686 = vmul.f32 %v669, 0.2
    %v687 = vsel %vm671, %v648, %v679
    %v688 = vsel %vm672, %v651, %v680
    %v689 = vsel %vm673, %v654, %v681
    %v690 = vsel %vm674, %v657, %v682
    %v691 = vsel %vm675, %v660, %v683
    %v692 = vsel %vm676, %v663, %v684
    %v693 = vsel %vm677, %v666, %v685
    %v694 = vsel %vm678, %v669, %v686
    %s695 = scalar_lea.vmem %s1, 256
    %v696 = vld [vmem:[%s695] sm:$0xff]
    %v697 = vld [vmem:[%s695 + $0x8] sm:$0xff]
    %v698 = vld [vmem:[%s695 + $0x10] sm:$0xff]
    %v699 = vld [vmem:[%s695 + $0x18] sm:$0xff]
    %v700 = vld [vmem:[%s695 + $0x20] sm:$0xff]
    %v701 = vld [vmem:[%s695 + $0x28] sm:$0xff]
    %v702 = vld [vmem:[%s695 + $0x30] sm:$0xff]
    %v703 = vld [vmem:[%s695 + $0x38] sm:$0xff]
    %v704 = vld [vmem:[%s695 + $0x40] sm:$0xff]
    %v705 = vld [vmem:[%s695 + $0x48] sm:$0xff]
    %v706 = vld [vmem:[%s695 + $0x50] sm:$0xff]
    %v707 = vld [vmem:[%s695 + $0x58] sm:$0xff]
    %v708 = vld [vmem:[%s695 + $0x60] sm:$0xff]
    %v709 = vld [vmem:[%s695 + $0x68] sm:$0xff]
    %v710 = vld [vmem:[%s695 + $0x70] sm:$0xff]
    %v711 = vld [vmem:[%s695 + $0x78] sm:$0xff]
    %s712 = scalar_lea.vmem %s2, 128
    %v713 = vld [vmem:[%s712] sm:$0xff]
    %v714 = vld [vmem:[%s712 + $0x8] sm:$0xff]
    %v715 = vld [vmem:[%s712 + $0x10] sm:$0xff]
    %v716 = vld [vmem:[%s712 + $0x18] sm:$0xff]
    %v717 = vld [vmem:[%s712 + $0x20] sm:$0xff]
    %v718 = vld [vmem:[%s712 + $0x28] sm:$0xff]
    %v719 = vld [vmem:[%s712 + $0x30] sm:$0xff]
    %v720 = vld [vmem:[%s712 + $0x38] sm:$0xff]
    %721 = vrot.lane.b32.xlu0 %v687, 64
    %v722 = vpop.permute.xlu0 %721
    %v723 = vsel %vm83, %v722, %v687
    %724 = vrot.lane.b32.xlu0 %v688, 64
    %v725 = vpop.permute.xlu0 %724
    %v726 = vsel %vm83, %v725, %v688
    %727 = vrot.lane.b32.xlu0 %v689, 64
    %v728 = vpop.permute.xlu0 %727
    %v729 = vsel %vm83, %v728, %v689
    %730 = vrot.lane.b32.xlu0 %v690, 64
    %v731 = vpop.permute.xlu0 %730
    %v732 = vsel %vm83, %v731, %v690
    %733 = vrot.lane.b32.xlu0 %v691, 64
    %v734 = vpop.permute.xlu0 %733
    %v735 = vsel %vm83, %v734, %v691
    %736 = vrot.lane.b32.xlu0 %v692, 64
    %v737 = vpop.permute.xlu0 %736
    %v738 = vsel %vm83, %v737, %v692
    %739 = vrot.lane.b32.xlu0 %v693, 64
    %v740 = vpop.permute.xlu0 %739
    %v741 = vsel %vm83, %v740, %v693
    %742 = vrot.lane.b32.xlu0 %v694, 64
    %v743 = vpop.permute.xlu0 %742
    %v744 = vsel %vm83, %v743, %v694
    %745 = vrot.lane.b32.xlu0 %v723, 64
    %v746 = vpop.permute.xlu0 %745
    %747 = vrot.lane.b32.xlu0 %v726, 64
    %v748 = vpop.permute.xlu0 %747
    %749 = vrot.lane.b32.xlu0 %v729, 64
    %v750 = vpop.permute.xlu0 %749
    %751 = vrot.lane.b32.xlu0 %v732, 64
    %v752 = vpop.permute.xlu0 %751
    %753 = vrot.lane.b32.xlu0 %v735, 64
    %v754 = vpop.permute.xlu0 %753
    %755 = vrot.lane.b32.xlu0 %v738, 64
    %v756 = vpop.permute.xlu0 %755
    %757 = vrot.lane.b32.xlu0 %v741, 64
    %v758 = vpop.permute.xlu0 %757
    %759 = vrot.lane.b32.xlu0 %v744, 64
    %v760 = vpop.permute.xlu0 %759
    %v761 = vsel %vm83, %v746, %v687
    %v762 = vsel %vm83, %v748, %v688
    %v763 = vsel %vm83, %v750, %v689
    %v764 = vsel %vm83, %v752, %v690
    %v765 = vsel %vm83, %v754, %v691
    %v766 = vsel %vm83, %v756, %v692
    %v767 = vsel %vm83, %v758, %v693
    %v768 = vsel %vm83, %v760, %v694
    %777 = vrot.lane.b32.xlu0 %v761, 65
    %v778 = vpop.permute.xlu0 %777
    %779 = vrot.lane.b32.xlu0 %v762, 65
    %v780 = vpop.permute.xlu0 %779
    %781 = vrot.lane.b32.xlu0 %v763, 65
    %v782 = vpop.permute.xlu0 %781
    %783 = vrot.lane.b32.xlu0 %v764, 65
    %v784 = vpop.permute.xlu0 %783
    %785 = vrot.lane.b32.xlu0 %v765, 65
    %v786 = vpop.permute.xlu0 %785
    %787 = vrot.lane.b32.xlu0 %v766, 65
    %v788 = vpop.permute.xlu0 %787
    %789 = vrot.lane.b32.xlu0 %v767, 65
    %v790 = vpop.permute.xlu0 %789
    %791 = vrot.lane.b32.xlu0 %v768, 65
    %v792 = vpop.permute.xlu0 %791
    %v801 = vsel %vm133, %v778, 0.0
    %v802 = vsel %vm133, %v780, 0.0
    %v803 = vsel %vm133, %v782, 0.0
    %v804 = vsel %vm133, %v784, 0.0
    %v805 = vsel %vm133, %v786, 0.0
    %v806 = vsel %vm133, %v788, 0.0
    %v807 = vsel %vm133, %v790, 0.0
    %v808 = vsel %vm133, %v792, 0.0
    %809 = vrot.lane.b32.xlu0 %v761, 127
    %v810 = vpop.permute.xlu0 %809
    %811 = vrot.lane.b32.xlu0 %v762, 127
    %v812 = vpop.permute.xlu0 %811
    %813 = vrot.lane.b32.xlu0 %v763, 127
    %v814 = vpop.permute.xlu0 %813
    %815 = vrot.lane.b32.xlu0 %v764, 127
    %v816 = vpop.permute.xlu0 %815
    %817 = vrot.lane.b32.xlu0 %v765, 127
    %v818 = vpop.permute.xlu0 %817
    %819 = vrot.lane.b32.xlu0 %v766, 127
    %v820 = vpop.permute.xlu0 %819
    %821 = vrot.lane.b32.xlu0 %v767, 127
    %v822 = vpop.permute.xlu0 %821
    %823 = vrot.lane.b32.xlu0 %v768, 127
    %v824 = vpop.permute.xlu0 %823
    %v833 = vsel %vm175, %v810, 0.0
    %v834 = vsel %vm175, %v812, 0.0
    %v835 = vsel %vm175, %v814, 0.0
    %v836 = vsel %vm175, %v816, 0.0
    %v837 = vsel %vm175, %v818, 0.0
    %v838 = vsel %vm175, %v820, 0.0
    %v839 = vsel %vm175, %v822, 0.0
    %v840 = vsel %vm175, %v824, 0.0
    %842 = vset.pattern.permute.xlu0 0
    %843 = vperm.xlu0 %842, %v713
    %v844 = vpop.permute.xlu0 %843
    %847 = vset.pattern.permute.xlu0 0
    %848 = vperm.xlu0 %847, %v714
    %v849 = vpop.permute.xlu0 %848
    %852 = vset.pattern.permute.xlu0 0
    %853 = vperm.xlu0 %852, %v715
    %v854 = vpop.permute.xlu0 %853
    %857 = vset.pattern.permute.xlu0 0
    %858 = vperm.xlu0 %857, %v716
    %v859 = vpop.permute.xlu0 %858
    %862 = vset.pattern.permute.xlu0 0
    %863 = vperm.xlu0 %862, %v717
    %v864 = vpop.permute.xlu0 %863
    %867 = vset.pattern.permute.xlu0 0
    %868 = vperm.xlu0 %867, %v718
    %v869 = vpop.permute.xlu0 %868
    %872 = vset.pattern.permute.xlu0 0
    %873 = vperm.xlu0 %872, %v719
    %v874 = vpop.permute.xlu0 %873
    %877 = vset.pattern.permute.xlu0 0
    %878 = vperm.xlu0 %877, %v720
    %v879 = vpop.permute.xlu0 %878
    %v882 = vsel %vm248, %v697, 0
    %v885 = vsel %vm248, %v699, 0
    %v888 = vsel %vm248, %v701, 0
    %v891 = vsel %vm248, %v703, 0
    %v894 = vsel %vm248, %v705, 0
    %v897 = vsel %vm248, %v707, 0
    %v900 = vsel %vm248, %v709, 0
    %v903 = vsel %vm248, %v711, 0
    %905 = vmatpush.msra.mxu0 %v694
    %906 = vmatpush.msra.mxu0 %v693
    %907 = vmatpush.msra.mxu0 %v692
    %908 = vmatpush.msra.mxu0 %v691
    %909 = vmatpush.msra.mxu0 %v690
    %910 = vmatpush.msra.mxu0 %v689
    %911 = vmatpush.msra.mxu0 %v688
    %912 = vmatpush.msra.mxu0 %v687
    %913 = vmatpush.msra.mxu0 %v808
    %914 = vmatpush.msra.mxu0 %v807
    %915 = vmatpush.msra.mxu0 %v806
    %916 = vmatpush.msra.mxu0 %v805
    %917 = vmatpush.msra.mxu0 %v804
    %918 = vmatpush.msra.mxu0 %v803
    %919 = vmatpush.msra.mxu0 %v802
    %920 = vmatpush.msra.mxu0 %v801
    %921 = vmatmul.f32.gmra.mxu0 %v696
    %v922 = vpop.f32.mrf.mxu0
    %v923 = vadd.f32 %v844, %v922
    %924 = vmatmul.f32.gmra.mxu0 %v698
    %v925 = vpop.f32.mrf.mxu0
    %v926 = vadd.f32 %v849, %v925
    %927 = vmatmul.f32.gmra.mxu0 %v700
    %v928 = vpop.f32.mrf.mxu0
    %v929 = vadd.f32 %v854, %v928
    %930 = vmatmul.f32.gmra.mxu0 %v702
    %v931 = vpop.f32.mrf.mxu0
    %v932 = vadd.f32 %v859, %v931
    %933 = vmatmul.f32.gmra.mxu0 %v704
    %v934 = vpop.f32.mrf.mxu0
    %v935 = vadd.f32 %v864, %v934
    %936 = vmatmul.f32.gmra.mxu0 %v706
    %v937 = vpop.f32.mrf.mxu0
    %v938 = vadd.f32 %v869, %v937
    %939 = vmatmul.f32.gmra.mxu0 %v708
    %v940 = vpop.f32.mrf.mxu0
    %v941 = vadd.f32 %v874, %v940
    %942 = vmatmul.f32.gmra.mxu0 %v710
    %v943 = vpop.f32.mrf.mxu0
    %v944 = vadd.f32 %v879, %v943
    %945 = vdwg.mxu0
    %946 = vmatpush.msra.mxu0 0.0
    %947 = vmatpush.msra.mxu0 0.0
    %948 = vmatpush.msra.mxu0 0.0
    %949 = vmatpush.msra.mxu0 0.0
    %950 = vmatpush.msra.mxu0 0.0
    %951 = vmatpush.msra.mxu0 0.0
    %952 = vmatpush.msra.mxu0 0.0
    %953 = vmatpush.msra.mxu0 0.0
    %954 = vmatpush.msra.mxu0 %v840
    %955 = vmatpush.msra.mxu0 %v839
    %956 = vmatpush.msra.mxu0 %v838
    %957 = vmatpush.msra.mxu0 %v837
    %958 = vmatpush.msra.mxu0 %v836
    %959 = vmatpush.msra.mxu0 %v835
    %960 = vmatpush.msra.mxu0 %v834
    %961 = vmatpush.msra.mxu0 %v833
    %962 = vmatmul.f32.gmra.mxu0 %v882
    %v963 = vpop.f32.mrf.mxu0
    %v964 = vadd.f32 %v923, %v963
    %965 = vmatmul.f32.gmra.mxu0 %v885
    %v966 = vpop.f32.mrf.mxu0
    %v967 = vadd.f32 %v926, %v966
    %968 = vmatmul.f32.gmra.mxu0 %v888
    %v969 = vpop.f32.mrf.mxu0
    %v970 = vadd.f32 %v929, %v969
    %971 = vmatmul.f32.gmra.mxu0 %v891
    %v972 = vpop.f32.mrf.mxu0
    %v973 = vadd.f32 %v932, %v972
    %974 = vmatmul.f32.gmra.mxu0 %v894
    %v975 = vpop.f32.mrf.mxu0
    %v976 = vadd.f32 %v935, %v975
    %977 = vmatmul.f32.gmra.mxu0 %v897
    %v978 = vpop.f32.mrf.mxu0
    %v979 = vadd.f32 %v938, %v978
    %980 = vmatmul.f32.gmra.mxu0 %v900
    %v981 = vpop.f32.mrf.mxu0
    %v982 = vadd.f32 %v941, %v981
    %983 = vmatmul.f32.gmra.mxu0 %v903
    %v984 = vpop.f32.mrf.mxu0
    %v985 = vadd.f32 %v944, %v984
    %986 = vdwg.mxu0
    %vm987 = vcmp.gt.f32.partialorder %v964, 0.0
    %vm988 = vcmp.gt.f32.partialorder %v967, 0.0
    %vm989 = vcmp.gt.f32.partialorder %v970, 0.0
    %vm990 = vcmp.gt.f32.partialorder %v973, 0.0
    %vm991 = vcmp.gt.f32.partialorder %v976, 0.0
    %vm992 = vcmp.gt.f32.partialorder %v979, 0.0
    %vm993 = vcmp.gt.f32.partialorder %v982, 0.0
    %vm994 = vcmp.gt.f32.partialorder %v985, 0.0
    %v995 = vmul.f32 %v964, 0.2
    %v996 = vmul.f32 %v967, 0.2
    %v997 = vmul.f32 %v970, 0.2
    %v998 = vmul.f32 %v973, 0.2
    %v999 = vmul.f32 %v976, 0.2
    %v1000 = vmul.f32 %v979, 0.2
    %v1001 = vmul.f32 %v982, 0.2
    %v1002 = vmul.f32 %v985, 0.2
    %v1003 = vsel %vm987, %v964, %v995
    %v1004 = vsel %vm988, %v967, %v996
    %v1005 = vsel %vm989, %v970, %v997
    %v1006 = vsel %vm990, %v973, %v998
    %v1007 = vsel %vm991, %v976, %v999
    %v1008 = vsel %vm992, %v979, %v1000
    %v1009 = vsel %vm993, %v982, %v1001
    %v1010 = vsel %vm994, %v985, %v1002
    %s1011 = scalar_lea.vmem %s1, 384
    %v1012 = vld [vmem:[%s1011] sm:$0xff]
    %v1013 = vld [vmem:[%s1011 + $0x8] sm:$0xff]
    %v1014 = vld [vmem:[%s1011 + $0x10] sm:$0xff]
    %v1015 = vld [vmem:[%s1011 + $0x18] sm:$0xff]
    %v1016 = vld [vmem:[%s1011 + $0x20] sm:$0xff]
    %v1017 = vld [vmem:[%s1011 + $0x28] sm:$0xff]
    %v1018 = vld [vmem:[%s1011 + $0x30] sm:$0xff]
    %v1019 = vld [vmem:[%s1011 + $0x38] sm:$0xff]
    %v1020 = vld [vmem:[%s1011 + $0x40] sm:$0xff]
    %v1021 = vld [vmem:[%s1011 + $0x48] sm:$0xff]
    %v1022 = vld [vmem:[%s1011 + $0x50] sm:$0xff]
    %v1023 = vld [vmem:[%s1011 + $0x58] sm:$0xff]
    %v1024 = vld [vmem:[%s1011 + $0x60] sm:$0xff]
    %v1025 = vld [vmem:[%s1011 + $0x68] sm:$0xff]
    %v1026 = vld [vmem:[%s1011 + $0x70] sm:$0xff]
    %v1027 = vld [vmem:[%s1011 + $0x78] sm:$0xff]
    %s1028 = scalar_lea.vmem %s2, 192
    %v1029 = vld [vmem:[%s1028] sm:$0xff]
    %v1030 = vld [vmem:[%s1028 + $0x8] sm:$0xff]
    %v1031 = vld [vmem:[%s1028 + $0x10] sm:$0xff]
    %v1032 = vld [vmem:[%s1028 + $0x18] sm:$0xff]
    %v1033 = vld [vmem:[%s1028 + $0x20] sm:$0xff]
    %v1034 = vld [vmem:[%s1028 + $0x28] sm:$0xff]
    %v1035 = vld [vmem:[%s1028 + $0x30] sm:$0xff]
    %v1036 = vld [vmem:[%s1028 + $0x38] sm:$0xff]
    %1037 = vrot.lane.b32.xlu0 %v1003, 64
    %v1038 = vpop.permute.xlu0 %1037
    %v1039 = vsel %vm83, %v1038, %v1003
    %1040 = vrot.lane.b32.xlu0 %v1004, 64
    %v1041 = vpop.permute.xlu0 %1040
    %v1042 = vsel %vm83, %v1041, %v1004
    %1043 = vrot.lane.b32.xlu0 %v1005, 64
    %v1044 = vpop.permute.xlu0 %1043
    %v1045 = vsel %vm83, %v1044, %v1005
    %1046 = vrot.lane.b32.xlu0 %v1006, 64
    %v1047 = vpop.permute.xlu0 %1046
    %v1048 = vsel %vm83, %v1047, %v1006
    %1049 = vrot.lane.b32.xlu0 %v1007, 64
    %v1050 = vpop.permute.xlu0 %1049
    %v1051 = vsel %vm83, %v1050, %v1007
    %1052 = vrot.lane.b32.xlu0 %v1008, 64
    %v1053 = vpop.permute.xlu0 %1052
    %v1054 = vsel %vm83, %v1053, %v1008
    %1055 = vrot.lane.b32.xlu0 %v1009, 64
    %v1056 = vpop.permute.xlu0 %1055
    %v1057 = vsel %vm83, %v1056, %v1009
    %1058 = vrot.lane.b32.xlu0 %v1010, 64
    %v1059 = vpop.permute.xlu0 %1058
    %v1060 = vsel %vm83, %v1059, %v1010
    %1061 = vrot.lane.b32.xlu0 %v1039, 64
    %v1062 = vpop.permute.xlu0 %1061
    %1063 = vrot.lane.b32.xlu0 %v1042, 64
    %v1064 = vpop.permute.xlu0 %1063
    %1065 = vrot.lane.b32.xlu0 %v1045, 64
    %v1066 = vpop.permute.xlu0 %1065
    %1067 = vrot.lane.b32.xlu0 %v1048, 64
    %v1068 = vpop.permute.xlu0 %1067
    %1069 = vrot.lane.b32.xlu0 %v1051, 64
    %v1070 = vpop.permute.xlu0 %1069
    %1071 = vrot.lane.b32.xlu0 %v1054, 64
    %v1072 = vpop.permute.xlu0 %1071
    %1073 = vrot.lane.b32.xlu0 %v1057, 64
    %v1074 = vpop.permute.xlu0 %1073
    %1075 = vrot.lane.b32.xlu0 %v1060, 64
    %v1076 = vpop.permute.xlu0 %1075
    %v1077 = vsel %vm83, %v1062, %v1003
    %v1078 = vsel %vm83, %v1064, %v1004
    %v1079 = vsel %vm83, %v1066, %v1005
    %v1080 = vsel %vm83, %v1068, %v1006
    %v1081 = vsel %vm83, %v1070, %v1007
    %v1082 = vsel %vm83, %v1072, %v1008
    %v1083 = vsel %vm83, %v1074, %v1009
    %v1084 = vsel %vm83, %v1076, %v1010
    %1093 = vrot.lane.b32.xlu0 %v1077, 65
    %v1094 = vpop.permute.xlu0 %1093
    %1095 = vrot.lane.b32.xlu0 %v1078, 65
    %v1096 = vpop.permute.xlu0 %1095
    %1097 = vrot.lane.b32.xlu0 %v1079, 65
    %v1098 = vpop.permute.xlu0 %1097
    %1099 = vrot.lane.b32.xlu0 %v1080, 65
    %v1100 = vpop.permute.xlu0 %1099
    %1101 = vrot.lane.b32.xlu0 %v1081, 65
    %v1102 = vpop.permute.xlu0 %1101
    %1103 = vrot.lane.b32.xlu0 %v1082, 65
    %v1104 = vpop.permute.xlu0 %1103
    %1105 = vrot.lane.b32.xlu0 %v1083, 65
    %v1106 = vpop.permute.xlu0 %1105
    %1107 = vrot.lane.b32.xlu0 %v1084, 65
    %v1108 = vpop.permute.xlu0 %1107
    %v1117 = vsel %vm133, %v1094, 0.0
    %v1118 = vsel %vm133, %v1096, 0.0
    %v1119 = vsel %vm133, %v1098, 0.0
    %v1120 = vsel %vm133, %v1100, 0.0
    %v1121 = vsel %vm133, %v1102, 0.0
    %v1122 = vsel %vm133, %v1104, 0.0
    %v1123 = vsel %vm133, %v1106, 0.0
    %v1124 = vsel %vm133, %v1108, 0.0
    %1125 = vrot.lane.b32.xlu0 %v1077, 127
    %v1126 = vpop.permute.xlu0 %1125
    %1127 = vrot.lane.b32.xlu0 %v1078, 127
    %v1128 = vpop.permute.xlu0 %1127
    %1129 = vrot.lane.b32.xlu0 %v1079, 127
    %v1130 = vpop.permute.xlu0 %1129
    %1131 = vrot.lane.b32.xlu0 %v1080, 127
    %v1132 = vpop.permute.xlu0 %1131
    %1133 = vrot.lane.b32.xlu0 %v1081, 127
    %v1134 = vpop.permute.xlu0 %1133
    %1135 = vrot.lane.b32.xlu0 %v1082, 127
    %v1136 = vpop.permute.xlu0 %1135
    %1137 = vrot.lane.b32.xlu0 %v1083, 127
    %v1138 = vpop.permute.xlu0 %1137
    %1139 = vrot.lane.b32.xlu0 %v1084, 127
    %v1140 = vpop.permute.xlu0 %1139
    %v1149 = vsel %vm175, %v1126, 0.0
    %v1150 = vsel %vm175, %v1128, 0.0
    %v1151 = vsel %vm175, %v1130, 0.0
    %v1152 = vsel %vm175, %v1132, 0.0
    %v1153 = vsel %vm175, %v1134, 0.0
    %v1154 = vsel %vm175, %v1136, 0.0
    %v1155 = vsel %vm175, %v1138, 0.0
    %v1156 = vsel %vm175, %v1140, 0.0
    %1158 = vset.pattern.permute.xlu0 0
    %1159 = vperm.xlu0 %1158, %v1029
    %v1160 = vpop.permute.xlu0 %1159
    %1163 = vset.pattern.permute.xlu0 0
    %1164 = vperm.xlu0 %1163, %v1030
    %v1165 = vpop.permute.xlu0 %1164
    %1168 = vset.pattern.permute.xlu0 0
    %1169 = vperm.xlu0 %1168, %v1031
    %v1170 = vpop.permute.xlu0 %1169
    %1173 = vset.pattern.permute.xlu0 0
    %1174 = vperm.xlu0 %1173, %v1032
    %v1175 = vpop.permute.xlu0 %1174
    %1178 = vset.pattern.permute.xlu0 0
    %1179 = vperm.xlu0 %1178, %v1033
    %v1180 = vpop.permute.xlu0 %1179
    %1183 = vset.pattern.permute.xlu0 0
    %1184 = vperm.xlu0 %1183, %v1034
    %v1185 = vpop.permute.xlu0 %1184
    %1188 = vset.pattern.permute.xlu0 0
    %1189 = vperm.xlu0 %1188, %v1035
    %v1190 = vpop.permute.xlu0 %1189
    %1193 = vset.pattern.permute.xlu0 0
    %1194 = vperm.xlu0 %1193, %v1036
    %v1195 = vpop.permute.xlu0 %1194
    %v1198 = vsel %vm248, %v1013, 0
    %v1201 = vsel %vm248, %v1015, 0
    %v1204 = vsel %vm248, %v1017, 0
    %v1207 = vsel %vm248, %v1019, 0
    %v1210 = vsel %vm248, %v1021, 0
    %v1213 = vsel %vm248, %v1023, 0
    %v1216 = vsel %vm248, %v1025, 0
    %v1219 = vsel %vm248, %v1027, 0
    %1221 = vmatpush.msra.mxu0 %v1010
    %1222 = vmatpush.msra.mxu0 %v1009
    %1223 = vmatpush.msra.mxu0 %v1008
    %1224 = vmatpush.msra.mxu0 %v1007
    %1225 = vmatpush.msra.mxu0 %v1006
    %1226 = vmatpush.msra.mxu0 %v1005
    %1227 = vmatpush.msra.mxu0 %v1004
    %1228 = vmatpush.msra.mxu0 %v1003
    %1229 = vmatpush.msra.mxu0 %v1124
    %1230 = vmatpush.msra.mxu0 %v1123
    %1231 = vmatpush.msra.mxu0 %v1122
    %1232 = vmatpush.msra.mxu0 %v1121
    %1233 = vmatpush.msra.mxu0 %v1120
    %1234 = vmatpush.msra.mxu0 %v1119
    %1235 = vmatpush.msra.mxu0 %v1118
    %1236 = vmatpush.msra.mxu0 %v1117
    %1237 = vmatmul.f32.gmra.mxu0 %v1012
    %v1238 = vpop.f32.mrf.mxu0
    %v1239 = vadd.f32 %v1160, %v1238
    %1240 = vmatmul.f32.gmra.mxu0 %v1014
    %v1241 = vpop.f32.mrf.mxu0
    %v1242 = vadd.f32 %v1165, %v1241
    %1243 = vmatmul.f32.gmra.mxu0 %v1016
    %v1244 = vpop.f32.mrf.mxu0
    %v1245 = vadd.f32 %v1170, %v1244
    %1246 = vmatmul.f32.gmra.mxu0 %v1018
    %v1247 = vpop.f32.mrf.mxu0
    %v1248 = vadd.f32 %v1175, %v1247
    %1249 = vmatmul.f32.gmra.mxu0 %v1020
    %v1250 = vpop.f32.mrf.mxu0
    %v1251 = vadd.f32 %v1180, %v1250
    %1252 = vmatmul.f32.gmra.mxu0 %v1022
    %v1253 = vpop.f32.mrf.mxu0
    %v1254 = vadd.f32 %v1185, %v1253
    %1255 = vmatmul.f32.gmra.mxu0 %v1024
    %v1256 = vpop.f32.mrf.mxu0
    %v1257 = vadd.f32 %v1190, %v1256
    %1258 = vmatmul.f32.gmra.mxu0 %v1026
    %v1259 = vpop.f32.mrf.mxu0
    %v1260 = vadd.f32 %v1195, %v1259
    %1261 = vdwg.mxu0
    %1262 = vmatpush.msra.mxu0 0.0
    %1263 = vmatpush.msra.mxu0 0.0
    %1264 = vmatpush.msra.mxu0 0.0
    %1265 = vmatpush.msra.mxu0 0.0
    %1266 = vmatpush.msra.mxu0 0.0
    %1267 = vmatpush.msra.mxu0 0.0
    %1268 = vmatpush.msra.mxu0 0.0
    %1269 = vmatpush.msra.mxu0 0.0
    %1270 = vmatpush.msra.mxu0 %v1156
    %1271 = vmatpush.msra.mxu0 %v1155
    %1272 = vmatpush.msra.mxu0 %v1154
    %1273 = vmatpush.msra.mxu0 %v1153
    %1274 = vmatpush.msra.mxu0 %v1152
    %1275 = vmatpush.msra.mxu0 %v1151
    %1276 = vmatpush.msra.mxu0 %v1150
    %1277 = vmatpush.msra.mxu0 %v1149
    %1278 = vmatmul.f32.gmra.mxu0 %v1198
    %v1279 = vpop.f32.mrf.mxu0
    %v1280 = vadd.f32 %v1239, %v1279
    %1281 = vmatmul.f32.gmra.mxu0 %v1201
    %v1282 = vpop.f32.mrf.mxu0
    %v1283 = vadd.f32 %v1242, %v1282
    %1284 = vmatmul.f32.gmra.mxu0 %v1204
    %v1285 = vpop.f32.mrf.mxu0
    %v1286 = vadd.f32 %v1245, %v1285
    %1287 = vmatmul.f32.gmra.mxu0 %v1207
    %v1288 = vpop.f32.mrf.mxu0
    %v1289 = vadd.f32 %v1248, %v1288
    %1290 = vmatmul.f32.gmra.mxu0 %v1210
    %v1291 = vpop.f32.mrf.mxu0
    %v1292 = vadd.f32 %v1251, %v1291
    %1293 = vmatmul.f32.gmra.mxu0 %v1213
    %v1294 = vpop.f32.mrf.mxu0
    %v1295 = vadd.f32 %v1254, %v1294
    %1296 = vmatmul.f32.gmra.mxu0 %v1216
    %v1297 = vpop.f32.mrf.mxu0
    %v1298 = vadd.f32 %v1257, %v1297
    %1299 = vmatmul.f32.gmra.mxu0 %v1219
    %v1300 = vpop.f32.mrf.mxu0
    %v1301 = vadd.f32 %v1260, %v1300
    %1302 = vdwg.mxu0
    %v1303 = vld [vmem:[%s3] sm:$0xff]
    %v1304 = vld [vmem:[%s3 + $0x8] sm:$0xff]
    %v1305 = vld [vmem:[%s3 + $0x10] sm:$0xff]
    %v1306 = vld [vmem:[%s3 + $0x18] sm:$0xff]
    %v1307 = vld [vmem:[%s3 + $0x20] sm:$0xff]
    %v1308 = vld [vmem:[%s3 + $0x28] sm:$0xff]
    %v1309 = vld [vmem:[%s3 + $0x30] sm:$0xff]
    %v1310 = vld [vmem:[%s3 + $0x38] sm:$0xff]
    %v1311 = vld [vmem:[%s3 + $0x40] sm:$0xff]
    %v1312 = vld [vmem:[%s3 + $0x48] sm:$0xff]
    %v1313 = vld [vmem:[%s3 + $0x50] sm:$0xff]
    %v1314 = vld [vmem:[%s3 + $0x58] sm:$0xff]
    %v1315 = vld [vmem:[%s3 + $0x60] sm:$0xff]
    %v1316 = vld [vmem:[%s3 + $0x68] sm:$0xff]
    %v1317 = vld [vmem:[%s3 + $0x70] sm:$0xff]
    %v1318 = vld [vmem:[%s3 + $0x78] sm:$0xff]
    %v1319 = vld [vmem:[%s4] sm:$0xff]
    %v1320 = vld [vmem:[%s4 + $0x8] sm:$0xff]
    %v1321 = vld [vmem:[%s4 + $0x10] sm:$0xff]
    %v1322 = vld [vmem:[%s4 + $0x18] sm:$0xff]
    %v1323 = vld [vmem:[%s4 + $0x20] sm:$0xff]
    %v1324 = vld [vmem:[%s4 + $0x28] sm:$0xff]
    %v1325 = vld [vmem:[%s4 + $0x30] sm:$0xff]
    %v1326 = vld [vmem:[%s4 + $0x38] sm:$0xff]
    %v1327 = vld [vmem:[%s4 + $0x40] sm:$0xff]
    %v1328 = vld [vmem:[%s4 + $0x48] sm:$0xff]
    %v1329 = vld [vmem:[%s4 + $0x50] sm:$0xff]
    %v1330 = vld [vmem:[%s4 + $0x58] sm:$0xff]
    %v1331 = vld [vmem:[%s4 + $0x60] sm:$0xff]
    %v1332 = vld [vmem:[%s4 + $0x68] sm:$0xff]
    %v1333 = vld [vmem:[%s4 + $0x70] sm:$0xff]
    %v1334 = vld [vmem:[%s4 + $0x78] sm:$0xff]
    %1336 = vset.pattern.permute.xlu0 0
    %1337 = vperm.xlu0 %1336, %v1319
    %v1338 = vpop.permute.xlu0 %1337
    %1341 = vset.pattern.permute.xlu0 0
    %1342 = vperm.xlu0 %1341, %v1320
    %v1343 = vpop.permute.xlu0 %1342
    %1346 = vset.pattern.permute.xlu0 0
    %1347 = vperm.xlu0 %1346, %v1321
    %v1348 = vpop.permute.xlu0 %1347
    %1351 = vset.pattern.permute.xlu0 0
    %1352 = vperm.xlu0 %1351, %v1322
    %v1353 = vpop.permute.xlu0 %1352
    %1356 = vset.pattern.permute.xlu0 0
    %1357 = vperm.xlu0 %1356, %v1323
    %v1358 = vpop.permute.xlu0 %1357
    %1361 = vset.pattern.permute.xlu0 0
    %1362 = vperm.xlu0 %1361, %v1324
    %v1363 = vpop.permute.xlu0 %1362
    %1366 = vset.pattern.permute.xlu0 0
    %1367 = vperm.xlu0 %1366, %v1325
    %v1368 = vpop.permute.xlu0 %1367
    %1371 = vset.pattern.permute.xlu0 0
    %1372 = vperm.xlu0 %1371, %v1326
    %v1373 = vpop.permute.xlu0 %1372
    %1376 = vset.pattern.permute.xlu0 0
    %1377 = vperm.xlu0 %1376, %v1327
    %v1378 = vpop.permute.xlu0 %1377
    %1381 = vset.pattern.permute.xlu0 0
    %1382 = vperm.xlu0 %1381, %v1328
    %v1383 = vpop.permute.xlu0 %1382
    %1386 = vset.pattern.permute.xlu0 0
    %1387 = vperm.xlu0 %1386, %v1329
    %v1388 = vpop.permute.xlu0 %1387
    %1391 = vset.pattern.permute.xlu0 0
    %1392 = vperm.xlu0 %1391, %v1330
    %v1393 = vpop.permute.xlu0 %1392
    %1396 = vset.pattern.permute.xlu0 0
    %1397 = vperm.xlu0 %1396, %v1331
    %v1398 = vpop.permute.xlu0 %1397
    %1401 = vset.pattern.permute.xlu0 0
    %1402 = vperm.xlu0 %1401, %v1332
    %v1403 = vpop.permute.xlu0 %1402
    %1406 = vset.pattern.permute.xlu0 0
    %1407 = vperm.xlu0 %1406, %v1333
    %v1408 = vpop.permute.xlu0 %1407
    %1411 = vset.pattern.permute.xlu0 0
    %1412 = vperm.xlu0 %1411, %v1334
    %v1413 = vpop.permute.xlu0 %1412
    %v1416 = vsel %vm248, %v1303, 0
    %v1419 = vsel %vm248, %v1304, 0
    %v1422 = vsel %vm248, %v1305, 0
    %v1425 = vsel %vm248, %v1306, 0
    %v1428 = vsel %vm248, %v1307, 0
    %v1431 = vsel %vm248, %v1308, 0
    %v1434 = vsel %vm248, %v1309, 0
    %v1437 = vsel %vm248, %v1310, 0
    %v1440 = vsel %vm248, %v1311, 0
    %v1443 = vsel %vm248, %v1312, 0
    %v1446 = vsel %vm248, %v1313, 0
    %v1449 = vsel %vm248, %v1314, 0
    %v1452 = vsel %vm248, %v1315, 0
    %v1455 = vsel %vm248, %v1316, 0
    %v1458 = vsel %vm248, %v1317, 0
    %v1461 = vsel %vm248, %v1318, 0
    %1463 = vmatpush.msra.mxu0 0.0
    %1464 = vmatpush.msra.mxu0 0.0
    %1465 = vmatpush.msra.mxu0 0.0
    %1466 = vmatpush.msra.mxu0 0.0
    %1467 = vmatpush.msra.mxu0 0.0
    %1468 = vmatpush.msra.mxu0 0.0
    %1469 = vmatpush.msra.mxu0 0.0
    %1470 = vmatpush.msra.mxu0 0.0
    %1471 = vmatpush.msra.mxu0 %v1301
    %1472 = vmatpush.msra.mxu0 %v1298
    %1473 = vmatpush.msra.mxu0 %v1295
    %1474 = vmatpush.msra.mxu0 %v1292
    %1475 = vmatpush.msra.mxu0 %v1289
    %1476 = vmatpush.msra.mxu0 %v1286
    %1477 = vmatpush.msra.mxu0 %v1283
    %1478 = vmatpush.msra.mxu0 %v1280
    %1479 = vmatmul.f32.gmra.mxu0 %v1416
    %v1480 = vpop.f32.mrf.mxu0
    %v1481 = vadd.f32 %v1338, %v1480
    %1482 = vmatmul.f32.gmra.mxu0 %v1419
    %v1483 = vpop.f32.mrf.mxu0
    %v1484 = vadd.f32 %v1343, %v1483
    %1485 = vmatmul.f32.gmra.mxu0 %v1422
    %v1486 = vpop.f32.mrf.mxu0
    %v1487 = vadd.f32 %v1348, %v1486
    %1488 = vmatmul.f32.gmra.mxu0 %v1425
    %v1489 = vpop.f32.mrf.mxu0
    %v1490 = vadd.f32 %v1353, %v1489
    %1491 = vmatmul.f32.gmra.mxu0 %v1428
    %v1492 = vpop.f32.mrf.mxu0
    %v1493 = vadd.f32 %v1358, %v1492
    %1494 = vmatmul.f32.gmra.mxu0 %v1431
    %v1495 = vpop.f32.mrf.mxu0
    %v1496 = vadd.f32 %v1363, %v1495
    %1497 = vmatmul.f32.gmra.mxu0 %v1434
    %v1498 = vpop.f32.mrf.mxu0
    %v1499 = vadd.f32 %v1368, %v1498
    %1500 = vmatmul.f32.gmra.mxu0 %v1437
    %v1501 = vpop.f32.mrf.mxu0
    %v1502 = vadd.f32 %v1373, %v1501
    %1503 = vmatmul.f32.gmra.mxu0 %v1440
    %v1504 = vpop.f32.mrf.mxu0
    %v1505 = vadd.f32 %v1378, %v1504
    %1506 = vmatmul.f32.gmra.mxu0 %v1443
    %v1507 = vpop.f32.mrf.mxu0
    %v1508 = vadd.f32 %v1383, %v1507
    %1509 = vmatmul.f32.gmra.mxu0 %v1446
    %v1510 = vpop.f32.mrf.mxu0
    %v1511 = vadd.f32 %v1388, %v1510
    %1512 = vmatmul.f32.gmra.mxu0 %v1449
    %v1513 = vpop.f32.mrf.mxu0
    %v1514 = vadd.f32 %v1393, %v1513
    %1515 = vmatmul.f32.gmra.mxu0 %v1452
    %v1516 = vpop.f32.mrf.mxu0
    %v1517 = vadd.f32 %v1398, %v1516
    %1518 = vmatmul.f32.gmra.mxu0 %v1455
    %v1519 = vpop.f32.mrf.mxu0
    %v1520 = vadd.f32 %v1403, %v1519
    %1521 = vmatmul.f32.gmra.mxu0 %v1458
    %v1522 = vpop.f32.mrf.mxu0
    %v1523 = vadd.f32 %v1408, %v1522
    %1524 = vmatmul.f32.gmra.mxu0 %v1461
    %v1525 = vpop.f32.mrf.mxu0
    %v1526 = vadd.f32 %v1413, %v1525
    %1527 = vdwg.mxu0
    %v1528 = vand.u32 2147483647, %v1481
    %v1529 = vand.u32 2147483647, %v1484
    %v1530 = vand.u32 2147483647, %v1487
    %v1531 = vand.u32 2147483647, %v1490
    %v1532 = vxor.u32 %v1493, 2147483648
    %v1533 = vxor.u32 %v1496, 2147483648
    %v1534 = vxor.u32 %v1499, 2147483648
    %v1535 = vxor.u32 %v1502, 2147483648
    %v1536 = vmul.f32 %v1532, 1.442695
    %v1537 = vpow.pop %v1536
    %v1538 = vmul.f32 %v1533, 1.442695
    %v1539 = vpow.pop %v1538
    %v1540 = vmul.f32 %v1534, 1.442695
    %v1541 = vpow.pop %v1540
    %v1542 = vmul.f32 %v1535, 1.442695
    %v1543 = vpow.pop %v1542
    %v1544 = vadd.f32 %v1537, 1.0
    %v1545 = vadd.f32 %v1539, 1.0
    %v1546 = vadd.f32 %v1541, 1.0
    %v1547 = vadd.f32 %v1543, 1.0
    %v1548 = vrcp.pop %v1544
    %v1549 = vmul.f32 %v1544, %v1548
    %v1550 = vsub.f32 1.0, %v1549
    %v1551 = vmul.f32 %v1548, %v1550
    %v1552 = vadd.f32 %v1548, %v1551
    %vm1553 = vweird.f32 %v1544
    %vm1554 = vweird.f32 %v1548
    %vm1555 = vmor %vm1553, %vm1554
    %v1556 = vsel %vm1555, %v1548, %v1552
    %v1557 = vand.u32 2147483647, %v1544
    %vm1558 = vcmp.eq.f32.partialorder %v1557, 8.507059e+37
    %v1559 = vand.u32 %v1544, 2147483648
    %v1560 = vor.u32 1.1754944e-38, %v1559
    %v1561 = vsel %vm1558, %v1560, %v1556
    %v1562 = vmul.f32 1.0, %v1561
    %v1563 = vrcp.pop %v1545
    %v1564 = vmul.f32 %v1545, %v1563
    %v1565 = vsub.f32 1.0, %v1564
    %v1566 = vmul.f32 %v1563, %v1565
    %v1567 = vadd.f32 %v1563, %v1566
    %vm1568 = vweird.f32 %v1545
    %vm1569 = vweird.f32 %v1563
    %vm1570 = vmor %vm1568, %vm1569
    %v1571 = vsel %vm1570, %v1563, %v1567
    %v1572 = vand.u32 2147483647, %v1545
    %vm1573 = vcmp.eq.f32.partialorder %v1572, 8.507059e+37
    %v1574 = vand.u32 %v1545, 2147483648
    %v1575 = vor.u32 1.1754944e-38, %v1574
    %v1576 = vsel %vm1573, %v1575, %v1571
    %v1577 = vmul.f32 1.0, %v1576
    %v1578 = vrcp.pop %v1546
    %v1579 = vmul.f32 %v1546, %v1578
    %v1580 = vsub.f32 1.0, %v1579
    %v1581 = vmul.f32 %v1578, %v1580
    %v1582 = vadd.f32 %v1578, %v1581
    %vm1583 = vweird.f32 %v1546
    %vm1584 = vweird.f32 %v1578
    %vm1585 = vmor %vm1583, %vm1584
    %v1586 = vsel %vm1585, %v1578, %v1582
    %v1587 = vand.u32 2147483647, %v1546
    %vm1588 = vcmp.eq.f32.partialorder %v1587, 8.507059e+37
    %v1589 = vand.u32 %v1546, 2147483648
    %v1590 = vor.u32 1.1754944e-38, %v1589
    %v1591 = vsel %vm1588, %v1590, %v1586
    %v1592 = vmul.f32 1.0, %v1591
    %v1593 = vrcp.pop %v1547
    %v1594 = vmul.f32 %v1547, %v1593
    %v1595 = vsub.f32 1.0, %v1594
    %v1596 = vmul.f32 %v1593, %v1595
    %v1597 = vadd.f32 %v1593, %v1596
    %vm1598 = vweird.f32 %v1547
    %vm1599 = vweird.f32 %v1593
    %vm1600 = vmor %vm1598, %vm1599
    %v1601 = vsel %vm1600, %v1593, %v1597
    %v1602 = vand.u32 2147483647, %v1547
    %vm1603 = vcmp.eq.f32.partialorder %v1602, 8.507059e+37
    %v1604 = vand.u32 %v1547, 2147483648
    %v1605 = vor.u32 1.1754944e-38, %v1604
    %v1606 = vsel %vm1603, %v1605, %v1601
    %v1607 = vmul.f32 1.0, %v1606
    %v1608 = vmul.f32 %v1562, 0.49
    %v1609 = vmul.f32 %v1577, 0.49
    %v1610 = vmul.f32 %v1592, 0.49
    %v1611 = vmul.f32 %v1607, 0.49
    %v1612 = vadd.f32 %v1608, 0.01
    %v1613 = vadd.f32 %v1609, 0.01
    %v1614 = vadd.f32 %v1610, 0.01
    %v1615 = vadd.f32 %v1611, 0.01
    %v1616 = vld [vmem:[%s5] sm:$0xff]
    %v1617 = vld [vmem:[%s5 + $0x8] sm:$0xff]
    %v1618 = vld [vmem:[%s5 + $0x10] sm:$0xff]
    %v1619 = vld [vmem:[%s5 + $0x18] sm:$0xff]
    %v1620 = vld [vmem:[%s5 + $0x20] sm:$0xff]
    %v1621 = vld [vmem:[%s5 + $0x28] sm:$0xff]
    %v1622 = vld [vmem:[%s5 + $0x30] sm:$0xff]
    %v1623 = vld [vmem:[%s5 + $0x38] sm:$0xff]
    %v1624 = vld [vmem:[%s5 + $0x40] sm:$0xff]
    %v1625 = vld [vmem:[%s5 + $0x48] sm:$0xff]
    %v1626 = vld [vmem:[%s5 + $0x50] sm:$0xff]
    %v1627 = vld [vmem:[%s5 + $0x58] sm:$0xff]
    %v1628 = vld [vmem:[%s5 + $0x60] sm:$0xff]
    %v1629 = vld [vmem:[%s5 + $0x68] sm:$0xff]
    %v1630 = vld [vmem:[%s5 + $0x70] sm:$0xff]
    %v1631 = vld [vmem:[%s5 + $0x78] sm:$0xff]
    %v1633 = vsel %vm248, %v1528, 0
    %v1636 = vsel %vm248, %v1529, 0
    %v1639 = vsel %vm248, %v1530, 0
    %v1642 = vsel %vm248, %v1531, 0
    %1644 = vmatpush.msra.mxu0 0.0
    %1645 = vmatpush.msra.mxu0 0.0
    %1646 = vmatpush.msra.mxu0 0.0
    %1647 = vmatpush.msra.mxu0 0.0
    %1648 = vmatpush.msra.mxu0 0.0
    %1649 = vmatpush.msra.mxu0 0.0
    %1650 = vmatpush.msra.mxu0 0.0
    %1651 = vmatpush.msra.mxu0 0.0
    %1652 = vmatpush.msra.mxu0 %v1630
    %1653 = vmatpush.msra.mxu0 %v1628
    %1654 = vmatpush.msra.mxu0 %v1626
    %1655 = vmatpush.msra.mxu0 %v1624
    %1656 = vmatpush.msra.mxu0 %v1622
    %1657 = vmatpush.msra.mxu0 %v1620
    %1658 = vmatpush.msra.mxu0 %v1618
    %1659 = vmatpush.msra.mxu0 %v1616
    %1660 = vmatmul.f32.gmra.mxu0 %v1633
    %v1661 = vpop.f32.mrf.mxu0
    %v1662 = vadd.f32 0.0, %v1661
    %1663 = vmatmul.f32.gmra.mxu0 %v1636
    %v1664 = vpop.f32.mrf.mxu0
    %v1665 = vadd.f32 0.0, %v1664
    %1666 = vmatmul.f32.gmra.mxu0 %v1639
    %v1667 = vpop.f32.mrf.mxu0
    %v1668 = vadd.f32 0.0, %v1667
    %1669 = vmatmul.f32.gmra.mxu0 %v1642
    %v1670 = vpop.f32.mrf.mxu0
    %v1671 = vadd.f32 0.0, %v1670
    %1672 = vdwg.mxu0
    %1673 = vmatpush.msra.mxu0 0.0
    %1674 = vmatpush.msra.mxu0 0.0
    %1675 = vmatpush.msra.mxu0 0.0
    %1676 = vmatpush.msra.mxu0 0.0
    %1677 = vmatpush.msra.mxu0 0.0
    %1678 = vmatpush.msra.mxu0 0.0
    %1679 = vmatpush.msra.mxu0 0.0
    %1680 = vmatpush.msra.mxu0 0.0
    %1681 = vmatpush.msra.mxu0 %v1631
    %1682 = vmatpush.msra.mxu0 %v1629
    %1683 = vmatpush.msra.mxu0 %v1627
    %1684 = vmatpush.msra.mxu0 %v1625
    %1685 = vmatpush.msra.mxu0 %v1623
    %1686 = vmatpush.msra.mxu0 %v1621
    %1687 = vmatpush.msra.mxu0 %v1619
    %1688 = vmatpush.msra.mxu0 %v1617
    %1689 = vmatmul.f32.gmra.mxu0 %v1633
    %v1690 = vpop.f32.mrf.mxu0
    %v1691 = vadd.f32 0.0, %v1690
    %1692 = vmatmul.f32.gmra.mxu0 %v1636
    %v1693 = vpop.f32.mrf.mxu0
    %v1694 = vadd.f32 0.0, %v1693
    %1695 = vmatmul.f32.gmra.mxu0 %v1639
    %v1696 = vpop.f32.mrf.mxu0
    %v1697 = vadd.f32 0.0, %v1696
    %1698 = vmatmul.f32.gmra.mxu0 %v1642
    %v1699 = vpop.f32.mrf.mxu0
    %v1700 = vadd.f32 0.0, %v1699
    %1701 = vdwg.mxu0
    %v1702 = vld [vmem:[%s6] sm:$0xff]
    %v1703 = vld [vmem:[%s6 + $0x8] sm:$0xff]
    %v1704 = vld [vmem:[%s6 + $0x10] sm:$0xff]
    %v1705 = vld [vmem:[%s6 + $0x18] sm:$0xff]
    %v1706 = vld [vmem:[%s6 + $0x20] sm:$0xff]
    %v1707 = vld [vmem:[%s6 + $0x28] sm:$0xff]
    %v1708 = vld [vmem:[%s6 + $0x30] sm:$0xff]
    %v1709 = vld [vmem:[%s6 + $0x38] sm:$0xff]
    %v1710 = vld [vmem:[%s6 + $0x40] sm:$0xff]
    %v1711 = vld [vmem:[%s6 + $0x48] sm:$0xff]
    %v1712 = vld [vmem:[%s6 + $0x50] sm:$0xff]
    %v1713 = vld [vmem:[%s6 + $0x58] sm:$0xff]
    %v1714 = vld [vmem:[%s6 + $0x60] sm:$0xff]
    %v1715 = vld [vmem:[%s6 + $0x68] sm:$0xff]
    %v1716 = vld [vmem:[%s6 + $0x70] sm:$0xff]
    %v1717 = vld [vmem:[%s6 + $0x78] sm:$0xff]
    %v1719 = vsel %vm248, %v1612, 0
    %v1722 = vsel %vm248, %v1613, 0
    %v1725 = vsel %vm248, %v1614, 0
    %v1728 = vsel %vm248, %v1615, 0
    %1730 = vmatpush.msra.mxu0 0.0
    %1731 = vmatpush.msra.mxu0 0.0
    %1732 = vmatpush.msra.mxu0 0.0
    %1733 = vmatpush.msra.mxu0 0.0
    %1734 = vmatpush.msra.mxu0 0.0
    %1735 = vmatpush.msra.mxu0 0.0
    %1736 = vmatpush.msra.mxu0 0.0
    %1737 = vmatpush.msra.mxu0 0.0
    %1738 = vmatpush.msra.mxu0 %v1716
    %1739 = vmatpush.msra.mxu0 %v1714
    %1740 = vmatpush.msra.mxu0 %v1712
    %1741 = vmatpush.msra.mxu0 %v1710
    %1742 = vmatpush.msra.mxu0 %v1708
    %1743 = vmatpush.msra.mxu0 %v1706
    %1744 = vmatpush.msra.mxu0 %v1704
    %1745 = vmatpush.msra.mxu0 %v1702
    %1746 = vmatmul.f32.gmra.mxu0 %v1719
    %v1747 = vpop.f32.mrf.mxu0
    %v1748 = vadd.f32 0.0, %v1747
    %1749 = vmatmul.f32.gmra.mxu0 %v1722
    %v1750 = vpop.f32.mrf.mxu0
    %v1751 = vadd.f32 0.0, %v1750
    %1752 = vmatmul.f32.gmra.mxu0 %v1725
    %v1753 = vpop.f32.mrf.mxu0
    %v1754 = vadd.f32 0.0, %v1753
    %1755 = vmatmul.f32.gmra.mxu0 %v1728
    %v1756 = vpop.f32.mrf.mxu0
    %v1757 = vadd.f32 0.0, %v1756
    %1758 = vdwg.mxu0
    %1759 = vmatpush.msra.mxu0 0.0
    %1760 = vmatpush.msra.mxu0 0.0
    %1761 = vmatpush.msra.mxu0 0.0
    %1762 = vmatpush.msra.mxu0 0.0
    %1763 = vmatpush.msra.mxu0 0.0
    %1764 = vmatpush.msra.mxu0 0.0
    %1765 = vmatpush.msra.mxu0 0.0
    %1766 = vmatpush.msra.mxu0 0.0
    %1767 = vmatpush.msra.mxu0 %v1717
    %1768 = vmatpush.msra.mxu0 %v1715
    %1769 = vmatpush.msra.mxu0 %v1713
    %1770 = vmatpush.msra.mxu0 %v1711
    %1771 = vmatpush.msra.mxu0 %v1709
    %1772 = vmatpush.msra.mxu0 %v1707
    %1773 = vmatpush.msra.mxu0 %v1705
    %1774 = vmatpush.msra.mxu0 %v1703
    %1775 = vmatmul.f32.gmra.mxu0 %v1719
    %v1776 = vpop.f32.mrf.mxu0
    %v1777 = vadd.f32 0.0, %v1776
    %1778 = vmatmul.f32.gmra.mxu0 %v1722
    %v1779 = vpop.f32.mrf.mxu0
    %v1780 = vadd.f32 0.0, %v1779
    %1781 = vmatmul.f32.gmra.mxu0 %v1725
    %v1782 = vpop.f32.mrf.mxu0
    %v1783 = vadd.f32 0.0, %v1782
    %1784 = vmatmul.f32.gmra.mxu0 %v1728
    %v1785 = vpop.f32.mrf.mxu0
    %v1786 = vadd.f32 0.0, %v1785
    %1787 = vdwg.mxu0
    %v1788 = vmul.f32 %v1748, 3.1415927
    %v1789 = vmul.f32 %v1777, 3.1415927
    %v1790 = vmul.f32 %v1751, 3.1415927
    %v1791 = vmul.f32 %v1780, 3.1415927
    %v1792 = vmul.f32 %v1754, 3.1415927
    %v1793 = vmul.f32 %v1783, 3.1415927
    %v1794 = vmul.f32 %v1757, 3.1415927
    %v1795 = vmul.f32 %v1786, 3.1415927
    %v1796 = vand.u32 2147483647, %v1788
    %vm1797 = vcmp.le.f32.partialorder %v1796, 0.7853982
    %vm1798 = vcmp.lt.s32.totalorder %v1788, 0
    %v1799 = vand.u32 %v1788, 2139095040
    %v1800 = vshrl.u32 %v1799, 23
    %v1801 = vsub.s32 %v1800, 127
    %v1802 = vand.u32 2147483647, %v1788
    %v1803 = vand.u32 %v1802, 8388607
    %v1804 = vor.u32 %v1803, 8388608
    %v1805 = vsub.s32 0, %v1804
    %v1806 = vadd.s32 %v1801, 1
    %vm1807 = vcmp.gt.s32.totalorder %v1806, 0
    %v1808 = vsel %vm1807, %v1806, 0
    %v1809 = vshrl.u32 %v1808, 5
    %v1810 = vand.u32 %v1808, 31
    %v1811 = vsub.s32 32, %v1810
    %v1812 = vshrl.u32 683565275, %v1811
    %v1813 = vshll.u32 683565275, %v1810
    %v1814 = vshrl.u32 2475754826, %v1811
    %v1815 = vor.u32 %v1813, %v1814
    %v1816 = vshll.u32 2475754826, %v1810
    %v1817 = vshrl.u32 2131351028, %v1811
    %v1818 = vor.u32 %v1816, %v1817
    %v1819 = vshll.u32 2131351028, %v1810
    %v1820 = vshrl.u32 2102212464, %v1811
    %v1821 = vor.u32 %v1819, %v1820
    %v1822 = vshll.u32 2102212464, %v1810
    %v1823 = vshrl.u32 920167782, %v1811
    %v1824 = vor.u32 %v1822, %v1823
    %v1825 = vshll.u32 920167782, %v1810
    %v1826 = vshrl.u32 1326507024, %v1811
    %v1827 = vor.u32 %v1825, %v1826
    %vm1828 = vcmp.lt.s32.totalorder %v1809, 1
    %vm1829 = vcmp.lt.s32.totalorder %v1809, 2
    %vm1830 = vcmp.lt.s32.totalorder %v1809, 3
    %vm1831 = vcmp.lt.s32.totalorder %v1809, 4
    %v1832 = vsel %vm1828, %v1812, %v1815
    %v1833 = vsel %vm1831, %v1821, 2102212464
    %v1834 = vsel %vm1830, %v1818, %v1833
    %v1835 = vsel %vm1829, %v1832, %v1834
    %v1836 = vsel %vm1828, %v1815, %v1818
    %v1837 = vsel %vm1831, %v1824, 920167782
    %v1838 = vsel %vm1830, %v1821, %v1837
    %v1839 = vsel %vm1829, %v1836, %v1838
    %v1840 = vsel %vm1828, %v1818, %v1821
    %v1841 = vsel %vm1831, %v1827, 1326507024
    %v1842 = vsel %vm1830, %v1824, %v1841
    %v1843 = vsel %vm1829, %v1840, %v1842
    %v1844 = vshll.u32 %v1804, 8
    %v1845 = vand.u32 %v1844, 65535
    %v1846 = vshrl.u32 %v1844, 16
    %v1847 = vand.u32 %v1843, 65535
    %v1848 = vshrl.u32 %v1843, 16
    %v1849 = vmul.u32 %v1845, %v1847
    %v1850 = vmul.u32 %v1845, %v1848
    %v1851 = vmul.u32 %v1846, %v1847
    %v1852 = vmul.u32 %v1846, %v1848
    %v1853 = vshll.u32 %v1850, 16
    %v1854 = vshrl.u32 %v1850, 16
    %v1855 = vshll.u32 %v1851, 16
    %v1856 = vshrl.u32 %v1851, 16
    %vm1857 = vc.u32 %v1849, %v1853
    %v1858 = vsel %vm1857, 1, 0
    %v1859 = vadd.s32 %v1849, %v1853
    %v1860 = vadd.s32 %v1852, %v1858
    %vm1861 = vc.u32 %v1859, %v1855
    %v1862 = vsel %vm1861, 1, 0
    %v1863 = vadd.s32 %v1859, %v1855
    %v1864 = vadd.s32 %v1860, %v1862
    %v1865 = vadd.s32 %v1864, %v1854
    %v1866 = vadd.s32 %v1865, %v1856
    %v1867 = vand.u32 %v1844, 65535
    %v1868 = vshrl.u32 %v1844, 16
    %v1869 = vand.u32 %v1839, 65535
    %v1870 = vshrl.u32 %v1839, 16
    %v1871 = vmul.u32 %v1867, %v1869
    %v1872 = vmul.u32 %v1867, %v1870
    %v1873 = vmul.u32 %v1868, %v1869
    %v1874 = vmul.u32 %v1868, %v1870
    %v1875 = vshll.u32 %v1872, 16
    %v1876 = vshrl.u32 %v1872, 16
    %v1877 = vshll.u32 %v1873, 16
    %v1878 = vshrl.u32 %v1873, 16
    %vm1879 = vc.u32 %v1871, %v1875
    %v1880 = vsel %vm1879, 1, 0
    %v1881 = vadd.s32 %v1871, %v1875
    %v1882 = vadd.s32 %v1874, %v1880
    %vm1883 = vc.u32 %v1881, %v1877
    %v1884 = vsel %vm1883, 1, 0
    %v1885 = vadd.s32 %v1881, %v1877
    %v1886 = vadd.s32 %v1882, %v1884
    %v1887 = vadd.s32 %v1886, %v1876
    %v1888 = vadd.s32 %v1887, %v1878
    %v1889 = vmul.u32 %v1844, %v1835
    %v1890 = vadd.s32 %v1866, %v1885
    %vm1891 = vc.u32 %v1866, %v1885
    %v1892 = vadd.s32 %v1888, 1
    %v1893 = vsel %vm1891, %v1892, %v1888
    %v1894 = vadd.s32 %v1889, %v1893
    %v1895 = vadd.s32 %v1894, 536870912
    %v1896 = vshrl.u32 %v1895, 30
    %v1897 = vshll.u32 %v1896, 30
    %v1898 = vsub.s32 %v1894, %v1897
    %vm1899 = vcmp.lt.s32.totalorder %v1898, 0
    %v1900 = vsub.s32 0, %v1898
    %v1901 = vsel %vm1899, %v1900, %v1898
    %v1902 = vclz %v1901
    %v1903 = vsub.s32 %v1902, 2
    %vm1904 = vcmp.gt.s32.totalorder 0, %v1903
    %v1905 = vsel %vm1904, 0, %v1903
    %v1906 = vsub.s32 32, %v1905
    %v1907 = vshll.u32 %v1898, %v1905
    %v1908 = vshrl.u32 %v1890, %v1906
    %v1909 = vor.u32 %v1907, %v1908
    %v1910 = vsub.s32 4294967266, %v1905
    %v1911 = vadd.s32 %v1910, 127
    %v1912 = vshll.u32 %v1911, 23
    %v1913 = vor.u32 4788187, %v1912
    %v1914 = vand.u32 2147483647, %v1913
    %v1916 = vcvt.s32.f32 %v1909
    %v1917 = vmul.f32 %v1916, %v1914
    %v1918 = vxor.u32 %v1917, 2147483648
    %v1919 = vsel %vm1798, %v1918, %v1917
    %v1920 = vsub.s32 4, %v1896
    %v1921 = vsel %vm1798, %v1920, %v1896
    %v1922 = vsel %vm1797, %v1788, %v1919
    %v1923 = vsel %vm1797, 0, %v1921
    %v1924 = vmul.f32 %v1922, %v1922
    %v1925 = vmul.f32 %v1924, -0.001358992
    %v1926 = vadd.f32 %v1925, 0.041655596
    %v1927 = vmul.f32 %v1924, %v1926
    %v1928 = vadd.f32 %v1927, -0.4999988
    %v1929 = vmul.f32 %v1924, %v1928
    %v1930 = vadd.f32 1.0, %v1929
    %v1931 = vmul.f32 %v1922, %v1922
    %v1932 = vmul.f32 %v1931, -0.00019511016
    %v1933 = vadd.f32 %v1932, 0.008332121
    %v1934 = vmul.f32 %v1931, %v1933
    %v1935 = vadd.f32 %v1934, -0.16666654
    %v1936 = vmul.f32 %v1931, %v1935
    %v1937 = vadd.f32 %v1936, 1.0
    %v1938 = vmul.f32 %v1937, %v1922
    %vm1939 = vweird.f32 %v1788
    %v1940 = vadd.s32 %v1923, 3
    %v1941 = vand.u32 %v1940, 3
    %vm1942 = vcmp.lt.s32.totalorder %v1941, 2
    %vm1943 = vcmp.eq.s32.totalorder %v1941, 0
    %v1944 = vxor.u32 %v1938, 2147483648
    %v1945 = vsel %vm1943, %v1930, %v1944
    %vm1946 = vcmp.eq.s32.totalorder %v1941, 2
    %v1947 = vxor.u32 %v1930, 2147483648
    %v1948 = vsel %vm1946, %v1947, %v1938
    %v1949 = vsel %vm1942, %v1945, %v1948
    %v1950 = vsel %vm1939, nan, %v1949
    %v1951 = vand.u32 2147483647, %v1789
    %vm1952 = vcmp.le.f32.partialorder %v1951, 0.7853982
    %vm1953 = vcmp.lt.s32.totalorder %v1789, 0
    %v1954 = vand.u32 %v1789, 2139095040
    %v1955 = vshrl.u32 %v1954, 23
    %v1956 = vsub.s32 %v1955, 127
    %v1957 = vand.u32 2147483647, %v1789
    %v1958 = vand.u32 %v1957, 8388607
    %v1959 = vor.u32 %v1958, 8388608
    %v1960 = vsub.s32 0, %v1959
    %v1961 = vadd.s32 %v1956, 1
    %vm1962 = vcmp.gt.s32.totalorder %v1961, 0
    %v1963 = vsel %vm1962, %v1961, 0
    %v1964 = vshrl.u32 %v1963, 5
    %v1965 = vand.u32 %v1963, 31
    %v1966 = vsub.s32 32, %v1965
    %v1967 = vshrl.u32 683565275, %v1966
    %v1968 = vshll.u32 683565275, %v1965
    %v1969 = vshrl.u32 2475754826, %v1966
    %v1970 = vor.u32 %v1968, %v1969
    %v1971 = vshll.u32 2475754826, %v1965
    %v1972 = vshrl.u32 2131351028, %v1966
    %v1973 = vor.u32 %v1971, %v1972
    %v1974 = vshll.u32 2131351028, %v1965
    %v1975 = vshrl.u32 2102212464, %v1966
    %v1976 = vor.u32 %v1974, %v1975
    %v1977 = vshll.u32 2102212464, %v1965
    %v1978 = vshrl.u32 920167782, %v1966
    %v1979 = vor.u32 %v1977, %v1978
    %v1980 = vshll.u32 920167782, %v1965
    %v1981 = vshrl.u32 1326507024, %v1966
    %v1982 = vor.u32 %v1980, %v1981
    %vm1983 = vcmp.lt.s32.totalorder %v1964, 1
    %vm1984 = vcmp.lt.s32.totalorder %v1964, 2
    %vm1985 = vcmp.lt.s32.totalorder %v1964, 3
    %vm1986 = vcmp.lt.s32.totalorder %v1964, 4
    %v1987 = vsel %vm1983, %v1967, %v1970
    %v1988 = vsel %vm1986, %v1976, 2102212464
    %v1989 = vsel %vm1985, %v1973, %v1988
    %v1990 = vsel %vm1984, %v1987, %v1989
    %v1991 = vsel %vm1983, %v1970, %v1973
    %v1992 = vsel %vm1986, %v1979, 920167782
    %v1993 = vsel %vm1985, %v1976, %v1992
    %v1994 = vsel %vm1984, %v1991, %v1993
    %v1995 = vsel %vm1983, %v1973, %v1976
    %v1996 = vsel %vm1986, %v1982, 1326507024
    %v1997 = vsel %vm1985, %v1979, %v1996
    %v1998 = vsel %vm1984, %v1995, %v1997
    %v1999 = vshll.u32 %v1959, 8
    %v2000 = vand.u32 %v1999, 65535
    %v2001 = vshrl.u32 %v1999, 16
    %v2002 = vand.u32 %v1998, 65535
    %v2003 = vshrl.u32 %v1998, 16
    %v2004 = vmul.u32 %v2000, %v2002
    %v2005 = vmul.u32 %v2000, %v2003
    %v2006 = vmul.u32 %v2001, %v2002
    %v2007 = vmul.u32 %v2001, %v2003
    %v2008 = vshll.u32 %v2005, 16
    %v2009 = vshrl.u32 %v2005, 16
    %v2010 = vshll.u32 %v2006, 16
    %v2011 = vshrl.u32 %v2006, 16
    %vm2012 = vc.u32 %v2004, %v2008
    %v2013 = vsel %vm2012, 1, 0
    %v2014 = vadd.s32 %v2004, %v2008
    %v2015 = vadd.s32 %v2007, %v2013
    %vm2016 = vc.u32 %v2014, %v2010
    %v2017 = vsel %vm2016, 1, 0
    %v2018 = vadd.s32 %v2014, %v2010
    %v2019 = vadd.s32 %v2015, %v2017
    %v2020 = vadd.s32 %v2019, %v2009
    %v2021 = vadd.s32 %v2020, %v2011
    %v2022 = vand.u32 %v1999, 65535
    %v2023 = vshrl.u32 %v1999, 16
    %v2024 = vand.u32 %v1994, 65535
    %v2025 = vshrl.u32 %v1994, 16
    %v2026 = vmul.u32 %v2022, %v2024
    %v2027 = vmul.u32 %v2022, %v2025
    %v2028 = vmul.u32 %v2023, %v2024
    %v2029 = vmul.u32 %v2023, %v2025
    %v2030 = vshll.u32 %v2027, 16
    %v2031 = vshrl.u32 %v2027, 16
    %v2032 = vshll.u32 %v2028, 16
    %v2033 = vshrl.u32 %v2028, 16
    %vm2034 = vc.u32 %v2026, %v2030
    %v2035 = vsel %vm2034, 1, 0
    %v2036 = vadd.s32 %v2026, %v2030
    %v2037 = vadd.s32 %v2029, %v2035
    %vm2038 = vc.u32 %v2036, %v2032
    %v2039 = vsel %vm2038, 1, 0
    %v2040 = vadd.s32 %v2036, %v2032
    %v2041 = vadd.s32 %v2037, %v2039
    %v2042 = vadd.s32 %v2041, %v2031
    %v2043 = vadd.s32 %v2042, %v2033
    %v2044 = vmul.u32 %v1999, %v1990
    %v2045 = vadd.s32 %v2021, %v2040
    %vm2046 = vc.u32 %v2021, %v2040
    %v2047 = vadd.s32 %v2043, 1
    %v2048 = vsel %vm2046, %v2047, %v2043
    %v2049 = vadd.s32 %v2044, %v2048
    %v2050 = vadd.s32 %v2049, 536870912
    %v2051 = vshrl.u32 %v2050, 30
    %v2052 = vshll.u32 %v2051, 30
    %v2053 = vsub.s32 %v2049, %v2052
    %vm2054 = vcmp.lt.s32.totalorder %v2053, 0
    %v2055 = vsub.s32 0, %v2053
    %v2056 = vsel %vm2054, %v2055, %v2053
    %v2057 = vclz %v2056
    %v2058 = vsub.s32 %v2057, 2
    %vm2059 = vcmp.gt.s32.totalorder 0, %v2058
    %v2060 = vsel %vm2059, 0, %v2058
    %v2061 = vsub.s32 32, %v2060
    %v2062 = vshll.u32 %v2053, %v2060
    %v2063 = vshrl.u32 %v2045, %v2061
    %v2064 = vor.u32 %v2062, %v2063
    %v2065 = vsub.s32 4294967266, %v2060
    %v2066 = vadd.s32 %v2065, 127
    %v2067 = vshll.u32 %v2066, 23
    %v2068 = vor.u32 4788187, %v2067
    %v2069 = vand.u32 2147483647, %v2068
    %v2071 = vcvt.s32.f32 %v2064
    %v2072 = vmul.f32 %v2071, %v2069
    %v2073 = vxor.u32 %v2072, 2147483648
    %v2074 = vsel %vm1953, %v2073, %v2072
    %v2075 = vsub.s32 4, %v2051
    %v2076 = vsel %vm1953, %v2075, %v2051
    %v2077 = vsel %vm1952, %v1789, %v2074
    %v2078 = vsel %vm1952, 0, %v2076
    %v2079 = vmul.f32 %v2077, %v2077
    %v2080 = vmul.f32 %v2079, -0.001358992
    %v2081 = vadd.f32 %v2080, 0.041655596
    %v2082 = vmul.f32 %v2079, %v2081
    %v2083 = vadd.f32 %v2082, -0.4999988
    %v2084 = vmul.f32 %v2079, %v2083
    %v2085 = vadd.f32 1.0, %v2084
    %v2086 = vmul.f32 %v2077, %v2077
    %v2087 = vmul.f32 %v2086, -0.00019511016
    %v2088 = vadd.f32 %v2087, 0.008332121
    %v2089 = vmul.f32 %v2086, %v2088
    %v2090 = vadd.f32 %v2089, -0.16666654
    %v2091 = vmul.f32 %v2086, %v2090
    %v2092 = vadd.f32 %v2091, 1.0
    %v2093 = vmul.f32 %v2092, %v2077
    %vm2094 = vweird.f32 %v1789
    %v2095 = vadd.s32 %v2078, 3
    %v2096 = vand.u32 %v2095, 3
    %vm2097 = vcmp.lt.s32.totalorder %v2096, 2
    %vm2098 = vcmp.eq.s32.totalorder %v2096, 0
    %v2099 = vxor.u32 %v2093, 2147483648
    %v2100 = vsel %vm2098, %v2085, %v2099
    %vm2101 = vcmp.eq.s32.totalorder %v2096, 2
    %v2102 = vxor.u32 %v2085, 2147483648
    %v2103 = vsel %vm2101, %v2102, %v2093
    %v2104 = vsel %vm2097, %v2100, %v2103
    %v2105 = vsel %vm2094, nan, %v2104
    %v2106 = vand.u32 2147483647, %v1790
    %vm2107 = vcmp.le.f32.partialorder %v2106, 0.7853982
    %vm2108 = vcmp.lt.s32.totalorder %v1790, 0
    %v2109 = vand.u32 %v1790, 2139095040
    %v2110 = vshrl.u32 %v2109, 23
    %v2111 = vsub.s32 %v2110, 127
    %v2112 = vand.u32 2147483647, %v1790
    %v2113 = vand.u32 %v2112, 8388607
    %v2114 = vor.u32 %v2113, 8388608
    %v2115 = vsub.s32 0, %v2114
    %v2116 = vadd.s32 %v2111, 1
    %vm2117 = vcmp.gt.s32.totalorder %v2116, 0
    %v2118 = vsel %vm2117, %v2116, 0
    %v2119 = vshrl.u32 %v2118, 5
    %v2120 = vand.u32 %v2118, 31
    %v2121 = vsub.s32 32, %v2120
    %v2122 = vshrl.u32 683565275, %v2121
    %v2123 = vshll.u32 683565275, %v2120
    %v2124 = vshrl.u32 2475754826, %v2121
    %v2125 = vor.u32 %v2123, %v2124
    %v2126 = vshll.u32 2475754826, %v2120
    %v2127 = vshrl.u32 2131351028, %v2121
    %v2128 = vor.u32 %v2126, %v2127
    %v2129 = vshll.u32 2131351028, %v2120
    %v2130 = vshrl.u32 2102212464, %v2121
    %v2131 = vor.u32 %v2129, %v2130
    %v2132 = vshll.u32 2102212464, %v2120
    %v2133 = vshrl.u32 920167782, %v2121
    %v2134 = vor.u32 %v2132, %v2133
    %v2135 = vshll.u32 920167782, %v2120
    %v2136 = vshrl.u32 1326507024, %v2121
    %v2137 = vor.u32 %v2135, %v2136
    %vm2138 = vcmp.lt.s32.totalorder %v2119, 1
    %vm2139 = vcmp.lt.s32.totalorder %v2119, 2
    %vm2140 = vcmp.lt.s32.totalorder %v2119, 3
    %vm2141 = vcmp.lt.s32.totalorder %v2119, 4
    %v2142 = vsel %vm2138, %v2122, %v2125
    %v2143 = vsel %vm2141, %v2131, 2102212464
    %v2144 = vsel %vm2140, %v2128, %v2143
    %v2145 = vsel %vm2139, %v2142, %v2144
    %v2146 = vsel %vm2138, %v2125, %v2128
    %v2147 = vsel %vm2141, %v2134, 920167782
    %v2148 = vsel %vm2140, %v2131, %v2147
    %v2149 = vsel %vm2139, %v2146, %v2148
    %v2150 = vsel %vm2138, %v2128, %v2131
    %v2151 = vsel %vm2141, %v2137, 1326507024
    %v2152 = vsel %vm2140, %v2134, %v2151
    %v2153 = vsel %vm2139, %v2150, %v2152
    %v2154 = vshll.u32 %v2114, 8
    %v2155 = vand.u32 %v2154, 65535
    %v2156 = vshrl.u32 %v2154, 16
    %v2157 = vand.u32 %v2153, 65535
    %v2158 = vshrl.u32 %v2153, 16
    %v2159 = vmul.u32 %v2155, %v2157
    %v2160 = vmul.u32 %v2155, %v2158
    %v2161 = vmul.u32 %v2156, %v2157
    %v2162 = vmul.u32 %v2156, %v2158
    %v2163 = vshll.u32 %v2160, 16
    %v2164 = vshrl.u32 %v2160, 16
    %v2165 = vshll.u32 %v2161, 16
    %v2166 = vshrl.u32 %v2161, 16
    %vm2167 = vc.u32 %v2159, %v2163
    %v2168 = vsel %vm2167, 1, 0
    %v2169 = vadd.s32 %v2159, %v2163
    %v2170 = vadd.s32 %v2162, %v2168
    %vm2171 = vc.u32 %v2169, %v2165
    %v2172 = vsel %vm2171, 1, 0
    %v2173 = vadd.s32 %v2169, %v2165
    %v2174 = vadd.s32 %v2170, %v2172
    %v2175 = vadd.s32 %v2174, %v2164
    %v2176 = vadd.s32 %v2175, %v2166
    %v2177 = vand.u32 %v2154, 65535
    %v2178 = vshrl.u32 %v2154, 16
    %v2179 = vand.u32 %v2149, 65535
    %v2180 = vshrl.u32 %v2149, 16
    %v2181 = vmul.u32 %v2177, %v2179
    %v2182 = vmul.u32 %v2177, %v2180
    %v2183 = vmul.u32 %v2178, %v2179
    %v2184 = vmul.u32 %v2178, %v2180
    %v2185 = vshll.u32 %v2182, 16
    %v2186 = vshrl.u32 %v2182, 16
    %v2187 = vshll.u32 %v2183, 16
    %v2188 = vshrl.u32 %v2183, 16
    %vm2189 = vc.u32 %v2181, %v2185
    %v2190 = vsel %vm2189, 1, 0
    %v2191 = vadd.s32 %v2181, %v2185
    %v2192 = vadd.s32 %v2184, %v2190
    %vm2193 = vc.u32 %v2191, %v2187
    %v2194 = vsel %vm2193, 1, 0
    %v2195 = vadd.s32 %v2191, %v2187
    %v2196 = vadd.s32 %v2192, %v2194
    %v2197 = vadd.s32 %v2196, %v2186
    %v2198 = vadd.s32 %v2197, %v2188
    %v2199 = vmul.u32 %v2154, %v2145
    %v2200 = vadd.s32 %v2176, %v2195
    %vm2201 = vc.u32 %v2176, %v2195
    %v2202 = vadd.s32 %v2198, 1
    %v2203 = vsel %vm2201, %v2202, %v2198
    %v2204 = vadd.s32 %v2199, %v2203
    %v2205 = vadd.s32 %v2204, 536870912
    %v2206 = vshrl.u32 %v2205, 30
    %v2207 = vshll.u32 %v2206, 30
    %v2208 = vsub.s32 %v2204, %v2207
    %vm2209 = vcmp.lt.s32.totalorder %v2208, 0
    %v2210 = vsub.s32 0, %v2208
    %v2211 = vsel %vm2209, %v2210, %v2208
    %v2212 = vclz %v2211
    %v2213 = vsub.s32 %v2212, 2
    %vm2214 = vcmp.gt.s32.totalorder 0, %v2213
    %v2215 = vsel %vm2214, 0, %v2213
    %v2216 = vsub.s32 32, %v2215
    %v2217 = vshll.u32 %v2208, %v2215
    %v2218 = vshrl.u32 %v2200, %v2216
    %v2219 = vor.u32 %v2217, %v2218
    %v2220 = vsub.s32 4294967266, %v2215
    %v2221 = vadd.s32 %v2220, 127
    %v2222 = vshll.u32 %v2221, 23
    %v2223 = vor.u32 4788187, %v2222
    %v2224 = vand.u32 2147483647, %v2223
    %v2226 = vcvt.s32.f32 %v2219
    %v2227 = vmul.f32 %v2226, %v2224
    %v2228 = vxor.u32 %v2227, 2147483648
    %v2229 = vsel %vm2108, %v2228, %v2227
    %v2230 = vsub.s32 4, %v2206
    %v2231 = vsel %vm2108, %v2230, %v2206
    %v2232 = vsel %vm2107, %v1790, %v2229
    %v2233 = vsel %vm2107, 0, %v2231
    %v2234 = vmul.f32 %v2232, %v2232
    %v2235 = vmul.f32 %v2234, -0.001358992
    %v2236 = vadd.f32 %v2235, 0.041655596
    %v2237 = vmul.f32 %v2234, %v2236
    %v2238 = vadd.f32 %v2237, -0.4999988
    %v2239 = vmul.f32 %v2234, %v2238
    %v2240 = vadd.f32 1.0, %v2239
    %v2241 = vmul.f32 %v2232, %v2232
    %v2242 = vmul.f32 %v2241, -0.00019511016
    %v2243 = vadd.f32 %v2242, 0.008332121
    %v2244 = vmul.f32 %v2241, %v2243
    %v2245 = vadd.f32 %v2244, -0.16666654
    %v2246 = vmul.f32 %v2241, %v2245
    %v2247 = vadd.f32 %v2246, 1.0
    %v2248 = vmul.f32 %v2247, %v2232
    %vm2249 = vweird.f32 %v1790
    %v2250 = vadd.s32 %v2233, 3
    %v2251 = vand.u32 %v2250, 3
    %vm2252 = vcmp.lt.s32.totalorder %v2251, 2
    %vm2253 = vcmp.eq.s32.totalorder %v2251, 0
    %v2254 = vxor.u32 %v2248, 2147483648
    %v2255 = vsel %vm2253, %v2240, %v2254
    %vm2256 = vcmp.eq.s32.totalorder %v2251, 2
    %v2257 = vxor.u32 %v2240, 2147483648
    %v2258 = vsel %vm2256, %v2257, %v2248
    %v2259 = vsel %vm2252, %v2255, %v2258
    %v2260 = vsel %vm2249, nan, %v2259
    %v2261 = vand.u32 2147483647, %v1791
    %vm2262 = vcmp.le.f32.partialorder %v2261, 0.7853982
    %vm2263 = vcmp.lt.s32.totalorder %v1791, 0
    %v2264 = vand.u32 %v1791, 2139095040
    %v2265 = vshrl.u32 %v2264, 23
    %v2266 = vsub.s32 %v2265, 127
    %v2267 = vand.u32 2147483647, %v1791
    %v2268 = vand.u32 %v2267, 8388607
    %v2269 = vor.u32 %v2268, 8388608
    %v2270 = vsub.s32 0, %v2269
    %v2271 = vadd.s32 %v2266, 1
    %vm2272 = vcmp.gt.s32.totalorder %v2271, 0
    %v2273 = vsel %vm2272, %v2271, 0
    %v2274 = vshrl.u32 %v2273, 5
    %v2275 = vand.u32 %v2273, 31
    %v2276 = vsub.s32 32, %v2275
    %v2277 = vshrl.u32 683565275, %v2276
    %v2278 = vshll.u32 683565275, %v2275
    %v2279 = vshrl.u32 2475754826, %v2276
    %v2280 = vor.u32 %v2278, %v2279
    %v2281 = vshll.u32 2475754826, %v2275
    %v2282 = vshrl.u32 2131351028, %v2276
    %v2283 = vor.u32 %v2281, %v2282
    %v2284 = vshll.u32 2131351028, %v2275
    %v2285 = vshrl.u32 2102212464, %v2276
    %v2286 = vor.u32 %v2284, %v2285
    %v2287 = vshll.u32 2102212464, %v2275
    %v2288 = vshrl.u32 920167782, %v2276
    %v2289 = vor.u32 %v2287, %v2288
    %v2290 = vshll.u32 920167782, %v2275
    %v2291 = vshrl.u32 1326507024, %v2276
    %v2292 = vor.u32 %v2290, %v2291
    %vm2293 = vcmp.lt.s32.totalorder %v2274, 1
    %vm2294 = vcmp.lt.s32.totalorder %v2274, 2
    %vm2295 = vcmp.lt.s32.totalorder %v2274, 3
    %vm2296 = vcmp.lt.s32.totalorder %v2274, 4
    %v2297 = vsel %vm2293, %v2277, %v2280
    %v2298 = vsel %vm2296, %v2286, 2102212464
    %v2299 = vsel %vm2295, %v2283, %v2298
    %v2300 = vsel %vm2294, %v2297, %v2299
    %v2301 = vsel %vm2293, %v2280, %v2283
    %v2302 = vsel %vm2296, %v2289, 920167782
    %v2303 = vsel %vm2295, %v2286, %v2302
    %v2304 = vsel %vm2294, %v2301, %v2303
    %v2305 = vsel %vm2293, %v2283, %v2286
    %v2306 = vsel %vm2296, %v2292, 1326507024
    %v2307 = vsel %vm2295, %v2289, %v2306
    %v2308 = vsel %vm2294, %v2305, %v2307
    %v2309 = vshll.u32 %v2269, 8
    %v2310 = vand.u32 %v2309, 65535
    %v2311 = vshrl.u32 %v2309, 16
    %v2312 = vand.u32 %v2308, 65535
    %v2313 = vshrl.u32 %v2308, 16
    %v2314 = vmul.u32 %v2310, %v2312
    %v2315 = vmul.u32 %v2310, %v2313
    %v2316 = vmul.u32 %v2311, %v2312
    %v2317 = vmul.u32 %v2311, %v2313
    %v2318 = vshll.u32 %v2315, 16
    %v2319 = vshrl.u32 %v2315, 16
    %v2320 = vshll.u32 %v2316, 16
    %v2321 = vshrl.u32 %v2316, 16
    %vm2322 = vc.u32 %v2314, %v2318
    %v2323 = vsel %vm2322, 1, 0
    %v2324 = vadd.s32 %v2314, %v2318
    %v2325 = vadd.s32 %v2317, %v2323
    %vm2326 = vc.u32 %v2324, %v2320
    %v2327 = vsel %vm2326, 1, 0
    %v2328 = vadd.s32 %v2324, %v2320
    %v2329 = vadd.s32 %v2325, %v2327
    %v2330 = vadd.s32 %v2329, %v2319
    %v2331 = vadd.s32 %v2330, %v2321
    %v2332 = vand.u32 %v2309, 65535
    %v2333 = vshrl.u32 %v2309, 16
    %v2334 = vand.u32 %v2304, 65535
    %v2335 = vshrl.u32 %v2304, 16
    %v2336 = vmul.u32 %v2332, %v2334
    %v2337 = vmul.u32 %v2332, %v2335
    %v2338 = vmul.u32 %v2333, %v2334
    %v2339 = vmul.u32 %v2333, %v2335
    %v2340 = vshll.u32 %v2337, 16
    %v2341 = vshrl.u32 %v2337, 16
    %v2342 = vshll.u32 %v2338, 16
    %v2343 = vshrl.u32 %v2338, 16
    %vm2344 = vc.u32 %v2336, %v2340
    %v2345 = vsel %vm2344, 1, 0
    %v2346 = vadd.s32 %v2336, %v2340
    %v2347 = vadd.s32 %v2339, %v2345
    %vm2348 = vc.u32 %v2346, %v2342
    %v2349 = vsel %vm2348, 1, 0
    %v2350 = vadd.s32 %v2346, %v2342
    %v2351 = vadd.s32 %v2347, %v2349
    %v2352 = vadd.s32 %v2351, %v2341
    %v2353 = vadd.s32 %v2352, %v2343
    %v2354 = vmul.u32 %v2309, %v2300
    %v2355 = vadd.s32 %v2331, %v2350
    %vm2356 = vc.u32 %v2331, %v2350
    %v2357 = vadd.s32 %v2353, 1
    %v2358 = vsel %vm2356, %v2357, %v2353
    %v2359 = vadd.s32 %v2354, %v2358
    %v2360 = vadd.s32 %v2359, 536870912
    %v2361 = vshrl.u32 %v2360, 30
    %v2362 = vshll.u32 %v2361, 30
    %v2363 = vsub.s32 %v2359, %v2362
    %vm2364 = vcmp.lt.s32.totalorder %v2363, 0
    %v2365 = vsub.s32 0, %v2363
    %v2366 = vsel %vm2364, %v2365, %v2363
    %v2367 = vclz %v2366
    %v2368 = vsub.s32 %v2367, 2
    %vm2369 = vcmp.gt.s32.totalorder 0, %v2368
    %v2370 = vsel %vm2369, 0, %v2368
    %v2371 = vsub.s32 32, %v2370
    %v2372 = vshll.u32 %v2363, %v2370
    %v2373 = vshrl.u32 %v2355, %v2371
    %v2374 = vor.u32 %v2372, %v2373
    %v2375 = vsub.s32 4294967266, %v2370
    %v2376 = vadd.s32 %v2375, 127
    %v2377 = vshll.u32 %v2376, 23
    %v2378 = vor.u32 4788187, %v2377
    %v2379 = vand.u32 2147483647, %v2378
    %v2381 = vcvt.s32.f32 %v2374
    %v2382 = vmul.f32 %v2381, %v2379
    %v2383 = vxor.u32 %v2382, 2147483648
    %v2384 = vsel %vm2263, %v2383, %v2382
    %v2385 = vsub.s32 4, %v2361
    %v2386 = vsel %vm2263, %v2385, %v2361
    %v2387 = vsel %vm2262, %v1791, %v2384
    %v2388 = vsel %vm2262, 0, %v2386
    %v2389 = vmul.f32 %v2387, %v2387
    %v2390 = vmul.f32 %v2389, -0.001358992
    %v2391 = vadd.f32 %v2390, 0.041655596
    %v2392 = vmul.f32 %v2389, %v2391
    %v2393 = vadd.f32 %v2392, -0.4999988
    %v2394 = vmul.f32 %v2389, %v2393
    %v2395 = vadd.f32 1.0, %v2394
    %v2396 = vmul.f32 %v2387, %v2387
    %v2397 = vmul.f32 %v2396, -0.00019511016
    %v2398 = vadd.f32 %v2397, 0.008332121
    %v2399 = vmul.f32 %v2396, %v2398
    %v2400 = vadd.f32 %v2399, -0.16666654
    %v2401 = vmul.f32 %v2396, %v2400
    %v2402 = vadd.f32 %v2401, 1.0
    %v2403 = vmul.f32 %v2402, %v2387
    %vm2404 = vweird.f32 %v1791
    %v2405 = vadd.s32 %v2388, 3
    %v2406 = vand.u32 %v2405, 3
    %vm2407 = vcmp.lt.s32.totalorder %v2406, 2
    %vm2408 = vcmp.eq.s32.totalorder %v2406, 0
    %v2409 = vxor.u32 %v2403, 2147483648
    %v2410 = vsel %vm2408, %v2395, %v2409
    %vm2411 = vcmp.eq.s32.totalorder %v2406, 2
    %v2412 = vxor.u32 %v2395, 2147483648
    %v2413 = vsel %vm2411, %v2412, %v2403
    %v2414 = vsel %vm2407, %v2410, %v2413
    %v2415 = vsel %vm2404, nan, %v2414
    %v2416 = vand.u32 2147483647, %v1792
    %vm2417 = vcmp.le.f32.partialorder %v2416, 0.7853982
    %vm2418 = vcmp.lt.s32.totalorder %v1792, 0
    %v2419 = vand.u32 %v1792, 2139095040
    %v2420 = vshrl.u32 %v2419, 23
    %v2421 = vsub.s32 %v2420, 127
    %v2422 = vand.u32 2147483647, %v1792
    %v2423 = vand.u32 %v2422, 8388607
    %v2424 = vor.u32 %v2423, 8388608
    %v2425 = vsub.s32 0, %v2424
    %v2426 = vadd.s32 %v2421, 1
    %vm2427 = vcmp.gt.s32.totalorder %v2426, 0
    %v2428 = vsel %vm2427, %v2426, 0
    %v2429 = vshrl.u32 %v2428, 5
    %v2430 = vand.u32 %v2428, 31
    %v2431 = vsub.s32 32, %v2430
    %v2432 = vshrl.u32 683565275, %v2431
    %v2433 = vshll.u32 683565275, %v2430
    %v2434 = vshrl.u32 2475754826, %v2431
    %v2435 = vor.u32 %v2433, %v2434
    %v2436 = vshll.u32 2475754826, %v2430
    %v2437 = vshrl.u32 2131351028, %v2431
    %v2438 = vor.u32 %v2436, %v2437
    %v2439 = vshll.u32 2131351028, %v2430
    %v2440 = vshrl.u32 2102212464, %v2431
    %v2441 = vor.u32 %v2439, %v2440
    %v2442 = vshll.u32 2102212464, %v2430
    %v2443 = vshrl.u32 920167782, %v2431
    %v2444 = vor.u32 %v2442, %v2443
    %v2445 = vshll.u32 920167782, %v2430
    %v2446 = vshrl.u32 1326507024, %v2431
    %v2447 = vor.u32 %v2445, %v2446
    %vm2448 = vcmp.lt.s32.totalorder %v2429, 1
    %vm2449 = vcmp.lt.s32.totalorder %v2429, 2
    %vm2450 = vcmp.lt.s32.totalorder %v2429, 3
    %vm2451 = vcmp.lt.s32.totalorder %v2429, 4
    %v2452 = vsel %vm2448, %v2432, %v2435
    %v2453 = vsel %vm2451, %v2441, 2102212464
    %v2454 = vsel %vm2450, %v2438, %v2453
    %v2455 = vsel %vm2449, %v2452, %v2454
    %v2456 = vsel %vm2448, %v2435, %v2438
    %v2457 = vsel %vm2451, %v2444, 920167782
    %v2458 = vsel %vm2450, %v2441, %v2457
    %v2459 = vsel %vm2449, %v2456, %v2458
    %v2460 = vsel %vm2448, %v2438, %v2441
    %v2461 = vsel %vm2451, %v2447, 1326507024
    %v2462 = vsel %vm2450, %v2444, %v2461
    %v2463 = vsel %vm2449, %v2460, %v2462
    %v2464 = vshll.u32 %v2424, 8
    %v2465 = vand.u32 %v2464, 65535
    %v2466 = vshrl.u32 %v2464, 16
    %v2467 = vand.u32 %v2463, 65535
    %v2468 = vshrl.u32 %v2463, 16
    %v2469 = vmul.u32 %v2465, %v2467
    %v2470 = vmul.u32 %v2465, %v2468
    %v2471 = vmul.u32 %v2466, %v2467
    %v2472 = vmul.u32 %v2466, %v2468
    %v2473 = vshll.u32 %v2470, 16
    %v2474 = vshrl.u32 %v2470, 16
    %v2475 = vshll.u32 %v2471, 16
    %v2476 = vshrl.u32 %v2471, 16
    %vm2477 = vc.u32 %v2469, %v2473
    %v2478 = vsel %vm2477, 1, 0
    %v2479 = vadd.s32 %v2469, %v2473
    %v2480 = vadd.s32 %v2472, %v2478
    %vm2481 = vc.u32 %v2479, %v2475
    %v2482 = vsel %vm2481, 1, 0
    %v2483 = vadd.s32 %v2479, %v2475
    %v2484 = vadd.s32 %v2480, %v2482
    %v2485 = vadd.s32 %v2484, %v2474
    %v2486 = vadd.s32 %v2485, %v2476
    %v2487 = vand.u32 %v2464, 65535
    %v2488 = vshrl.u32 %v2464, 16
    %v2489 = vand.u32 %v2459, 65535
    %v2490 = vshrl.u32 %v2459, 16
    %v2491 = vmul.u32 %v2487, %v2489
    %v2492 = vmul.u32 %v2487, %v2490
    %v2493 = vmul.u32 %v2488, %v2489
    %v2494 = vmul.u32 %v2488, %v2490
    %v2495 = vshll.u32 %v2492, 16
    %v2496 = vshrl.u32 %v2492, 16
    %v2497 = vshll.u32 %v2493, 16
    %v2498 = vshrl.u32 %v2493, 16
    %vm2499 = vc.u32 %v2491, %v2495
    %v2500 = vsel %vm2499, 1, 0
    %v2501 = vadd.s32 %v2491, %v2495
    %v2502 = vadd.s32 %v2494, %v2500
    %vm2503 = vc.u32 %v2501, %v2497
    %v2504 = vsel %vm2503, 1, 0
    %v2505 = vadd.s32 %v2501, %v2497
    %v2506 = vadd.s32 %v2502, %v2504
    %v2507 = vadd.s32 %v2506, %v2496
    %v2508 = vadd.s32 %v2507, %v2498
    %v2509 = vmul.u32 %v2464, %v2455
    %v2510 = vadd.s32 %v2486, %v2505
    %vm2511 = vc.u32 %v2486, %v2505
    %v2512 = vadd.s32 %v2508, 1
    %v2513 = vsel %vm2511, %v2512, %v2508
    %v2514 = vadd.s32 %v2509, %v2513
    %v2515 = vadd.s32 %v2514, 536870912
    %v2516 = vshrl.u32 %v2515, 30
    %v2517 = vshll.u32 %v2516, 30
    %v2518 = vsub.s32 %v2514, %v2517
    %vm2519 = vcmp.lt.s32.totalorder %v2518, 0
    %v2520 = vsub.s32 0, %v2518
    %v2521 = vsel %vm2519, %v2520, %v2518
    %v2522 = vclz %v2521
    %v2523 = vsub.s32 %v2522, 2
    %vm2524 = vcmp.gt.s32.totalorder 0, %v2523
    %v2525 = vsel %vm2524, 0, %v2523
    %v2526 = vsub.s32 32, %v2525
    %v2527 = vshll.u32 %v2518, %v2525
    %v2528 = vshrl.u32 %v2510, %v2526
    %v2529 = vor.u32 %v2527, %v2528
    %v2530 = vsub.s32 4294967266, %v2525
    %v2531 = vadd.s32 %v2530, 127
    %v2532 = vshll.u32 %v2531, 23
    %v2533 = vor.u32 4788187, %v2532
    %v2534 = vand.u32 2147483647, %v2533
    %v2536 = vcvt.s32.f32 %v2529
    %v2537 = vmul.f32 %v2536, %v2534
    %v2538 = vxor.u32 %v2537, 2147483648
    %v2539 = vsel %vm2418, %v2538, %v2537
    %v2540 = vsub.s32 4, %v2516
    %v2541 = vsel %vm2418, %v2540, %v2516
    %v2542 = vsel %vm2417, %v1792, %v2539
    %v2543 = vsel %vm2417, 0, %v2541
    %v2544 = vmul.f32 %v2542, %v2542
    %v2545 = vmul.f32 %v2544, -0.001358992
    %v2546 = vadd.f32 %v2545, 0.041655596
    %v2547 = vmul.f32 %v2544, %v2546
    %v2548 = vadd.f32 %v2547, -0.4999988
    %v2549 = vmul.f32 %v2544, %v2548
    %v2550 = vadd.f32 1.0, %v2549
    %v2551 = vmul.f32 %v2542, %v2542
    %v2552 = vmul.f32 %v2551, -0.00019511016
    %v2553 = vadd.f32 %v2552, 0.008332121
    %v2554 = vmul.f32 %v2551, %v2553
    %v2555 = vadd.f32 %v2554, -0.16666654
    %v2556 = vmul.f32 %v2551, %v2555
    %v2557 = vadd.f32 %v2556, 1.0
    %v2558 = vmul.f32 %v2557, %v2542
    %vm2559 = vweird.f32 %v1792
    %v2560 = vadd.s32 %v2543, 3
    %v2561 = vand.u32 %v2560, 3
    %vm2562 = vcmp.lt.s32.totalorder %v2561, 2
    %vm2563 = vcmp.eq.s32.totalorder %v2561, 0
    %v2564 = vxor.u32 %v2558, 2147483648
    %v2565 = vsel %vm2563, %v2550, %v2564
    %vm2566 = vcmp.eq.s32.totalorder %v2561, 2
    %v2567 = vxor.u32 %v2550, 2147483648
    %v2568 = vsel %vm2566, %v2567, %v2558
    %v2569 = vsel %vm2562, %v2565, %v2568
    %v2570 = vsel %vm2559, nan, %v2569
    %v2571 = vand.u32 2147483647, %v1793
    %vm2572 = vcmp.le.f32.partialorder %v2571, 0.7853982
    %vm2573 = vcmp.lt.s32.totalorder %v1793, 0
    %v2574 = vand.u32 %v1793, 2139095040
    %v2575 = vshrl.u32 %v2574, 23
    %v2576 = vsub.s32 %v2575, 127
    %v2577 = vand.u32 2147483647, %v1793
    %v2578 = vand.u32 %v2577, 8388607
    %v2579 = vor.u32 %v2578, 8388608
    %v2580 = vsub.s32 0, %v2579
    %v2581 = vadd.s32 %v2576, 1
    %vm2582 = vcmp.gt.s32.totalorder %v2581, 0
    %v2583 = vsel %vm2582, %v2581, 0
    %v2584 = vshrl.u32 %v2583, 5
    %v2585 = vand.u32 %v2583, 31
    %v2586 = vsub.s32 32, %v2585
    %v2587 = vshrl.u32 683565275, %v2586
    %v2588 = vshll.u32 683565275, %v2585
    %v2589 = vshrl.u32 2475754826, %v2586
    %v2590 = vor.u32 %v2588, %v2589
    %v2591 = vshll.u32 2475754826, %v2585
    %v2592 = vshrl.u32 2131351028, %v2586
    %v2593 = vor.u32 %v2591, %v2592
    %v2594 = vshll.u32 2131351028, %v2585
    %v2595 = vshrl.u32 2102212464, %v2586
    %v2596 = vor.u32 %v2594, %v2595
    %v2597 = vshll.u32 2102212464, %v2585
    %v2598 = vshrl.u32 920167782, %v2586
    %v2599 = vor.u32 %v2597, %v2598
    %v2600 = vshll.u32 920167782, %v2585
    %v2601 = vshrl.u32 1326507024, %v2586
    %v2602 = vor.u32 %v2600, %v2601
    %vm2603 = vcmp.lt.s32.totalorder %v2584, 1
    %vm2604 = vcmp.lt.s32.totalorder %v2584, 2
    %vm2605 = vcmp.lt.s32.totalorder %v2584, 3
    %vm2606 = vcmp.lt.s32.totalorder %v2584, 4
    %v2607 = vsel %vm2603, %v2587, %v2590
    %v2608 = vsel %vm2606, %v2596, 2102212464
    %v2609 = vsel %vm2605, %v2593, %v2608
    %v2610 = vsel %vm2604, %v2607, %v2609
    %v2611 = vsel %vm2603, %v2590, %v2593
    %v2612 = vsel %vm2606, %v2599, 920167782
    %v2613 = vsel %vm2605, %v2596, %v2612
    %v2614 = vsel %vm2604, %v2611, %v2613
    %v2615 = vsel %vm2603, %v2593, %v2596
    %v2616 = vsel %vm2606, %v2602, 1326507024
    %v2617 = vsel %vm2605, %v2599, %v2616
    %v2618 = vsel %vm2604, %v2615, %v2617
    %v2619 = vshll.u32 %v2579, 8
    %v2620 = vand.u32 %v2619, 65535
    %v2621 = vshrl.u32 %v2619, 16
    %v2622 = vand.u32 %v2618, 65535
    %v2623 = vshrl.u32 %v2618, 16
    %v2624 = vmul.u32 %v2620, %v2622
    %v2625 = vmul.u32 %v2620, %v2623
    %v2626 = vmul.u32 %v2621, %v2622
    %v2627 = vmul.u32 %v2621, %v2623
    %v2628 = vshll.u32 %v2625, 16
    %v2629 = vshrl.u32 %v2625, 16
    %v2630 = vshll.u32 %v2626, 16
    %v2631 = vshrl.u32 %v2626, 16
    %vm2632 = vc.u32 %v2624, %v2628
    %v2633 = vsel %vm2632, 1, 0
    %v2634 = vadd.s32 %v2624, %v2628
    %v2635 = vadd.s32 %v2627, %v2633
    %vm2636 = vc.u32 %v2634, %v2630
    %v2637 = vsel %vm2636, 1, 0
    %v2638 = vadd.s32 %v2634, %v2630
    %v2639 = vadd.s32 %v2635, %v2637
    %v2640 = vadd.s32 %v2639, %v2629
    %v2641 = vadd.s32 %v2640, %v2631
    %v2642 = vand.u32 %v2619, 65535
    %v2643 = vshrl.u32 %v2619, 16
    %v2644 = vand.u32 %v2614, 65535
    %v2645 = vshrl.u32 %v2614, 16
    %v2646 = vmul.u32 %v2642, %v2644
    %v2647 = vmul.u32 %v2642, %v2645
    %v2648 = vmul.u32 %v2643, %v2644
    %v2649 = vmul.u32 %v2643, %v2645
    %v2650 = vshll.u32 %v2647, 16
    %v2651 = vshrl.u32 %v2647, 16
    %v2652 = vshll.u32 %v2648, 16
    %v2653 = vshrl.u32 %v2648, 16
    %vm2654 = vc.u32 %v2646, %v2650
    %v2655 = vsel %vm2654, 1, 0
    %v2656 = vadd.s32 %v2646, %v2650
    %v2657 = vadd.s32 %v2649, %v2655
    %vm2658 = vc.u32 %v2656, %v2652
    %v2659 = vsel %vm2658, 1, 0
    %v2660 = vadd.s32 %v2656, %v2652
    %v2661 = vadd.s32 %v2657, %v2659
    %v2662 = vadd.s32 %v2661, %v2651
    %v2663 = vadd.s32 %v2662, %v2653
    %v2664 = vmul.u32 %v2619, %v2610
    %v2665 = vadd.s32 %v2641, %v2660
    %vm2666 = vc.u32 %v2641, %v2660
    %v2667 = vadd.s32 %v2663, 1
    %v2668 = vsel %vm2666, %v2667, %v2663
    %v2669 = vadd.s32 %v2664, %v2668
    %v2670 = vadd.s32 %v2669, 536870912
    %v2671 = vshrl.u32 %v2670, 30
    %v2672 = vshll.u32 %v2671, 30
    %v2673 = vsub.s32 %v2669, %v2672
    %vm2674 = vcmp.lt.s32.totalorder %v2673, 0
    %v2675 = vsub.s32 0, %v2673
    %v2676 = vsel %vm2674, %v2675, %v2673
    %v2677 = vclz %v2676
    %v2678 = vsub.s32 %v2677, 2
    %vm2679 = vcmp.gt.s32.totalorder 0, %v2678
    %v2680 = vsel %vm2679, 0, %v2678
    %v2681 = vsub.s32 32, %v2680
    %v2682 = vshll.u32 %v2673, %v2680
    %v2683 = vshrl.u32 %v2665, %v2681
    %v2684 = vor.u32 %v2682, %v2683
    %v2685 = vsub.s32 4294967266, %v2680
    %v2686 = vadd.s32 %v2685, 127
    %v2687 = vshll.u32 %v2686, 23
    %v2688 = vor.u32 4788187, %v2687
    %v2689 = vand.u32 2147483647, %v2688
    %v2691 = vcvt.s32.f32 %v2684
    %v2692 = vmul.f32 %v2691, %v2689
    %v2693 = vxor.u32 %v2692, 2147483648
    %v2694 = vsel %vm2573, %v2693, %v2692
    %v2695 = vsub.s32 4, %v2671
    %v2696 = vsel %vm2573, %v2695, %v2671
    %v2697 = vsel %vm2572, %v1793, %v2694
    %v2698 = vsel %vm2572, 0, %v2696
    %v2699 = vmul.f32 %v2697, %v2697
    %v2700 = vmul.f32 %v2699, -0.001358992
    %v2701 = vadd.f32 %v2700, 0.041655596
    %v2702 = vmul.f32 %v2699, %v2701
    %v2703 = vadd.f32 %v2702, -0.4999988
    %v2704 = vmul.f32 %v2699, %v2703
    %v2705 = vadd.f32 1.0, %v2704
    %v2706 = vmul.f32 %v2697, %v2697
    %v2707 = vmul.f32 %v2706, -0.00019511016
    %v2708 = vadd.f32 %v2707, 0.008332121
    %v2709 = vmul.f32 %v2706, %v2708
    %v2710 = vadd.f32 %v2709, -0.16666654
    %v2711 = vmul.f32 %v2706, %v2710
    %v2712 = vadd.f32 %v2711, 1.0
    %v2713 = vmul.f32 %v2712, %v2697
    %vm2714 = vweird.f32 %v1793
    %v2715 = vadd.s32 %v2698, 3
    %v2716 = vand.u32 %v2715, 3
    %vm2717 = vcmp.lt.s32.totalorder %v2716, 2
    %vm2718 = vcmp.eq.s32.totalorder %v2716, 0
    %v2719 = vxor.u32 %v2713, 2147483648
    %v2720 = vsel %vm2718, %v2705, %v2719
    %vm2721 = vcmp.eq.s32.totalorder %v2716, 2
    %v2722 = vxor.u32 %v2705, 2147483648
    %v2723 = vsel %vm2721, %v2722, %v2713
    %v2724 = vsel %vm2717, %v2720, %v2723
    %v2725 = vsel %vm2714, nan, %v2724
    %v2726 = vand.u32 2147483647, %v1794
    %vm2727 = vcmp.le.f32.partialorder %v2726, 0.7853982
    %vm2728 = vcmp.lt.s32.totalorder %v1794, 0
    %v2729 = vand.u32 %v1794, 2139095040
    %v2730 = vshrl.u32 %v2729, 23
    %v2731 = vsub.s32 %v2730, 127
    %v2732 = vand.u32 2147483647, %v1794
    %v2733 = vand.u32 %v2732, 8388607
    %v2734 = vor.u32 %v2733, 8388608
    %v2735 = vsub.s32 0, %v2734
    %v2736 = vadd.s32 %v2731, 1
    %vm2737 = vcmp.gt.s32.totalorder %v2736, 0
    %v2738 = vsel %vm2737, %v2736, 0
    %v2739 = vshrl.u32 %v2738, 5
    %v2740 = vand.u32 %v2738, 31
    %v2741 = vsub.s32 32, %v2740
    %v2742 = vshrl.u32 683565275, %v2741
    %v2743 = vshll.u32 683565275, %v2740
    %v2744 = vshrl.u32 2475754826, %v2741
    %v2745 = vor.u32 %v2743, %v2744
    %v2746 = vshll.u32 2475754826, %v2740
    %v2747 = vshrl.u32 2131351028, %v2741
    %v2748 = vor.u32 %v2746, %v2747
    %v2749 = vshll.u32 2131351028, %v2740
    %v2750 = vshrl.u32 2102212464, %v2741
    %v2751 = vor.u32 %v2749, %v2750
    %v2752 = vshll.u32 2102212464, %v2740
    %v2753 = vshrl.u32 920167782, %v2741
    %v2754 = vor.u32 %v2752, %v2753
    %v2755 = vshll.u32 920167782, %v2740
    %v2756 = vshrl.u32 1326507024, %v2741
    %v2757 = vor.u32 %v2755, %v2756
    %vm2758 = vcmp.lt.s32.totalorder %v2739, 1
    %vm2759 = vcmp.lt.s32.totalorder %v2739, 2
    %vm2760 = vcmp.lt.s32.totalorder %v2739, 3
    %vm2761 = vcmp.lt.s32.totalorder %v2739, 4
    %v2762 = vsel %vm2758, %v2742, %v2745
    %v2763 = vsel %vm2761, %v2751, 2102212464
    %v2764 = vsel %vm2760, %v2748, %v2763
    %v2765 = vsel %vm2759, %v2762, %v2764
    %v2766 = vsel %vm2758, %v2745, %v2748
    %v2767 = vsel %vm2761, %v2754, 920167782
    %v2768 = vsel %vm2760, %v2751, %v2767
    %v2769 = vsel %vm2759, %v2766, %v2768
    %v2770 = vsel %vm2758, %v2748, %v2751
    %v2771 = vsel %vm2761, %v2757, 1326507024
    %v2772 = vsel %vm2760, %v2754, %v2771
    %v2773 = vsel %vm2759, %v2770, %v2772
    %v2774 = vshll.u32 %v2734, 8
    %v2775 = vand.u32 %v2774, 65535
    %v2776 = vshrl.u32 %v2774, 16
    %v2777 = vand.u32 %v2773, 65535
    %v2778 = vshrl.u32 %v2773, 16
    %v2779 = vmul.u32 %v2775, %v2777
    %v2780 = vmul.u32 %v2775, %v2778
    %v2781 = vmul.u32 %v2776, %v2777
    %v2782 = vmul.u32 %v2776, %v2778
    %v2783 = vshll.u32 %v2780, 16
    %v2784 = vshrl.u32 %v2780, 16
    %v2785 = vshll.u32 %v2781, 16
    %v2786 = vshrl.u32 %v2781, 16
    %vm2787 = vc.u32 %v2779, %v2783
    %v2788 = vsel %vm2787, 1, 0
    %v2789 = vadd.s32 %v2779, %v2783
    %v2790 = vadd.s32 %v2782, %v2788
    %vm2791 = vc.u32 %v2789, %v2785
    %v2792 = vsel %vm2791, 1, 0
    %v2793 = vadd.s32 %v2789, %v2785
    %v2794 = vadd.s32 %v2790, %v2792
    %v2795 = vadd.s32 %v2794, %v2784
    %v2796 = vadd.s32 %v2795, %v2786
    %v2797 = vand.u32 %v2774, 65535
    %v2798 = vshrl.u32 %v2774, 16
    %v2799 = vand.u32 %v2769, 65535
    %v2800 = vshrl.u32 %v2769, 16
    %v2801 = vmul.u32 %v2797, %v2799
    %v2802 = vmul.u32 %v2797, %v2800
    %v2803 = vmul.u32 %v2798, %v2799
    %v2804 = vmul.u32 %v2798, %v2800
    %v2805 = vshll.u32 %v2802, 16
    %v2806 = vshrl.u32 %v2802, 16
    %v2807 = vshll.u32 %v2803, 16
    %v2808 = vshrl.u32 %v2803, 16
    %vm2809 = vc.u32 %v2801, %v2805
    %v2810 = vsel %vm2809, 1, 0
    %v2811 = vadd.s32 %v2801, %v2805
    %v2812 = vadd.s32 %v2804, %v2810
    %vm2813 = vc.u32 %v2811, %v2807
    %v2814 = vsel %vm2813, 1, 0
    %v2815 = vadd.s32 %v2811, %v2807
    %v2816 = vadd.s32 %v2812, %v2814
    %v2817 = vadd.s32 %v2816, %v2806
    %v2818 = vadd.s32 %v2817, %v2808
    %v2819 = vmul.u32 %v2774, %v2765
    %v2820 = vadd.s32 %v2796, %v2815
    %vm2821 = vc.u32 %v2796, %v2815
    %v2822 = vadd.s32 %v2818, 1
    %v2823 = vsel %vm2821, %v2822, %v2818
    %v2824 = vadd.s32 %v2819, %v2823
    %v2825 = vadd.s32 %v2824, 536870912
    %v2826 = vshrl.u32 %v2825, 30
    %v2827 = vshll.u32 %v2826, 30
    %v2828 = vsub.s32 %v2824, %v2827
    %vm2829 = vcmp.lt.s32.totalorder %v2828, 0
    %v2830 = vsub.s32 0, %v2828
    %v2831 = vsel %vm2829, %v2830, %v2828
    %v2832 = vclz %v2831
    %v2833 = vsub.s32 %v2832, 2
    %vm2834 = vcmp.gt.s32.totalorder 0, %v2833
    %v2835 = vsel %vm2834, 0, %v2833
    %v2836 = vsub.s32 32, %v2835
    %v2837 = vshll.u32 %v2828, %v2835
    %v2838 = vshrl.u32 %v2820, %v2836
    %v2839 = vor.u32 %v2837, %v2838
    %v2840 = vsub.s32 4294967266, %v2835
    %v2841 = vadd.s32 %v2840, 127
    %v2842 = vshll.u32 %v2841, 23
    %v2843 = vor.u32 4788187, %v2842
    %v2844 = vand.u32 2147483647, %v2843
    %v2846 = vcvt.s32.f32 %v2839
    %v2847 = vmul.f32 %v2846, %v2844
    %v2848 = vxor.u32 %v2847, 2147483648
    %v2849 = vsel %vm2728, %v2848, %v2847
    %v2850 = vsub.s32 4, %v2826
    %v2851 = vsel %vm2728, %v2850, %v2826
    %v2852 = vsel %vm2727, %v1794, %v2849
    %v2853 = vsel %vm2727, 0, %v2851
    %v2854 = vmul.f32 %v2852, %v2852
    %v2855 = vmul.f32 %v2854, -0.001358992
    %v2856 = vadd.f32 %v2855, 0.041655596
    %v2857 = vmul.f32 %v2854, %v2856
    %v2858 = vadd.f32 %v2857, -0.4999988
    %v2859 = vmul.f32 %v2854, %v2858
    %v2860 = vadd.f32 1.0, %v2859
    %v2861 = vmul.f32 %v2852, %v2852
    %v2862 = vmul.f32 %v2861, -0.00019511016
    %v2863 = vadd.f32 %v2862, 0.008332121
    %v2864 = vmul.f32 %v2861, %v2863
    %v2865 = vadd.f32 %v2864, -0.16666654
    %v2866 = vmul.f32 %v2861, %v2865
    %v2867 = vadd.f32 %v2866, 1.0
    %v2868 = vmul.f32 %v2867, %v2852
    %vm2869 = vweird.f32 %v1794
    %v2870 = vadd.s32 %v2853, 3
    %v2871 = vand.u32 %v2870, 3
    %vm2872 = vcmp.lt.s32.totalorder %v2871, 2
    %vm2873 = vcmp.eq.s32.totalorder %v2871, 0
    %v2874 = vxor.u32 %v2868, 2147483648
    %v2875 = vsel %vm2873, %v2860, %v2874
    %vm2876 = vcmp.eq.s32.totalorder %v2871, 2
    %v2877 = vxor.u32 %v2860, 2147483648
    %v2878 = vsel %vm2876, %v2877, %v2868
    %v2879 = vsel %vm2872, %v2875, %v2878
    %v2880 = vsel %vm2869, nan, %v2879
    %v2881 = vand.u32 2147483647, %v1795
    %vm2882 = vcmp.le.f32.partialorder %v2881, 0.7853982
    %vm2883 = vcmp.lt.s32.totalorder %v1795, 0
    %v2884 = vand.u32 %v1795, 2139095040
    %v2885 = vshrl.u32 %v2884, 23
    %v2886 = vsub.s32 %v2885, 127
    %v2887 = vand.u32 2147483647, %v1795
    %v2888 = vand.u32 %v2887, 8388607
    %v2889 = vor.u32 %v2888, 8388608
    %v2890 = vsub.s32 0, %v2889
    %v2891 = vadd.s32 %v2886, 1
    %vm2892 = vcmp.gt.s32.totalorder %v2891, 0
    %v2893 = vsel %vm2892, %v2891, 0
    %v2894 = vshrl.u32 %v2893, 5
    %v2895 = vand.u32 %v2893, 31
    %v2896 = vsub.s32 32, %v2895
    %v2897 = vshrl.u32 683565275, %v2896
    %v2898 = vshll.u32 683565275, %v2895
    %v2899 = vshrl.u32 2475754826, %v2896
    %v2900 = vor.u32 %v2898, %v2899
    %v2901 = vshll.u32 2475754826, %v2895
    %v2902 = vshrl.u32 2131351028, %v2896
    %v2903 = vor.u32 %v2901, %v2902
    %v2904 = vshll.u32 2131351028, %v2895
    %v2905 = vshrl.u32 2102212464, %v2896
    %v2906 = vor.u32 %v2904, %v2905
    %v2907 = vshll.u32 2102212464, %v2895
    %v2908 = vshrl.u32 920167782, %v2896
    %v2909 = vor.u32 %v2907, %v2908
    %v2910 = vshll.u32 920167782, %v2895
    %v2911 = vshrl.u32 1326507024, %v2896
    %v2912 = vor.u32 %v2910, %v2911
    %vm2913 = vcmp.lt.s32.totalorder %v2894, 1
    %vm2914 = vcmp.lt.s32.totalorder %v2894, 2
    %vm2915 = vcmp.lt.s32.totalorder %v2894, 3
    %vm2916 = vcmp.lt.s32.totalorder %v2894, 4
    %v2917 = vsel %vm2913, %v2897, %v2900
    %v2918 = vsel %vm2916, %v2906, 2102212464
    %v2919 = vsel %vm2915, %v2903, %v2918
    %v2920 = vsel %vm2914, %v2917, %v2919
    %v2921 = vsel %vm2913, %v2900, %v2903
    %v2922 = vsel %vm2916, %v2909, 920167782
    %v2923 = vsel %vm2915, %v2906, %v2922
    %v2924 = vsel %vm2914, %v2921, %v2923
    %v2925 = vsel %vm2913, %v2903, %v2906
    %v2926 = vsel %vm2916, %v2912, 1326507024
    %v2927 = vsel %vm2915, %v2909, %v2926
    %v2928 = vsel %vm2914, %v2925, %v2927
    %v2929 = vshll.u32 %v2889, 8
    %v2930 = vand.u32 %v2929, 65535
    %v2931 = vshrl.u32 %v2929, 16
    %v2932 = vand.u32 %v2928, 65535
    %v2933 = vshrl.u32 %v2928, 16
    %v2934 = vmul.u32 %v2930, %v2932
    %v2935 = vmul.u32 %v2930, %v2933
    %v2936 = vmul.u32 %v2931, %v2932
    %v2937 = vmul.u32 %v2931, %v2933
    %v2938 = vshll.u32 %v2935, 16
    %v2939 = vshrl.u32 %v2935, 16
    %v2940 = vshll.u32 %v2936, 16
    %v2941 = vshrl.u32 %v2936, 16
    %vm2942 = vc.u32 %v2934, %v2938
    %v2943 = vsel %vm2942, 1, 0
    %v2944 = vadd.s32 %v2934, %v2938
    %v2945 = vadd.s32 %v2937, %v2943
    %vm2946 = vc.u32 %v2944, %v2940
    %v2947 = vsel %vm2946, 1, 0
    %v2948 = vadd.s32 %v2944, %v2940
    %v2949 = vadd.s32 %v2945, %v2947
    %v2950 = vadd.s32 %v2949, %v2939
    %v2951 = vadd.s32 %v2950, %v2941
    %v2952 = vand.u32 %v2929, 65535
    %v2953 = vshrl.u32 %v2929, 16
    %v2954 = vand.u32 %v2924, 65535
    %v2955 = vshrl.u32 %v2924, 16
    %v2956 = vmul.u32 %v2952, %v2954
    %v2957 = vmul.u32 %v2952, %v2955
    %v2958 = vmul.u32 %v2953, %v2954
    %v2959 = vmul.u32 %v2953, %v2955
    %v2960 = vshll.u32 %v2957, 16
    %v2961 = vshrl.u32 %v2957, 16
    %v2962 = vshll.u32 %v2958, 16
    %v2963 = vshrl.u32 %v2958, 16
    %vm2964 = vc.u32 %v2956, %v2960
    %v2965 = vsel %vm2964, 1, 0
    %v2966 = vadd.s32 %v2956, %v2960
    %v2967 = vadd.s32 %v2959, %v2965
    %vm2968 = vc.u32 %v2966, %v2962
    %v2969 = vsel %vm2968, 1, 0
    %v2970 = vadd.s32 %v2966, %v2962
    %v2971 = vadd.s32 %v2967, %v2969
    %v2972 = vadd.s32 %v2971, %v2961
    %v2973 = vadd.s32 %v2972, %v2963
    %v2974 = vmul.u32 %v2929, %v2920
    %v2975 = vadd.s32 %v2951, %v2970
    %vm2976 = vc.u32 %v2951, %v2970
    %v2977 = vadd.s32 %v2973, 1
    %v2978 = vsel %vm2976, %v2977, %v2973
    %v2979 = vadd.s32 %v2974, %v2978
    %v2980 = vadd.s32 %v2979, 536870912
    %v2981 = vshrl.u32 %v2980, 30
    %v2982 = vshll.u32 %v2981, 30
    %v2983 = vsub.s32 %v2979, %v2982
    %vm2984 = vcmp.lt.s32.totalorder %v2983, 0
    %v2985 = vsub.s32 0, %v2983
    %v2986 = vsel %vm2984, %v2985, %v2983
    %v2987 = vclz %v2986
    %v2988 = vsub.s32 %v2987, 2
    %vm2989 = vcmp.gt.s32.totalorder 0, %v2988
    %v2990 = vsel %vm2989, 0, %v2988
    %v2991 = vsub.s32 32, %v2990
    %v2992 = vshll.u32 %v2983, %v2990
    %v2993 = vshrl.u32 %v2975, %v2991
    %v2994 = vor.u32 %v2992, %v2993
    %v2995 = vsub.s32 4294967266, %v2990
    %v2996 = vadd.s32 %v2995, 127
    %v2997 = vshll.u32 %v2996, 23
    %v2998 = vor.u32 4788187, %v2997
    %v2999 = vand.u32 2147483647, %v2998
    %v3001 = vcvt.s32.f32 %v2994
    %v3002 = vmul.f32 %v3001, %v2999
    %v3003 = vxor.u32 %v3002, 2147483648
    %v3004 = vsel %vm2883, %v3003, %v3002
    %v3005 = vsub.s32 4, %v2981
    %v3006 = vsel %vm2883, %v3005, %v2981
    %v3007 = vsel %vm2882, %v1795, %v3004
    %v3008 = vsel %vm2882, 0, %v3006
    %v3009 = vmul.f32 %v3007, %v3007
    %v3010 = vmul.f32 %v3009, -0.001358992
    %v3011 = vadd.f32 %v3010, 0.041655596
    %v3012 = vmul.f32 %v3009, %v3011
    %v3013 = vadd.f32 %v3012, -0.4999988
    %v3014 = vmul.f32 %v3009, %v3013
    %v3015 = vadd.f32 1.0, %v3014
    %v3016 = vmul.f32 %v3007, %v3007
    %v3017 = vmul.f32 %v3016, -0.00019511016
    %v3018 = vadd.f32 %v3017, 0.008332121
    %v3019 = vmul.f32 %v3016, %v3018
    %v3020 = vadd.f32 %v3019, -0.16666654
    %v3021 = vmul.f32 %v3016, %v3020
    %v3022 = vadd.f32 %v3021, 1.0
    %v3023 = vmul.f32 %v3022, %v3007
    %vm3024 = vweird.f32 %v1795
    %v3025 = vadd.s32 %v3008, 3
    %v3026 = vand.u32 %v3025, 3
    %vm3027 = vcmp.lt.s32.totalorder %v3026, 2
    %vm3028 = vcmp.eq.s32.totalorder %v3026, 0
    %v3029 = vxor.u32 %v3023, 2147483648
    %v3030 = vsel %vm3028, %v3015, %v3029
    %vm3031 = vcmp.eq.s32.totalorder %v3026, 2
    %v3032 = vxor.u32 %v3015, 2147483648
    %v3033 = vsel %vm3031, %v3032, %v3023
    %v3034 = vsel %vm3027, %v3030, %v3033
    %v3035 = vsel %vm3024, nan, %v3034
    %v3036 = vmul.f32 %v1950, %v1662
    %v3037 = vmul.f32 %v2105, %v1691
    %v3038 = vmul.f32 %v2260, %v1665
    %v3039 = vmul.f32 %v2415, %v1694
    %v3040 = vmul.f32 %v2570, %v1668
    %v3041 = vmul.f32 %v2725, %v1697
    %v3042 = vmul.f32 %v2880, %v1671
    %v3043 = vmul.f32 %v3035, %v1700
    %v3044 = vadd.f32 %v3036, %v3038
    %v3045 = vadd.f32 %v3044, %v3040
    %v3046 = vadd.f32 %v3045, %v3042
    %v3047 = vrot.slane %v3046, 4
    %v3048 = vadd.f32 %v3046, %v3047
    %v3049 = vrot.slane %v3048, 2
    %v3050 = vadd.f32 %v3048, %v3049
    %v3051 = vrot.slane %v3050, 1
    %v3052 = vadd.f32 %v3050, %v3051
    %v3053 = vadd.f32 %v3037, %v3039
    %v3054 = vadd.f32 %v3053, %v3041
    %v3055 = vadd.f32 %v3054, %v3043
    %v3056 = vrot.slane %v3055, 4
    %v3057 = vadd.f32 %v3055, %v3056
    %v3058 = vrot.slane %v3057, 2
    %v3059 = vadd.f32 %v3057, %v3058
    %v3060 = vrot.slane %v3059, 1
    %v3061 = vadd.f32 %v3059, %v3060
    %v3064 = vrot.slane %v3061, 7
    %vm3065 = vcmask 1040384
    %v3066 = vsel %vm3065, %v3052, %v3064
    %v3068 = vlaneseq
    %vm3069 = vcmp.ge.s32.totalorder %v3068, 0
    %vm3070 = vcmp.lt.s32.totalorder %v3068, 256
    %vm3071 = vmand %vm3069, %vm3070
    %3072 = vst.msk [vmem:[#allocation2] sm:$0x3] %vm3071, %v3066
    %v3073 = vld [vmem:[%s7] sm:$0xff]
    %v3074 = vld [vmem:[%s7 + $0x8] sm:$0xff]
    %v3075 = vld [vmem:[%s7 + $0x10] sm:$0xff]
    %v3076 = vld [vmem:[%s7 + $0x18] sm:$0xff]
    %v3077 = vld [vmem:[%s7 + $0x20] sm:$0xff]
    %v3078 = vld [vmem:[%s7 + $0x28] sm:$0xff]
    %v3079 = vld [vmem:[%s7 + $0x30] sm:$0xff]
    %v3080 = vld [vmem:[%s7 + $0x38] sm:$0xff]
    %v3081 = vld [vmem:[%s7 + $0x40] sm:$0xff]
    %v3082 = vld [vmem:[%s7 + $0x48] sm:$0xff]
    %v3083 = vld [vmem:[%s7 + $0x50] sm:$0xff]
    %v3084 = vld [vmem:[%s7 + $0x58] sm:$0xff]
    %v3085 = vld [vmem:[%s7 + $0x60] sm:$0xff]
    %v3086 = vld [vmem:[%s7 + $0x68] sm:$0xff]
    %v3087 = vld [vmem:[%s7 + $0x70] sm:$0xff]
    %v3088 = vld [vmem:[%s7 + $0x78] sm:$0xff]
    %v3089 = vld [vmem:[%s7 + $0x80] sm:$0xff]
    %v3090 = vld [vmem:[%s7 + $0x88] sm:$0xff]
    %v3091 = vld [vmem:[%s7 + $0x90] sm:$0xff]
    %v3092 = vld [vmem:[%s7 + $0x98] sm:$0xff]
    %v3093 = vld [vmem:[%s7 + $0xa0] sm:$0xff]
    %v3094 = vld [vmem:[%s7 + $0xa8] sm:$0xff]
    %v3095 = vld [vmem:[%s7 + $0xb0] sm:$0xff]
    %v3096 = vld [vmem:[%s7 + $0xb8] sm:$0xff]
    %v3097 = vld [vmem:[%s7 + $0xc0] sm:$0xff]
    %v3098 = vld [vmem:[%s7 + $0xc8] sm:$0xff]
    %v3099 = vld [vmem:[%s7 + $0xd0] sm:$0xff]
    %v3100 = vld [vmem:[%s7 + $0xd8] sm:$0xff]
    %v3101 = vld [vmem:[%s7 + $0xe0] sm:$0xff]
    %v3102 = vld [vmem:[%s7 + $0xe8] sm:$0xff]
    %v3103 = vld [vmem:[%s7 + $0xf0] sm:$0xff]
    %v3104 = vld [vmem:[%s7 + $0xf8] sm:$0xff]
    %v3106 = vsel %vm248, %v3073, 0
    %v3109 = vsel %vm248, %v3074, 0
    %v3112 = vsel %vm248, %v3075, 0
    %v3115 = vsel %vm248, %v3076, 0
    %v3118 = vsel %vm248, %v3077, 0
    %v3121 = vsel %vm248, %v3078, 0
    %v3124 = vsel %vm248, %v3079, 0
    %v3127 = vsel %vm248, %v3080, 0
    %v3130 = vsel %vm248, %v3081, 0
    %v3133 = vsel %vm248, %v3082, 0
    %v3136 = vsel %vm248, %v3083, 0
    %v3139 = vsel %vm248, %v3084, 0
    %v3142 = vsel %vm248, %v3085, 0
    %v3145 = vsel %vm248, %v3086, 0
    %v3148 = vsel %vm248, %v3087, 0
    %v3151 = vsel %vm248, %v3088, 0
    %v3154 = vsel %vm248, %v3089, 0
    %v3157 = vsel %vm248, %v3090, 0
    %v3160 = vsel %vm248, %v3091, 0
    %v3163 = vsel %vm248, %v3092, 0
    %v3166 = vsel %vm248, %v3093, 0
    %v3169 = vsel %vm248, %v3094, 0
    %v3172 = vsel %vm248, %v3095, 0
    %v3175 = vsel %vm248, %v3096, 0
    %v3178 = vsel %vm248, %v3097, 0
    %v3181 = vsel %vm248, %v3098, 0
    %v3184 = vsel %vm248, %v3099, 0
    %v3187 = vsel %vm248, %v3100, 0
    %v3190 = vsel %vm248, %v3101, 0
    %v3193 = vsel %vm248, %v3102, 0
    %v3196 = vsel %vm248, %v3103, 0
    %v3199 = vsel %vm248, %v3104, 0
    %3201 = vmatpush.msra.mxu0 0.0
    %3202 = vmatpush.msra.mxu0 0.0
    %3203 = vmatpush.msra.mxu0 0.0
    %3204 = vmatpush.msra.mxu0 0.0
    %3205 = vmatpush.msra.mxu0 0.0
    %3206 = vmatpush.msra.mxu0 0.0
    %3207 = vmatpush.msra.mxu0 0.0
    %3208 = vmatpush.msra.mxu0 0.0
    %3209 = vmatpush.msra.mxu0 %v1526
    %3210 = vmatpush.msra.mxu0 %v1523
    %3211 = vmatpush.msra.mxu0 %v1520
    %3212 = vmatpush.msra.mxu0 %v1517
    %3213 = vmatpush.msra.mxu0 %v1514
    %3214 = vmatpush.msra.mxu0 %v1511
    %3215 = vmatpush.msra.mxu0 %v1508
    %3216 = vmatpush.msra.mxu0 %v1505
    %3217 = vmatmul.f32.gmra.mxu0 %v3106
    %v3218 = vpop.f32.mrf.mxu0
    %v3219 = vadd.f32 0.0, %v3218
    %3220 = vmatmul.f32.gmra.mxu0 %v3109
    %v3221 = vpop.f32.mrf.mxu0
    %v3222 = vadd.f32 0.0, %v3221
    %3223 = vmatmul.f32.gmra.mxu0 %v3112
    %v3224 = vpop.f32.mrf.mxu0
    %v3225 = vadd.f32 0.0, %v3224
    %3226 = vmatmul.f32.gmra.mxu0 %v3115
    %v3227 = vpop.f32.mrf.mxu0
    %v3228 = vadd.f32 0.0, %v3227
    %3229 = vmatmul.f32.gmra.mxu0 %v3118
    %v3230 = vpop.f32.mrf.mxu0
    %v3231 = vadd.f32 0.0, %v3230
    %3232 = vmatmul.f32.gmra.mxu0 %v3121
    %v3233 = vpop.f32.mrf.mxu0
    %v3234 = vadd.f32 0.0, %v3233
    %3235 = vmatmul.f32.gmra.mxu0 %v3124
    %v3236 = vpop.f32.mrf.mxu0
    %v3237 = vadd.f32 0.0, %v3236
    %3238 = vmatmul.f32.gmra.mxu0 %v3127
    %v3239 = vpop.f32.mrf.mxu0
    %v3240 = vadd.f32 0.0, %v3239
    %3241 = vmatmul.f32.gmra.mxu0 %v3130
    %v3242 = vpop.f32.mrf.mxu0
    %v3243 = vadd.f32 0.0, %v3242
    %3244 = vmatmul.f32.gmra.mxu0 %v3133
    %v3245 = vpop.f32.mrf.mxu0
    %v3246 = vadd.f32 0.0, %v3245
    %3247 = vmatmul.f32.gmra.mxu0 %v3136
    %v3248 = vpop.f32.mrf.mxu0
    %v3249 = vadd.f32 0.0, %v3248
    %3250 = vmatmul.f32.gmra.mxu0 %v3139
    %v3251 = vpop.f32.mrf.mxu0
    %v3252 = vadd.f32 0.0, %v3251
    %3253 = vmatmul.f32.gmra.mxu0 %v3142
    %v3254 = vpop.f32.mrf.mxu0
    %v3255 = vadd.f32 0.0, %v3254
    %3256 = vmatmul.f32.gmra.mxu0 %v3145
    %v3257 = vpop.f32.mrf.mxu0
    %v3258 = vadd.f32 0.0, %v3257
    %3259 = vmatmul.f32.gmra.mxu0 %v3148
    %v3260 = vpop.f32.mrf.mxu0
    %v3261 = vadd.f32 0.0, %v3260
    %3262 = vmatmul.f32.gmra.mxu0 %v3151
    %v3263 = vpop.f32.mrf.mxu0
    %v3264 = vadd.f32 0.0, %v3263
    %3265 = vmatmul.f32.gmra.mxu0 %v3154
    %v3266 = vpop.f32.mrf.mxu0
    %v3267 = vadd.f32 0.0, %v3266
    %3268 = vmatmul.f32.gmra.mxu0 %v3157
    %v3269 = vpop.f32.mrf.mxu0
    %v3270 = vadd.f32 0.0, %v3269
    %3271 = vmatmul.f32.gmra.mxu0 %v3160
    %v3272 = vpop.f32.mrf.mxu0
    %v3273 = vadd.f32 0.0, %v3272
    %3274 = vmatmul.f32.gmra.mxu0 %v3163
    %v3275 = vpop.f32.mrf.mxu0
    %v3276 = vadd.f32 0.0, %v3275
    %3277 = vmatmul.f32.gmra.mxu0 %v3166
    %v3278 = vpop.f32.mrf.mxu0
    %v3279 = vadd.f32 0.0, %v3278
    %3280 = vmatmul.f32.gmra.mxu0 %v3169
    %v3281 = vpop.f32.mrf.mxu0
    %v3282 = vadd.f32 0.0, %v3281
    %3283 = vmatmul.f32.gmra.mxu0 %v3172
    %v3284 = vpop.f32.mrf.mxu0
    %v3285 = vadd.f32 0.0, %v3284
    %3286 = vmatmul.f32.gmra.mxu0 %v3175
    %v3287 = vpop.f32.mrf.mxu0
    %v3288 = vadd.f32 0.0, %v3287
    %3289 = vmatmul.f32.gmra.mxu0 %v3178
    %v3290 = vpop.f32.mrf.mxu0
    %v3291 = vadd.f32 0.0, %v3290
    %3292 = vmatmul.f32.gmra.mxu0 %v3181
    %v3293 = vpop.f32.mrf.mxu0
    %v3294 = vadd.f32 0.0, %v3293
    %3295 = vmatmul.f32.gmra.mxu0 %v3184
    %v3296 = vpop.f32.mrf.mxu0
    %v3297 = vadd.f32 0.0, %v3296
    %3298 = vmatmul.f32.gmra.mxu0 %v3187
    %v3299 = vpop.f32.mrf.mxu0
    %v3300 = vadd.f32 0.0, %v3299
    %3301 = vmatmul.f32.gmra.mxu0 %v3190
    %v3302 = vpop.f32.mrf.mxu0
    %v3303 = vadd.f32 0.0, %v3302
    %3304 = vmatmul.f32.gmra.mxu0 %v3193
    %v3305 = vpop.f32.mrf.mxu0
    %v3306 = vadd.f32 0.0, %v3305
    %3307 = vmatmul.f32.gmra.mxu0 %v3196
    %v3308 = vpop.f32.mrf.mxu0
    %v3309 = vadd.f32 0.0, %v3308
    %3310 = vmatmul.f32.gmra.mxu0 %v3199
    %v3311 = vpop.f32.mrf.mxu0
    %v3312 = vadd.f32 0.0, %v3311
    %3313 = vdwg.mxu0
    %3314 = vrot.lane.b32.xlu0 %v3291, 64
    %v3315 = vpop.permute.xlu0 %3314
    %v3316 = vsel %vm83, %v3315, %v3291
    %3317 = vrot.lane.b32.xlu0 %v3294, 64
    %v3318 = vpop.permute.xlu0 %3317
    %v3319 = vsel %vm83, %v3318, %v3294
    %3320 = vrot.lane.b32.xlu0 %v3297, 64
    %v3321 = vpop.permute.xlu0 %3320
    %v3322 = vsel %vm83, %v3321, %v3297
    %3323 = vrot.lane.b32.xlu0 %v3300, 64
    %v3324 = vpop.permute.xlu0 %3323
    %v3325 = vsel %vm83, %v3324, %v3300
    %3326 = vrot.lane.b32.xlu0 %v3303, 64
    %v3327 = vpop.permute.xlu0 %3326
    %v3328 = vsel %vm83, %v3327, %v3303
    %3329 = vrot.lane.b32.xlu0 %v3306, 64
    %v3330 = vpop.permute.xlu0 %3329
    %v3331 = vsel %vm83, %v3330, %v3306
    %3332 = vrot.lane.b32.xlu0 %v3309, 64
    %v3333 = vpop.permute.xlu0 %3332
    %v3334 = vsel %vm83, %v3333, %v3309
    %3335 = vrot.lane.b32.xlu0 %v3312, 64
    %v3336 = vpop.permute.xlu0 %3335
    %v3337 = vsel %vm83, %v3336, %v3312
    %3338 = vrot.lane.b32.xlu0 %v3316, 64
    %v3339 = vpop.permute.xlu0 %3338
    %3340 = vrot.lane.b32.xlu0 %v3319, 64
    %v3341 = vpop.permute.xlu0 %3340
    %3342 = vrot.lane.b32.xlu0 %v3322, 64
    %v3343 = vpop.permute.xlu0 %3342
    %3344 = vrot.lane.b32.xlu0 %v3325, 64
    %v3345 = vpop.permute.xlu0 %3344
    %3346 = vrot.lane.b32.xlu0 %v3328, 64
    %v3347 = vpop.permute.xlu0 %3346
    %3348 = vrot.lane.b32.xlu0 %v3331, 64
    %v3349 = vpop.permute.xlu0 %3348
    %3350 = vrot.lane.b32.xlu0 %v3334, 64
    %v3351 = vpop.permute.xlu0 %3350
    %3352 = vrot.lane.b32.xlu0 %v3337, 64
    %v3353 = vpop.permute.xlu0 %3352
    %v3354 = vsel %vm83, %v3339, %v3291
    %v3355 = vsel %vm83, %v3341, %v3294
    %v3356 = vsel %vm83, %v3343, %v3297
    %v3357 = vsel %vm83, %v3345, %v3300
    %v3358 = vsel %vm83, %v3347, %v3303
    %v3359 = vsel %vm83, %v3349, %v3306
    %v3360 = vsel %vm83, %v3351, %v3309
    %v3361 = vsel %vm83, %v3353, %v3312
    %3370 = vrot.lane.b32.xlu0 %v3354, 65
    %v3371 = vpop.permute.xlu0 %3370
    %3372 = vrot.lane.b32.xlu0 %v3355, 65
    %v3373 = vpop.permute.xlu0 %3372
    %3374 = vrot.lane.b32.xlu0 %v3356, 65
    %v3375 = vpop.permute.xlu0 %3374
    %3376 = vrot.lane.b32.xlu0 %v3357, 65
    %v3377 = vpop.permute.xlu0 %3376
    %3378 = vrot.lane.b32.xlu0 %v3358, 65
    %v3379 = vpop.permute.xlu0 %3378
    %3380 = vrot.lane.b32.xlu0 %v3359, 65
    %v3381 = vpop.permute.xlu0 %3380
    %3382 = vrot.lane.b32.xlu0 %v3360, 65
    %v3383 = vpop.permute.xlu0 %3382
    %3384 = vrot.lane.b32.xlu0 %v3361, 65
    %v3385 = vpop.permute.xlu0 %3384
    %v3394 = vsel %vm133, %v3371, 0.0
    %v3395 = vsel %vm133, %v3373, 0.0
    %v3396 = vsel %vm133, %v3375, 0.0
    %v3397 = vsel %vm133, %v3377, 0.0
    %v3398 = vsel %vm133, %v3379, 0.0
    %v3399 = vsel %vm133, %v3381, 0.0
    %v3400 = vsel %vm133, %v3383, 0.0
    %v3401 = vsel %vm133, %v3385, 0.0
    %v3402 = vadd.f32 %v3243, %v3394
    %v3403 = vadd.f32 %v3246, %v3395
    %v3404 = vadd.f32 %v3249, %v3396
    %v3405 = vadd.f32 %v3252, %v3397
    %v3406 = vadd.f32 %v3255, %v3398
    %v3407 = vadd.f32 %v3258, %v3399
    %v3408 = vadd.f32 %v3261, %v3400
    %v3409 = vadd.f32 %v3264, %v3401
    %v3410 = vld [vmem:[%s8] sm:$0xff]
    %v3411 = vld [vmem:[%s8 + $0x8] sm:$0xff]
    %v3412 = vld [vmem:[%s8 + $0x10] sm:$0xff]
    %v3413 = vld [vmem:[%s8 + $0x18] sm:$0xff]
    %v3414 = vld [vmem:[%s8 + $0x20] sm:$0xff]
    %v3415 = vld [vmem:[%s8 + $0x28] sm:$0xff]
    %v3416 = vld [vmem:[%s8 + $0x30] sm:$0xff]
    %v3417 = vld [vmem:[%s8 + $0x38] sm:$0xff]
    %3419 = vset.pattern.permute.xlu0 0
    %3420 = vperm.xlu0 %3419, %v3410
    %v3421 = vpop.permute.xlu0 %3420
    %3424 = vset.pattern.permute.xlu0 0
    %3425 = vperm.xlu0 %3424, %v3411
    %v3426 = vpop.permute.xlu0 %3425
    %3429 = vset.pattern.permute.xlu0 0
    %3430 = vperm.xlu0 %3429, %v3412
    %v3431 = vpop.permute.xlu0 %3430
    %3434 = vset.pattern.permute.xlu0 0
    %3435 = vperm.xlu0 %3434, %v3413
    %v3436 = vpop.permute.xlu0 %3435
    %3439 = vset.pattern.permute.xlu0 0
    %3440 = vperm.xlu0 %3439, %v3414
    %v3441 = vpop.permute.xlu0 %3440
    %3444 = vset.pattern.permute.xlu0 0
    %3445 = vperm.xlu0 %3444, %v3415
    %v3446 = vpop.permute.xlu0 %3445
    %3449 = vset.pattern.permute.xlu0 0
    %3450 = vperm.xlu0 %3449, %v3416
    %v3451 = vpop.permute.xlu0 %3450
    %3454 = vset.pattern.permute.xlu0 0
    %3455 = vperm.xlu0 %3454, %v3417
    %v3456 = vpop.permute.xlu0 %3455
    %v3458 = vadd.f32 %v3402, %v3421
    %v3459 = vadd.f32 %v3403, %v3426
    %v3460 = vadd.f32 %v3404, %v3431
    %v3461 = vadd.f32 %v3405, %v3436
    %v3462 = vadd.f32 %v3406, %v3441
    %v3463 = vadd.f32 %v3407, %v3446
    %v3464 = vadd.f32 %v3408, %v3451
    %v3465 = vadd.f32 %v3409, %v3456
    %vm3466 = vcmp.gt.f32.partialorder %v3458, 0.0
    %vm3467 = vcmp.gt.f32.partialorder %v3459, 0.0
    %vm3468 = vcmp.gt.f32.partialorder %v3460, 0.0
    %vm3469 = vcmp.gt.f32.partialorder %v3461, 0.0
    %vm3470 = vcmp.gt.f32.partialorder %v3462, 0.0
    %vm3471 = vcmp.gt.f32.partialorder %v3463, 0.0
    %vm3472 = vcmp.gt.f32.partialorder %v3464, 0.0
    %vm3473 = vcmp.gt.f32.partialorder %v3465, 0.0
    %v3474 = vmul.f32 %v3458, 0.2
    %v3475 = vmul.f32 %v3459, 0.2
    %v3476 = vmul.f32 %v3460, 0.2
    %v3477 = vmul.f32 %v3461, 0.2
    %v3478 = vmul.f32 %v3462, 0.2
    %v3479 = vmul.f32 %v3463, 0.2
    %v3480 = vmul.f32 %v3464, 0.2
    %v3481 = vmul.f32 %v3465, 0.2
    %v3482 = vsel %vm3466, %v3458, %v3474
    %v3483 = vsel %vm3467, %v3459, %v3475
    %v3484 = vsel %vm3468, %v3460, %v3476
    %v3485 = vsel %vm3469, %v3461, %v3477
    %v3486 = vsel %vm3470, %v3462, %v3478
    %v3487 = vsel %vm3471, %v3463, %v3479
    %v3488 = vsel %vm3472, %v3464, %v3480
    %v3489 = vsel %vm3473, %v3465, %v3481
    %3490 = vrot.lane.b32.xlu0 %v3219, 64
    %v3491 = vpop.permute.xlu0 %3490
    %v3492 = vsel %vm83, %v3491, %v3219
    %3493 = vrot.lane.b32.xlu0 %v3222, 64
    %v3494 = vpop.permute.xlu0 %3493
    %v3495 = vsel %vm83, %v3494, %v3222
    %3496 = vrot.lane.b32.xlu0 %v3225, 64
    %v3497 = vpop.permute.xlu0 %3496
    %v3498 = vsel %vm83, %v3497, %v3225
    %3499 = vrot.lane.b32.xlu0 %v3228, 64
    %v3500 = vpop.permute.xlu0 %3499
    %v3501 = vsel %vm83, %v3500, %v3228
    %3502 = vrot.lane.b32.xlu0 %v3231, 64
    %v3503 = vpop.permute.xlu0 %3502
    %v3504 = vsel %vm83, %v3503, %v3231
    %3505 = vrot.lane.b32.xlu0 %v3234, 64
    %v3506 = vpop.permute.xlu0 %3505
    %v3507 = vsel %vm83, %v3506, %v3234
    %3508 = vrot.lane.b32.xlu0 %v3237, 64
    %v3509 = vpop.permute.xlu0 %3508
    %v3510 = vsel %vm83, %v3509, %v3237
    %3511 = vrot.lane.b32.xlu0 %v3240, 64
    %v3512 = vpop.permute.xlu0 %3511
    %v3513 = vsel %vm83, %v3512, %v3240
    %3514 = vrot.lane.b32.xlu0 %v3492, 64
    %v3515 = vpop.permute.xlu0 %3514
    %3516 = vrot.lane.b32.xlu0 %v3495, 64
    %v3517 = vpop.permute.xlu0 %3516
    %3518 = vrot.lane.b32.xlu0 %v3498, 64
    %v3519 = vpop.permute.xlu0 %3518
    %3520 = vrot.lane.b32.xlu0 %v3501, 64
    %v3521 = vpop.permute.xlu0 %3520
    %3522 = vrot.lane.b32.xlu0 %v3504, 64
    %v3523 = vpop.permute.xlu0 %3522
    %3524 = vrot.lane.b32.xlu0 %v3507, 64
    %v3525 = vpop.permute.xlu0 %3524
    %3526 = vrot.lane.b32.xlu0 %v3510, 64
    %v3527 = vpop.permute.xlu0 %3526
    %3528 = vrot.lane.b32.xlu0 %v3513, 64
    %v3529 = vpop.permute.xlu0 %3528
    %v3530 = vsel %vm83, %v3515, %v3219
    %v3531 = vsel %vm83, %v3517, %v3222
    %v3532 = vsel %vm83, %v3519, %v3225
    %v3533 = vsel %vm83, %v3521, %v3228
    %v3534 = vsel %vm83, %v3523, %v3231
    %v3535 = vsel %vm83, %v3525, %v3234
    %v3536 = vsel %vm83, %v3527, %v3237
    %v3537 = vsel %vm83, %v3529, %v3240
    %3546 = vrot.lane.b32.xlu0 %v3530, 127
    %v3547 = vpop.permute.xlu0 %3546
    %3548 = vrot.lane.b32.xlu0 %v3531, 127
    %v3549 = vpop.permute.xlu0 %3548
    %3550 = vrot.lane.b32.xlu0 %v3532, 127
    %v3551 = vpop.permute.xlu0 %3550
    %3552 = vrot.lane.b32.xlu0 %v3533, 127
    %v3553 = vpop.permute.xlu0 %3552
    %3554 = vrot.lane.b32.xlu0 %v3534, 127
    %v3555 = vpop.permute.xlu0 %3554
    %3556 = vrot.lane.b32.xlu0 %v3535, 127
    %v3557 = vpop.permute.xlu0 %3556
    %3558 = vrot.lane.b32.xlu0 %v3536, 127
    %v3559 = vpop.permute.xlu0 %3558
    %3560 = vrot.lane.b32.xlu0 %v3537, 127
    %v3561 = vpop.permute.xlu0 %3560
    %v3570 = vsel %vm175, %v3547, 0.0
    %v3571 = vsel %vm175, %v3549, 0.0
    %v3572 = vsel %vm175, %v3551, 0.0
    %v3573 = vsel %vm175, %v3553, 0.0
    %v3574 = vsel %vm175, %v3555, 0.0
    %v3575 = vsel %vm175, %v3557, 0.0
    %v3576 = vsel %vm175, %v3559, 0.0
    %v3577 = vsel %vm175, %v3561, 0.0
    %v3578 = vadd.f32 %v3267, %v3570
    %v3579 = vadd.f32 %v3270, %v3571
    %v3580 = vadd.f32 %v3273, %v3572
    %v3581 = vadd.f32 %v3276, %v3573
    %v3582 = vadd.f32 %v3279, %v3574
    %v3583 = vadd.f32 %v3282, %v3575
    %v3584 = vadd.f32 %v3285, %v3576
    %v3585 = vadd.f32 %v3288, %v3577
    %v3586 = vadd.f32 %v3578, %v3421
    %v3587 = vadd.f32 %v3579, %v3426
    %v3588 = vadd.f32 %v3580, %v3431
    %v3589 = vadd.f32 %v3581, %v3436
    %v3590 = vadd.f32 %v3582, %v3441
    %v3591 = vadd.f32 %v3583, %v3446
    %v3592 = vadd.f32 %v3584, %v3451
    %v3593 = vadd.f32 %v3585, %v3456
    %vm3594 = vcmp.gt.f32.partialorder %v3586, 0.0
    %vm3595 = vcmp.gt.f32.partialorder %v3587, 0.0
    %vm3596 = vcmp.gt.f32.partialorder %v3588, 0.0
    %vm3597 = vcmp.gt.f32.partialorder %v3589, 0.0
    %vm3598 = vcmp.gt.f32.partialorder %v3590, 0.0
    %vm3599 = vcmp.gt.f32.partialorder %v3591, 0.0
    %vm3600 = vcmp.gt.f32.partialorder %v3592, 0.0
    %vm3601 = vcmp.gt.f32.partialorder %v3593, 0.0
    %v3602 = vmul.f32 %v3586, 0.2
    %v3603 = vmul.f32 %v3587, 0.2
    %v3604 = vmul.f32 %v3588, 0.2
    %v3605 = vmul.f32 %v3589, 0.2
    %v3606 = vmul.f32 %v3590, 0.2
    %v3607 = vmul.f32 %v3591, 0.2
    %v3608 = vmul.f32 %v3592, 0.2
    %v3609 = vmul.f32 %v3593, 0.2
    %v3610 = vsel %vm3594, %v3586, %v3602
    %v3611 = vsel %vm3595, %v3587, %v3603
    %v3612 = vsel %vm3596, %v3588, %v3604
    %v3613 = vsel %vm3597, %v3589, %v3605
    %v3614 = vsel %vm3598, %v3590, %v3606
    %v3615 = vsel %vm3599, %v3591, %v3607
    %v3616 = vsel %vm3600, %v3592, %v3608
    %v3617 = vsel %vm3601, %v3593, %v3609
    %3618 = vst.msk [vmem:[%s10] sm:$0xff] %vm248, %v3482
    %3619 = vst.msk [vmem:[%s10 + $0x8] sm:$0xff] %vm248, %v3483
    %3620 = vst.msk [vmem:[%s10 + $0x10] sm:$0xff] %vm248, %v3484
    %3621 = vst.msk [vmem:[%s10 + $0x18] sm:$0xff] %vm248, %v3485
    %3622 = vst.msk [vmem:[%s10 + $0x20] sm:$0xff] %vm248, %v3486
    %3623 = vst.msk [vmem:[%s10 + $0x28] sm:$0xff] %vm248, %v3487
    %3624 = vst.msk [vmem:[%s10 + $0x30] sm:$0xff] %vm248, %v3488
    %3625 = vst.msk [vmem:[%s10 + $0x38] sm:$0xff] %vm248, %v3489
    %s3626 = scalar_lea.vmem %s10, 64
    %3627 = vst.msk [vmem:[%s3626] sm:$0xff] %vm248, %v3610
    %3628 = vst.msk [vmem:[%s3626 + $0x8] sm:$0xff] %vm248, %v3611
    %3629 = vst.msk [vmem:[%s3626 + $0x10] sm:$0xff] %vm248, %v3612
    %3630 = vst.msk [vmem:[%s3626 + $0x18] sm:$0xff] %vm248, %v3613
    %3631 = vst.msk [vmem:[%s3626 + $0x20] sm:$0xff] %vm248, %v3614
    %3632 = vst.msk [vmem:[%s3626 + $0x28] sm:$0xff] %vm248, %v3615
    %3633 = vst.msk [vmem:[%s3626 + $0x30] sm:$0xff] %vm248, %v3616
    %3634 = vst.msk [vmem:[%s3626 + $0x38] sm:$0xff] %vm248, %v3617
    // Predicated region
    $region38: #{band_upsample_forward.1} parent=1 // pred_check
      _
    $region39: #{band_upsample_forward.1} parent=1 // pred_check_branch
      %3636 = sbr.rel (0) target = $region41
    $region40: #{band_upsample_forward.1} parent=1 // pred_region
      %3638 = vsyncadd [#allocation3], 0
      %s3640 = sshll.u32 [#allocation2], 4
      %s3641 = int_to_ptr.vmem [resolvable:$true] %s3640
      %s3642 = sshll.u32 %s9, 4
      %s3643 = int_to_ptr.hbm [resolvable:$true] %s3642
      %3645 = dma.vmem_to_hbm [thread:$0]  %s3641, 32, %s3643, [#allocation3]
    $region41: #{band_upsample_forward.1} parent=1 // pred_fallthru
      _
    // Predicated region
    $region42: #{band_upsample_forward.1} parent=1 // pred_check
      _
    $region43: #{band_upsample_forward.1} parent=1 // pred_check_branch
      %3647 = sbr.rel (0) target = $region45
    $region44: #{band_upsample_forward.1} parent=1 // pred_region
      _
    $region45: #{band_upsample_forward.1} parent=1 // pred_fallthru
      _
    // Predicated region
    $region46: #{band_upsample_forward.1} parent=1 // pred_check
      _
    $region47: #{band_upsample_forward.1} parent=1 // pred_check_branch
      %3649 = sbr.rel (0) target = $region49
    $region48: #{band_upsample_forward.1} parent=1 // pred_region
      %3651 = dma.done [#allocation3], 32
    $region49: #{band_upsample_forward.1} parent=1 // pred_fallthru
      _
    // Predicated region
    $region50: #{band_upsample_forward.1} parent=1 // pred_check
      _
    $region51: #{band_upsample_forward.1} parent=1 // pred_check_branch
      %3653 = sbr.rel (0) target = $region53
    $region52: #{band_upsample_forward.1} parent=1 // pred_region
      _
    $region53: #{band_upsample_forward.1} parent=1 // pred_fallthru
      _
    %3654 = vsyncpa [#allocation3], 1

</llo_original>
